<compile_context>
chip_gen: v6e
topology: v6e:2x2x1
jax: 0.10.0
libtpu: 0.0.40
codegen_flags: <defaults>
</compile_context>

<pallas_src>
import functools

import jax
import jax.numpy as jnp
from jax.experimental import pallas as pl
from jax.experimental.pallas import tpu as pltpu

# Hyperparameters implied by cnn.py (ker_size=3, stride=1, pad=1, 28x28 images)
IMG = 28
KER = 3
PAD = (IMG - (IMG - KER + 1)) // 2           # = 1
NPIX = IMG * IMG                             # 784 flattened pixels per image
FEATURES = NPIX
OUT_CHANNELS = 4
HIDDEN_UNITS = 32
OUTPUT_LAYER = 10
POOLED = IMG // 2                            # 14
INP_HIDDEN = OUT_CHANNELS * FEATURES // 4    # C * 196

LPAD = IMG + 1                               # 29: covers the largest tap shift (+-29)
XPW = NPIX + 2 * LPAD                        # padded flattened-image scratch width (842)
APW = NPIX + IMG + 4                         # conv-output scratch width (816)

BLOCK_B = 128                                # images per grid step


def cnn_fused_kernel(wc_ref, bc_ref, x_ref, w1s_ref, b1_ref, w2_ref, b2_ref,
                     o_ref, xpad_ref, apad_ref):
    """Fused conv(3x3,pad1) + maxpool(2,2) + Linear + ReLU + Linear + log_softmax."""
    tb = x_ref.shape[0]
    f32 = jnp.float32

    # ---- in-kernel zero padding of the flattened images ----
    xpad_ref[:, pl.ds(0, LPAD)] = jnp.zeros((tb, LPAD), f32)
    xpad_ref[:, pl.ds(LPAD + NPIX, XPW - LPAD - NPIX)] = jnp.zeros(
        (tb, XPW - LPAD - NPIX), f32)
    xpad_ref[:, pl.ds(LPAD, NPIX)] = x_ref[...]
    # keep the tail of the conv-output scratch finite (read by shifted pool loads)
    apad_ref[:, pl.ds(NPIX, APW - NPIX)] = jnp.zeros((tb, APW - NPIX), f32)

    # Column masks: taps reading column j-1 / j+1 must not wrap across image rows.
    col = jax.lax.broadcasted_iota(jnp.int32, (1, NPIX), 1) % IMG
    mask_l = col >= 1
    mask_r = col <= IMG - 2

    # ---- 3x3 conv: 9 shifted taps shared across all output channels (VPU FMAs) ----
    accs = [jnp.zeros((tb, NPIX), f32) for _ in range(OUT_CHANNELS)]
    for ky in range(KER):
        for kx in range(KER):
            start = LPAD + IMG * (ky - 1) + (kx - 1)
            tap = xpad_ref[:, pl.ds(start, NPIX)]
            if kx == 0:
                tap = jnp.where(mask_l, tap, 0.0)
            elif kx == KER - 1:
                tap = jnp.where(mask_r, tap, 0.0)
            for c in range(OUT_CHANNELS):
                accs[c] = accs[c] + wc_ref[c, ky * KER + kx] * tap

    # ---- per channel: bias, 2x2 max-pool (max of 4 shifted copies), then the
    #      downsample+flatten folded into W1 (zero rows at non-selected pixels) ----
    hid = jnp.zeros((tb, HIDDEN_UNITS), f32) + b1_ref[...]
    for c in range(OUT_CHANNELS):
        a = accs[c] + bc_ref[c]
        apad_ref[:, pl.ds(0, NPIX)] = a
        a01 = apad_ref[:, pl.ds(1, NPIX)]           # (i,   j+1)
        a10 = apad_ref[:, pl.ds(IMG, NPIX)]         # (i+1, j)
        a11 = apad_ref[:, pl.ds(IMG + 1, NPIX)]     # (i+1, j+1)
        pooled = jnp.maximum(jnp.maximum(a, a01), jnp.maximum(a10, a11))
        hid = hid + jnp.dot(
            pooled, w1s_ref[:, pl.ds(c * HIDDEN_UNITS, HIDDEN_UNITS)],
            preferred_element_type=jnp.float32)

    # ---- MLP tail ----
    hid = jnp.maximum(hid, 0.0)
    logits = jnp.dot(hid, w2_ref[...], preferred_element_type=jnp.float32) + b2_ref[...]
    m = jnp.max(logits, axis=-1, keepdims=True)
    lse = m + jnp.log(jnp.sum(jnp.exp(logits - m), axis=-1, keepdims=True))
    o_ref[...] = logits - lse


def pack_w1(w1):
    """Fold the 2x2-pool downsample + NCHW flatten into W1.

    Returns (784, C*H): row p = flattened 28x28 pixel index. Row 56*i' + 2*j'
    of column block [c*H:(c+1)*H] holds W1[c*196 + 14*i' + j', :]; all other
    rows are exactly zero, so non-selected pooled lanes contribute 0.
    """
    q = jnp.arange(POOLED * POOLED)
    dst = (q // POOLED) * (2 * IMG) + (q % POOLED) * 2
    w1r = w1.reshape(OUT_CHANNELS, POOLED * POOLED, HIDDEN_UNITS)
    w1perm = jnp.transpose(w1r, (1, 0, 2)).reshape(
        POOLED * POOLED, OUT_CHANNELS * HIDDEN_UNITS)
    return jnp.zeros((NPIX, OUT_CHANNELS * HIDDEN_UNITS), jnp.float32).at[dst].set(w1perm)


@functools.partial(jax.jit, static_argnames=("block_b",))
def cnn_forward(x, params, block_b=BLOCK_B):
    w_conv, b_conv, w1, b1, w2, b2 = params
    B = x.shape[0]
    xf = x.reshape(B, NPIX).astype(jnp.float32)          # inputs.view(-1, 1, 28, 28), flattened

    tb = min(block_b, B)
    bp = pl.cdiv(B, tb) * tb
    if bp != B:
        xf = jnp.pad(xf, ((0, bp - B), (0, 0)))          # pad batch to a tile multiple

    wc = w_conv.reshape(OUT_CHANNELS, KER * KER).astype(jnp.float32)
    w1s = pack_w1(w1.astype(jnp.float32))                # one-time weight repacking

    out = pl.pallas_call(
        cnn_fused_kernel,
        out_shape=jax.ShapeDtypeStruct((bp, OUTPUT_LAYER), jnp.float32),
        grid=(bp // tb,),
        in_specs=[
            pl.BlockSpec(memory_space=pltpu.MemorySpace.SMEM),             # conv weights (C, 9)
            pl.BlockSpec(memory_space=pltpu.MemorySpace.SMEM),             # conv bias (C,)
            pl.BlockSpec((tb, NPIX), lambda b: (b, 0)),                    # images (TB, 784)
            pl.BlockSpec((NPIX, OUT_CHANNELS * HIDDEN_UNITS),
                         lambda b: (0, 0)),                                # packed W1 (784, 128)
            pl.BlockSpec((1, HIDDEN_UNITS), lambda b: (0, 0)),             # b1
            pl.BlockSpec((HIDDEN_UNITS, OUTPUT_LAYER), lambda b: (0, 0)),  # W2
            pl.BlockSpec((1, OUTPUT_LAYER), lambda b: (0, 0)),             # b2
        ],
        out_specs=pl.BlockSpec((tb, OUTPUT_LAYER), lambda b: (b, 0)),
        scratch_shapes=[
            pltpu.VMEM((tb, XPW), jnp.float32),   # zero-padded flattened images
            pltpu.VMEM((tb, APW), jnp.float32),   # conv output (for shifted pool reads)
        ],
        compiler_params=pltpu.CompilerParams(dimension_semantics=("parallel",)),
    )(wc, b_conv.astype(jnp.float32), xf, w1s,
      b1.astype(jnp.float32), w2.astype(jnp.float32), b2.astype(jnp.float32))
    return out[:B]


def init_params(key):
    """Deterministic init mimicking PyTorch default uniform(-1/sqrt(fan_in), ...)."""
    k = jax.random.split(key, 6)
    bc = 1.0 / (KER * KER) ** 0.5
    bh = 1.0 / INP_HIDDEN ** 0.5
    bo = 1.0 / HIDDEN_UNITS ** 0.5
    w_conv = jax.random.uniform(k[0], (OUT_CHANNELS, 1, KER, KER), jnp.float32, -bc, bc)
    b_conv = jax.random.uniform(k[1], (OUT_CHANNELS,), jnp.float32, -bc, bc)
    w1 = jax.random.uniform(k[2], (INP_HIDDEN, HIDDEN_UNITS), jnp.float32, -bh, bh)   # hidden.weight.T
    b1 = jax.random.uniform(k[3], (1, HIDDEN_UNITS), jnp.float32, -bh, bh)
    w2 = jax.random.uniform(k[4], (HIDDEN_UNITS, OUTPUT_LAYER), jnp.float32, -bo, bo)  # predict.weight.T
    b2 = jax.random.uniform(k[5], (1, OUTPUT_LAYER), jnp.float32, -bo, bo)
    return (w_conv, b_conv, w1, b1, w2, b2)


def reference(x, params):
    """Pure-JAX reference of the PyTorch forward pass."""
    w_conv, b_conv, w1, b1, w2, b2 = params
    B = x.shape[0]
    ximg = x.reshape(B, IMG, IMG).astype(jnp.float32)
    xp = jnp.pad(ximg, ((0, 0), (PAD, PAD), (PAD, PAD)))
    conv = jnp.zeros((B, OUT_CHANNELS, IMG, IMG), jnp.float32)
    for ky in range(KER):
        for kx in range(KER):
            conv = conv + (w_conv[:, 0, ky, kx][None, :, None, None]
                           * xp[:, ky:ky + IMG, kx:kx + IMG][:, None, :, :])
    conv = conv + b_conv[None, :, None, None]
    pooled = conv.reshape(B, OUT_CHANNELS, POOLED, 2, POOLED, 2).max(axis=(3, 5))
    feat = pooled.reshape(B, INP_HIDDEN)
    h = jnp.maximum(feat @ w1 + b1, 0.0)
    logits = h @ w2 + b2
    return jax.nn.log_softmax(logits, axis=-1)


if __name__ == "__main__":
    key = jax.random.PRNGKey(0)
    kx, kp = jax.random.split(key)
    params = init_params(kp)
    x = jax.random.normal(kx, (2, FEATURES), jnp.float32)   # batch=2 flattened 28x28 images

    out = cnn_forward(x, params)
    out = jax.block_until_ready(out)

    ref = reference(x, params)
    assert out.shape == (2, OUTPUT_LAYER)
    assert jnp.allclose(out, ref, atol=2e-4, rtol=1e-4), "mismatch vs pure-JAX reference"
    print("KERNEL_OK")
</pallas_src>

<mosaic_0001>
module attributes {stable_mosaic.version = 11 : i64} {
  func.func @cnn_fused_kernel(%arg0: i32, %arg1: memref<4x9xf32, #tpu.memory_space<smem>>, %arg2: memref<4xf32, #tpu.memory_space<smem>>, %arg3: memref<2x784xf32, #tpu.memory_space<vmem>>, %arg4: memref<784x128xf32, #tpu.memory_space<vmem>>, %arg5: memref<1x32xf32, #tpu.memory_space<vmem>>, %arg6: memref<32x10xf32, #tpu.memory_space<vmem>>, %arg7: memref<1x10xf32, #tpu.memory_space<vmem>>, %arg8: memref<2x10xf32, #tpu.memory_space<vmem>>, %arg9: memref<2x842xf32, #tpu.memory_space<vmem>>, %arg10: memref<2x816xf32, #tpu.memory_space<vmem>>) attributes {dimension_semantics = [#tpu.dimension_semantics<parallel>], iteration_bounds = array<i64: 1>, scalar_prefetch = 0 : i64, scratch_operands = 2 : i64, tpu.core_type = #tpu.core_type<tc>, window_params = [{transform_indices = @transform_0, window_bounds = array<i64: 4, 9>}, {transform_indices = @transform_1, window_bounds = array<i64: 4>}, {transform_indices = @transform_2, window_bounds = array<i64: 2, 784>}, {pipeline_mode = #tpu.pipeline_mode<synchronous>, transform_indices = @transform_3, window_bounds = array<i64: 784, 128>}, {pipeline_mode = #tpu.pipeline_mode<synchronous>, transform_indices = @transform_4, window_bounds = array<i64: 1, 32>}, {pipeline_mode = #tpu.pipeline_mode<synchronous>, transform_indices = @transform_5, window_bounds = array<i64: 32, 10>}, {pipeline_mode = #tpu.pipeline_mode<synchronous>, transform_indices = @transform_6, window_bounds = array<i64: 1, 10>}, {transform_indices = @transform_7, window_bounds = array<i64: 2, 10>}]} {
    %cst = arith.constant 0.000000e+00 : f32
    %0 = vector.broadcast %cst : f32 to vector<2x29xf32>
    %c0 = arith.constant 0 : index
    %c0_0 = arith.constant 0 : index
    %1 = vector.load %arg9[%c0, %c0_0] : memref<2x842xf32, #tpu.memory_space<vmem>>, vector<2x29xf32>
    tpu.vector_store %arg9[%c0, %c0_0], %0 {strides = array<i32>} : memref<2x842xf32, #tpu.memory_space<vmem>>, vector<2x29xf32>,
    %cst_1 = arith.constant 0.000000e+00 : f32
    %2 = vector.broadcast %cst_1 : f32 to vector<2x29xf32>
    %c0_2 = arith.constant 0 : index
    %c813 = arith.constant 813 : index
    %3 = vector.load %arg9[%c0_2, %c813] : memref<2x842xf32, #tpu.memory_space<vmem>>, vector<2x29xf32>
    tpu.vector_store %arg9[%c0_2, %c813], %2 {strides = array<i32>} : memref<2x842xf32, #tpu.memory_space<vmem>>, vector<2x29xf32>,
    %c0_3 = arith.constant 0 : index
    %c0_4 = arith.constant 0 : index
    %4 = vector.load %arg3[%c0_3, %c0_4] : memref<2x784xf32, #tpu.memory_space<vmem>>, vector<2x784xf32>
    %c0_5 = arith.constant 0 : index
    %c29 = arith.constant 29 : index
    %5 = vector.load %arg9[%c0_5, %c29] : memref<2x842xf32, #tpu.memory_space<vmem>>, vector<2x784xf32>
    tpu.vector_store %arg9[%c0_5, %c29], %4 {strides = array<i32>} : memref<2x842xf32, #tpu.memory_space<vmem>>, vector<2x784xf32>,
    %cst_6 = arith.constant 0.000000e+00 : f32
    %6 = vector.broadcast %cst_6 : f32 to vector<2x32xf32>
    %c0_7 = arith.constant 0 : index
    %c784 = arith.constant 784 : index
    %7 = vector.load %arg10[%c0_7, %c784] : memref<2x816xf32, #tpu.memory_space<vmem>>, vector<2x32xf32>
    tpu.vector_store %arg10[%c0_7, %c784], %6 {strides = array<i32>} : memref<2x816xf32, #tpu.memory_space<vmem>>, vector<2x32xf32>,
    %8 = tpu.iota {dimensions = array<i32: 1>} : vector<1x784xi32>
    %c28_i32 = arith.constant 28 : i32
    %c0_i32 = arith.constant 0 : i32
    %9 = arith.cmpi eq, %c28_i32, %c0_i32 : i32
    %c1_i32 = arith.constant 1 : i32
    %10 = arith.select %9, %c1_i32, %c28_i32 : i32
    %11 = vector.broadcast %10 : i32 to vector<1x784xi32>
    %12 = arith.remsi %8, %11 : vector<1x784xi32>
    %c0_i32_8 = arith.constant 0 : i32
    %13 = vector.broadcast %c0_i32_8 : i32 to vector<1x784xi32>
    %14 = arith.cmpi ne, %12, %13 : vector<1x784xi32>
    %c0_i32_9 = arith.constant 0 : i32
    %15 = vector.broadcast %c0_i32_9 : i32 to vector<1x784xi32>
    %16 = arith.cmpi slt, %12, %15 : vector<1x784xi32>
    %c0_i32_10 = arith.constant 0 : i32
    %17 = arith.cmpi slt, %10, %c0_i32_10 : i32
    %18 = vector.broadcast %17 : i1 to vector<1x784xi1>
    %19 = vector.broadcast %18 : vector<1x784xi1> to vector<1x784xi1>
    %20 = arith.xori %16, %19 : vector<1x784xi1>
    %21 = arith.andi %20, %14 : vector<1x784xi1>
    %22 = vector.broadcast %10 : i32 to vector<1x784xi32>
    %23 = arith.addi %12, %22 : vector<1x784xi32>
    %24 = arith.select %21, %23, %12 : vector<1x784xi1>, vector<1x784xi32>
    %c1_i32_11 = arith.constant 1 : i32
    %25 = vector.broadcast %c1_i32_11 : i32 to vector<1x784xi32>
    %26 = arith.cmpi sge, %24, %25 : vector<1x784xi32>
    %c26_i32 = arith.constant 26 : i32
    %27 = vector.broadcast %c26_i32 : i32 to vector<1x784xi32>
    %28 = arith.cmpi sle, %24, %27 : vector<1x784xi32>
    %cst_12 = arith.constant 0.000000e+00 : f32
    %29 = vector.broadcast %cst_12 : f32 to vector<2x784xf32>
    %cst_13 = arith.constant 0.000000e+00 : f32
    %30 = vector.broadcast %cst_13 : f32 to vector<2x784xf32>
    %cst_14 = arith.constant 0.000000e+00 : f32
    %31 = vector.broadcast %cst_14 : f32 to vector<2x784xf32>
    %cst_15 = arith.constant 0.000000e+00 : f32
    %32 = vector.broadcast %cst_15 : f32 to vector<2x784xf32>
    %c0_16 = arith.constant 0 : index
    %c0_17 = arith.constant 0 : index
    %33 = vector.load %arg9[%c0_16, %c0_17] : memref<2x842xf32, #tpu.memory_space<vmem>>, vector<2x784xf32>
    %cst_18 = arith.constant 0.000000e+00 : f32
    %34 = vector.shape_cast %26 : vector<1x784xi1> to vector<1x784xi1>
    %35 = vector.broadcast %34 : vector<1x784xi1> to vector<2x784xi1>
    %36 = vector.broadcast %cst_18 : f32 to vector<2x784xf32>
    %37 = arith.select %35, %33, %36 : vector<2x784xi1>, vector<2x784xf32>
    %c0_19 = arith.constant 0 : index
    %c0_20 = arith.constant 0 : index
    %38 = memref.load %arg1[%c0_19, %c0_20] : memref<4x9xf32, #tpu.memory_space<smem>>
    %39 = vector.broadcast %38 : f32 to vector<2x784xf32>
    %40 = arith.mulf %39, %37 : vector<2x784xf32>
    %41 = arith.addf %29, %40 : vector<2x784xf32>
    %c1 = arith.constant 1 : index
    %c0_21 = arith.constant 0 : index
    %42 = memref.load %arg1[%c1, %c0_21] : memref<4x9xf32, #tpu.memory_space<smem>>
    %43 = vector.broadcast %42 : f32 to vector<2x784xf32>
    %44 = arith.mulf %43, %37 : vector<2x784xf32>
    %45 = arith.addf %30, %44 : vector<2x784xf32>
    %c2 = arith.constant 2 : index
    %c0_22 = arith.constant 0 : index
    %46 = memref.load %arg1[%c2, %c0_22] : memref<4x9xf32, #tpu.memory_space<smem>>
    %47 = vector.broadcast %46 : f32 to vector<2x784xf32>
    %48 = arith.mulf %47, %37 : vector<2x784xf32>
    %49 = arith.addf %31, %48 : vector<2x784xf32>
    %c3 = arith.constant 3 : index
    %c0_23 = arith.constant 0 : index
    %50 = memref.load %arg1[%c3, %c0_23] : memref<4x9xf32, #tpu.memory_space<smem>>
    %51 = vector.broadcast %50 : f32 to vector<2x784xf32>
    %52 = arith.mulf %51, %37 : vector<2x784xf32>
    %53 = arith.addf %32, %52 : vector<2x784xf32>
    %c0_24 = arith.constant 0 : index
    %c1_25 = arith.constant 1 : index
    %54 = vector.load %arg9[%c0_24, %c1_25] : memref<2x842xf32, #tpu.memory_space<vmem>>, vector<2x784xf32>
    %c0_26 = arith.constant 0 : index
    %c1_27 = arith.constant 1 : index
    %55 = memref.load %arg1[%c0_26, %c1_27] : memref<4x9xf32, #tpu.memory_space<smem>>
    %56 = vector.broadcast %55 : f32 to vector<2x784xf32>
    %57 = arith.mulf %56, %54 : vector<2x784xf32>
    %58 = arith.addf %41, %57 : vector<2x784xf32>
    %c1_28 = arith.constant 1 : index
    %c1_29 = arith.constant 1 : index
    %59 = memref.load %arg1[%c1_28, %c1_29] : memref<4x9xf32, #tpu.memory_space<smem>>
    %60 = vector.broadcast %59 : f32 to vector<2x784xf32>
    %61 = arith.mulf %60, %54 : vector<2x784xf32>
    %62 = arith.addf %45, %61 : vector<2x784xf32>
    %c2_30 = arith.constant 2 : index
    %c1_31 = arith.constant 1 : index
    %63 = memref.load %arg1[%c2_30, %c1_31] : memref<4x9xf32, #tpu.memory_space<smem>>
    %64 = vector.broadcast %63 : f32 to vector<2x784xf32>
    %65 = arith.mulf %64, %54 : vector<2x784xf32>
    %66 = arith.addf %49, %65 : vector<2x784xf32>
    %c3_32 = arith.constant 3 : index
    %c1_33 = arith.constant 1 : index
    %67 = memref.load %arg1[%c3_32, %c1_33] : memref<4x9xf32, #tpu.memory_space<smem>>
    %68 = vector.broadcast %67 : f32 to vector<2x784xf32>
    %69 = arith.mulf %68, %54 : vector<2x784xf32>
    %70 = arith.addf %53, %69 : vector<2x784xf32>
    %c0_34 = arith.constant 0 : index
    %c2_35 = arith.constant 2 : index
    %71 = vector.load %arg9[%c0_34, %c2_35] : memref<2x842xf32, #tpu.memory_space<vmem>>, vector<2x784xf32>
    %cst_36 = arith.constant 0.000000e+00 : f32
    %72 = vector.shape_cast %28 : vector<1x784xi1> to vector<1x784xi1>
    %73 = vector.broadcast %72 : vector<1x784xi1> to vector<2x784xi1>
    %74 = vector.broadcast %cst_36 : f32 to vector<2x784xf32>
    %75 = arith.select %73, %71, %74 : vector<2x784xi1>, vector<2x784xf32>
    %c0_37 = arith.constant 0 : index
    %c2_38 = arith.constant 2 : index
    %76 = memref.load %arg1[%c0_37, %c2_38] : memref<4x9xf32, #tpu.memory_space<smem>>
    %77 = vector.broadcast %76 : f32 to vector<2x784xf32>
    %78 = arith.mulf %77, %75 : vector<2x784xf32>
    %79 = arith.addf %58, %78 : vector<2x784xf32>
    %c1_39 = arith.constant 1 : index
    %c2_40 = arith.constant 2 : index
    %80 = memref.load %arg1[%c1_39, %c2_40] : memref<4x9xf32, #tpu.memory_space<smem>>
    %81 = vector.broadcast %80 : f32 to vector<2x784xf32>
    %82 = arith.mulf %81, %75 : vector<2x784xf32>
    %83 = arith.addf %62, %82 : vector<2x784xf32>
    %c2_41 = arith.constant 2 : index
    %c2_42 = arith.constant 2 : index
    %84 = memref.load %arg1[%c2_41, %c2_42] : memref<4x9xf32, #tpu.memory_space<smem>>
    %85 = vector.broadcast %84 : f32 to vector<2x784xf32>
    %86 = arith.mulf %85, %75 : vector<2x784xf32>
    %87 = arith.addf %66, %86 : vector<2x784xf32>
    %c3_43 = arith.constant 3 : index
    %c2_44 = arith.constant 2 : index
    %88 = memref.load %arg1[%c3_43, %c2_44] : memref<4x9xf32, #tpu.memory_space<smem>>
    %89 = vector.broadcast %88 : f32 to vector<2x784xf32>
    %90 = arith.mulf %89, %75 : vector<2x784xf32>
    %91 = arith.addf %70, %90 : vector<2x784xf32>
    %c0_45 = arith.constant 0 : index
    %c28 = arith.constant 28 : index
    %92 = vector.load %arg9[%c0_45, %c28] : memref<2x842xf32, #tpu.memory_space<vmem>>, vector<2x784xf32>
    %cst_46 = arith.constant 0.000000e+00 : f32
    %93 = vector.shape_cast %26 : vector<1x784xi1> to vector<1x784xi1>
    %94 = vector.broadcast %93 : vector<1x784xi1> to vector<2x784xi1>
    %95 = vector.broadcast %cst_46 : f32 to vector<2x784xf32>
    %96 = arith.select %94, %92, %95 : vector<2x784xi1>, vector<2x784xf32>
    %c0_47 = arith.constant 0 : index
    %c3_48 = arith.constant 3 : index
    %97 = memref.load %arg1[%c0_47, %c3_48] : memref<4x9xf32, #tpu.memory_space<smem>>
    %98 = vector.broadcast %97 : f32 to vector<2x784xf32>
    %99 = arith.mulf %98, %96 : vector<2x784xf32>
    %100 = arith.addf %79, %99 : vector<2x784xf32>
    %c1_49 = arith.constant 1 : index
    %c3_50 = arith.constant 3 : index
    %101 = memref.load %arg1[%c1_49, %c3_50] : memref<4x9xf32, #tpu.memory_space<smem>>
    %102 = vector.broadcast %101 : f32 to vector<2x784xf32>
    %103 = arith.mulf %102, %96 : vector<2x784xf32>
    %104 = arith.addf %83, %103 : vector<2x784xf32>
    %c2_51 = arith.constant 2 : index
    %c3_52 = arith.constant 3 : index
    %105 = memref.load %arg1[%c2_51, %c3_52] : memref<4x9xf32, #tpu.memory_space<smem>>
    %106 = vector.broadcast %105 : f32 to vector<2x784xf32>
    %107 = arith.mulf %106, %96 : vector<2x784xf32>
    %108 = arith.addf %87, %107 : vector<2x784xf32>
    %c3_53 = arith.constant 3 : index
    %c3_54 = arith.constant 3 : index
    %109 = memref.load %arg1[%c3_53, %c3_54] : memref<4x9xf32, #tpu.memory_space<smem>>
    %110 = vector.broadcast %109 : f32 to vector<2x784xf32>
    %111 = arith.mulf %110, %96 : vector<2x784xf32>
    %112 = arith.addf %91, %111 : vector<2x784xf32>
    %c0_55 = arith.constant 0 : index
    %c29_56 = arith.constant 29 : index
    %113 = vector.load %arg9[%c0_55, %c29_56] : memref<2x842xf32, #tpu.memory_space<vmem>>, vector<2x784xf32>
    %c0_57 = arith.constant 0 : index
    %c4 = arith.constant 4 : index
    %114 = memref.load %arg1[%c0_57, %c4] : memref<4x9xf32, #tpu.memory_space<smem>>
    %115 = vector.broadcast %114 : f32 to vector<2x784xf32>
    %116 = arith.mulf %115, %113 : vector<2x784xf32>
    %117 = arith.addf %100, %116 : vector<2x784xf32>
    %c1_58 = arith.constant 1 : index
    %c4_59 = arith.constant 4 : index
    %118 = memref.load %arg1[%c1_58, %c4_59] : memref<4x9xf32, #tpu.memory_space<smem>>
    %119 = vector.broadcast %118 : f32 to vector<2x784xf32>
    %120 = arith.mulf %119, %113 : vector<2x784xf32>
    %121 = arith.addf %104, %120 : vector<2x784xf32>
    %c2_60 = arith.constant 2 : index
    %c4_61 = arith.constant 4 : index
    %122 = memref.load %arg1[%c2_60, %c4_61] : memref<4x9xf32, #tpu.memory_space<smem>>
    %123 = vector.broadcast %122 : f32 to vector<2x784xf32>
    %124 = arith.mulf %123, %113 : vector<2x784xf32>
    %125 = arith.addf %108, %124 : vector<2x784xf32>
    %c3_62 = arith.constant 3 : index
    %c4_63 = arith.constant 4 : index
    %126 = memref.load %arg1[%c3_62, %c4_63] : memref<4x9xf32, #tpu.memory_space<smem>>
    %127 = vector.broadcast %126 : f32 to vector<2x784xf32>
    %128 = arith.mulf %127, %113 : vector<2x784xf32>
    %129 = arith.addf %112, %128 : vector<2x784xf32>
    %c0_64 = arith.constant 0 : index
    %c30 = arith.constant 30 : index
    %130 = vector.load %arg9[%c0_64, %c30] : memref<2x842xf32, #tpu.memory_space<vmem>>, vector<2x784xf32>
    %cst_65 = arith.constant 0.000000e+00 : f32
    %131 = vector.shape_cast %28 : vector<1x784xi1> to vector<1x784xi1>
    %132 = vector.broadcast %131 : vector<1x784xi1> to vector<2x784xi1>
    %133 = vector.broadcast %cst_65 : f32 to vector<2x784xf32>
    %134 = arith.select %132, %130, %133 : vector<2x784xi1>, vector<2x784xf32>
    %c0_66 = arith.constant 0 : index
    %c5 = arith.constant 5 : index
    %135 = memref.load %arg1[%c0_66, %c5] : memref<4x9xf32, #tpu.memory_space<smem>>
    %136 = vector.broadcast %135 : f32 to vector<2x784xf32>
    %137 = arith.mulf %136, %134 : vector<2x784xf32>
    %138 = arith.addf %117, %137 : vector<2x784xf32>
    %c1_67 = arith.constant 1 : index
    %c5_68 = arith.constant 5 : index
    %139 = memref.load %arg1[%c1_67, %c5_68] : memref<4x9xf32, #tpu.memory_space<smem>>
    %140 = vector.broadcast %139 : f32 to vector<2x784xf32>
    %141 = arith.mulf %140, %134 : vector<2x784xf32>
    %142 = arith.addf %121, %141 : vector<2x784xf32>
    %c2_69 = arith.constant 2 : index
    %c5_70 = arith.constant 5 : index
    %143 = memref.load %arg1[%c2_69, %c5_70] : memref<4x9xf32, #tpu.memory_space<smem>>
    %144 = vector.broadcast %143 : f32 to vector<2x784xf32>
    %145 = arith.mulf %144, %134 : vector<2x784xf32>
    %146 = arith.addf %125, %145 : vector<2x784xf32>
    %c3_71 = arith.constant 3 : index
    %c5_72 = arith.constant 5 : index
    %147 = memref.load %arg1[%c3_71, %c5_72] : memref<4x9xf32, #tpu.memory_space<smem>>
    %148 = vector.broadcast %147 : f32 to vector<2x784xf32>
    %149 = arith.mulf %148, %134 : vector<2x784xf32>
    %150 = arith.addf %129, %149 : vector<2x784xf32>
    %c0_73 = arith.constant 0 : index
    %c56 = arith.constant 56 : index
    %151 = vector.load %arg9[%c0_73, %c56] : memref<2x842xf32, #tpu.memory_space<vmem>>, vector<2x784xf32>
    %cst_74 = arith.constant 0.000000e+00 : f32
    %152 = vector.shape_cast %26 : vector<1x784xi1> to vector<1x784xi1>
    %153 = vector.broadcast %152 : vector<1x784xi1> to vector<2x784xi1>
    %154 = vector.broadcast %cst_74 : f32 to vector<2x784xf32>
    %155 = arith.select %153, %151, %154 : vector<2x784xi1>, vector<2x784xf32>
    %c0_75 = arith.constant 0 : index
    %c6 = arith.constant 6 : index
    %156 = memref.load %arg1[%c0_75, %c6] : memref<4x9xf32, #tpu.memory_space<smem>>
    %157 = vector.broadcast %156 : f32 to vector<2x784xf32>
    %158 = arith.mulf %157, %155 : vector<2x784xf32>
    %159 = arith.addf %138, %158 : vector<2x784xf32>
    %c1_76 = arith.constant 1 : index
    %c6_77 = arith.constant 6 : index
    %160 = memref.load %arg1[%c1_76, %c6_77] : memref<4x9xf32, #tpu.memory_space<smem>>
    %161 = vector.broadcast %160 : f32 to vector<2x784xf32>
    %162 = arith.mulf %161, %155 : vector<2x784xf32>
    %163 = arith.addf %142, %162 : vector<2x784xf32>
    %c2_78 = arith.constant 2 : index
    %c6_79 = arith.constant 6 : index
    %164 = memref.load %arg1[%c2_78, %c6_79] : memref<4x9xf32, #tpu.memory_space<smem>>
    %165 = vector.broadcast %164 : f32 to vector<2x784xf32>
    %166 = arith.mulf %165, %155 : vector<2x784xf32>
    %167 = arith.addf %146, %166 : vector<2x784xf32>
    %c3_80 = arith.constant 3 : index
    %c6_81 = arith.constant 6 : index
    %168 = memref.load %arg1[%c3_80, %c6_81] : memref<4x9xf32, #tpu.memory_space<smem>>
    %169 = vector.broadcast %168 : f32 to vector<2x784xf32>
    %170 = arith.mulf %169, %155 : vector<2x784xf32>
    %171 = arith.addf %150, %170 : vector<2x784xf32>
    %c0_82 = arith.constant 0 : index
    %c57 = arith.constant 57 : index
    %172 = vector.load %arg9[%c0_82, %c57] : memref<2x842xf32, #tpu.memory_space<vmem>>, vector<2x784xf32>
    %c0_83 = arith.constant 0 : index
    %c7 = arith.constant 7 : index
    %173 = memref.load %arg1[%c0_83, %c7] : memref<4x9xf32, #tpu.memory_space<smem>>
    %174 = vector.broadcast %173 : f32 to vector<2x784xf32>
    %175 = arith.mulf %174, %172 : vector<2x784xf32>
    %176 = arith.addf %159, %175 : vector<2x784xf32>
    %c1_84 = arith.constant 1 : index
    %c7_85 = arith.constant 7 : index
    %177 = memref.load %arg1[%c1_84, %c7_85] : memref<4x9xf32, #tpu.memory_space<smem>>
    %178 = vector.broadcast %177 : f32 to vector<2x784xf32>
    %179 = arith.mulf %178, %172 : vector<2x784xf32>
    %180 = arith.addf %163, %179 : vector<2x784xf32>
    %c2_86 = arith.constant 2 : index
    %c7_87 = arith.constant 7 : index
    %181 = memref.load %arg1[%c2_86, %c7_87] : memref<4x9xf32, #tpu.memory_space<smem>>
    %182 = vector.broadcast %181 : f32 to vector<2x784xf32>
    %183 = arith.mulf %182, %172 : vector<2x784xf32>
    %184 = arith.addf %167, %183 : vector<2x784xf32>
    %c3_88 = arith.constant 3 : index
    %c7_89 = arith.constant 7 : index
    %185 = memref.load %arg1[%c3_88, %c7_89] : memref<4x9xf32, #tpu.memory_space<smem>>
    %186 = vector.broadcast %185 : f32 to vector<2x784xf32>
    %187 = arith.mulf %186, %172 : vector<2x784xf32>
    %188 = arith.addf %171, %187 : vector<2x784xf32>
    %c0_90 = arith.constant 0 : index
    %c58 = arith.constant 58 : index
    %189 = vector.load %arg9[%c0_90, %c58] : memref<2x842xf32, #tpu.memory_space<vmem>>, vector<2x784xf32>
    %cst_91 = arith.constant 0.000000e+00 : f32
    %190 = vector.shape_cast %28 : vector<1x784xi1> to vector<1x784xi1>
    %191 = vector.broadcast %190 : vector<1x784xi1> to vector<2x784xi1>
    %192 = vector.broadcast %cst_91 : f32 to vector<2x784xf32>
    %193 = arith.select %191, %189, %192 : vector<2x784xi1>, vector<2x784xf32>
    %c0_92 = arith.constant 0 : index
    %c8 = arith.constant 8 : index
    %194 = memref.load %arg1[%c0_92, %c8] : memref<4x9xf32, #tpu.memory_space<smem>>
    %195 = vector.broadcast %194 : f32 to vector<2x784xf32>
    %196 = arith.mulf %195, %193 : vector<2x784xf32>
    %197 = arith.addf %176, %196 : vector<2x784xf32>
    %c1_93 = arith.constant 1 : index
    %c8_94 = arith.constant 8 : index
    %198 = memref.load %arg1[%c1_93, %c8_94] : memref<4x9xf32, #tpu.memory_space<smem>>
    %199 = vector.broadcast %198 : f32 to vector<2x784xf32>
    %200 = arith.mulf %199, %193 : vector<2x784xf32>
    %201 = arith.addf %180, %200 : vector<2x784xf32>
    %c2_95 = arith.constant 2 : index
    %c8_96 = arith.constant 8 : index
    %202 = memref.load %arg1[%c2_95, %c8_96] : memref<4x9xf32, #tpu.memory_space<smem>>
    %203 = vector.broadcast %202 : f32 to vector<2x784xf32>
    %204 = arith.mulf %203, %193 : vector<2x784xf32>
    %205 = arith.addf %184, %204 : vector<2x784xf32>
    %c3_97 = arith.constant 3 : index
    %c8_98 = arith.constant 8 : index
    %206 = memref.load %arg1[%c3_97, %c8_98] : memref<4x9xf32, #tpu.memory_space<smem>>
    %207 = vector.broadcast %206 : f32 to vector<2x784xf32>
    %208 = arith.mulf %207, %193 : vector<2x784xf32>
    %209 = arith.addf %188, %208 : vector<2x784xf32>
    %cst_99 = arith.constant 0.000000e+00 : f32
    %210 = vector.broadcast %cst_99 : f32 to vector<2x32xf32>
    %c0_100 = arith.constant 0 : index
    %c0_101 = arith.constant 0 : index
    %211 = vector.load %arg5[%c0_100, %c0_101] : memref<1x32xf32, #tpu.memory_space<vmem>>, vector<1x32xf32>
    %212 = vector.broadcast %211 : vector<1x32xf32> to vector<2x32xf32>
    %213 = arith.addf %210, %212 : vector<2x32xf32>
    %c0_102 = arith.constant 0 : index
    %214 = memref.load %arg2[%c0_102] : memref<4xf32, #tpu.memory_space<smem>>
    %215 = vector.broadcast %214 : f32 to vector<2x784xf32>
    %216 = arith.addf %197, %215 : vector<2x784xf32>
    %c0_103 = arith.constant 0 : index
    %c0_104 = arith.constant 0 : index
    %217 = vector.load %arg10[%c0_103, %c0_104] : memref<2x816xf32, #tpu.memory_space<vmem>>, vector<2x784xf32>
    tpu.vector_store %arg10[%c0_103, %c0_104], %216 {strides = array<i32>} : memref<2x816xf32, #tpu.memory_space<vmem>>, vector<2x784xf32>,
    %c0_105 = arith.constant 0 : index
    %c1_106 = arith.constant 1 : index
    %218 = vector.load %arg10[%c0_105, %c1_106] : memref<2x816xf32, #tpu.memory_space<vmem>>, vector<2x784xf32>
    %c0_107 = arith.constant 0 : index
    %c28_108 = arith.constant 28 : index
    %219 = vector.load %arg10[%c0_107, %c28_108] : memref<2x816xf32, #tpu.memory_space<vmem>>, vector<2x784xf32>
    %c0_109 = arith.constant 0 : index
    %c29_110 = arith.constant 29 : index
    %220 = vector.load %arg10[%c0_109, %c29_110] : memref<2x816xf32, #tpu.memory_space<vmem>>, vector<2x784xf32>
    %221 = arith.maximumf %216, %218 : vector<2x784xf32>
    %222 = arith.maximumf %219, %220 : vector<2x784xf32>
    %223 = arith.maximumf %221, %222 : vector<2x784xf32>
    %c0_111 = arith.constant 0 : index
    %c0_112 = arith.constant 0 : index
    %224 = vector.load %arg4[%c0_111, %c0_112] : memref<784x128xf32, #tpu.memory_space<vmem>>, vector<784x32xf32>
    %cst_113 = arith.constant dense<0.000000e+00> : vector<2x32xf32>
    %225 = tpu.matmul %223, %224, %cst_113 {dimension_numbers = #tpu.dot_dimension_numbers<[1], [0], [0], [1], [0, 0, 1, 1], [], []>} : vector<2x784xf32>, vector<784x32xf32>, vector<2x32xf32> -> vector<2x32xf32>
    %226 = arith.addf %213, %225 : vector<2x32xf32>
    %c1_114 = arith.constant 1 : index
    %227 = memref.load %arg2[%c1_114] : memref<4xf32, #tpu.memory_space<smem>>
    %228 = vector.broadcast %227 : f32 to vector<2x784xf32>
    %229 = arith.addf %201, %228 : vector<2x784xf32>
    %c0_115 = arith.constant 0 : index
    %c0_116 = arith.constant 0 : index
    %230 = vector.load %arg10[%c0_115, %c0_116] : memref<2x816xf32, #tpu.memory_space<vmem>>, vector<2x784xf32>
    tpu.vector_store %arg10[%c0_115, %c0_116], %229 {strides = array<i32>} : memref<2x816xf32, #tpu.memory_space<vmem>>, vector<2x784xf32>,
    %c0_117 = arith.constant 0 : index
    %c1_118 = arith.constant 1 : index
    %231 = vector.load %arg10[%c0_117, %c1_118] : memref<2x816xf32, #tpu.memory_space<vmem>>, vector<2x784xf32>
    %c0_119 = arith.constant 0 : index
    %c28_120 = arith.constant 28 : index
    %232 = vector.load %arg10[%c0_119, %c28_120] : memref<2x816xf32, #tpu.memory_space<vmem>>, vector<2x784xf32>
    %c0_121 = arith.constant 0 : index
    %c29_122 = arith.constant 29 : index
    %233 = vector.load %arg10[%c0_121, %c29_122] : memref<2x816xf32, #tpu.memory_space<vmem>>, vector<2x784xf32>
    %234 = arith.maximumf %229, %231 : vector<2x784xf32>
    %235 = arith.maximumf %232, %233 : vector<2x784xf32>
    %236 = arith.maximumf %234, %235 : vector<2x784xf32>
    %c0_123 = arith.constant 0 : index
    %c32 = arith.constant 32 : index
    %237 = vector.load %arg4[%c0_123, %c32] : memref<784x128xf32, #tpu.memory_space<vmem>>, vector<784x32xf32>
    %cst_124 = arith.constant dense<0.000000e+00> : vector<2x32xf32>
    %238 = tpu.matmul %236, %237, %cst_124 {dimension_numbers = #tpu.dot_dimension_numbers<[1], [0], [0], [1], [0, 0, 1, 1], [], []>} : vector<2x784xf32>, vector<784x32xf32>, vector<2x32xf32> -> vector<2x32xf32>
    %239 = arith.addf %226, %238 : vector<2x32xf32>
    %c2_125 = arith.constant 2 : index
    %240 = memref.load %arg2[%c2_125] : memref<4xf32, #tpu.memory_space<smem>>
    %241 = vector.broadcast %240 : f32 to vector<2x784xf32>
    %242 = arith.addf %205, %241 : vector<2x784xf32>
    %c0_126 = arith.constant 0 : index
    %c0_127 = arith.constant 0 : index
    %243 = vector.load %arg10[%c0_126, %c0_127] : memref<2x816xf32, #tpu.memory_space<vmem>>, vector<2x784xf32>
    tpu.vector_store %arg10[%c0_126, %c0_127], %242 {strides = array<i32>} : memref<2x816xf32, #tpu.memory_space<vmem>>, vector<2x784xf32>,
    %c0_128 = arith.constant 0 : index
    %c1_129 = arith.constant 1 : index
    %244 = vector.load %arg10[%c0_128, %c1_129] : memref<2x816xf32, #tpu.memory_space<vmem>>, vector<2x784xf32>
    %c0_130 = arith.constant 0 : index
    %c28_131 = arith.constant 28 : index
    %245 = vector.load %arg10[%c0_130, %c28_131] : memref<2x816xf32, #tpu.memory_space<vmem>>, vector<2x784xf32>
    %c0_132 = arith.constant 0 : index
    %c29_133 = arith.constant 29 : index
    %246 = vector.load %arg10[%c0_132, %c29_133] : memref<2x816xf32, #tpu.memory_space<vmem>>, vector<2x784xf32>
    %247 = arith.maximumf %242, %244 : vector<2x784xf32>
    %248 = arith.maximumf %245, %246 : vector<2x784xf32>
    %249 = arith.maximumf %247, %248 : vector<2x784xf32>
    %c0_134 = arith.constant 0 : index
    %c64 = arith.constant 64 : index
    %250 = vector.load %arg4[%c0_134, %c64] : memref<784x128xf32, #tpu.memory_space<vmem>>, vector<784x32xf32>
    %cst_135 = arith.constant dense<0.000000e+00> : vector<2x32xf32>
    %251 = tpu.matmul %249, %250, %cst_135 {dimension_numbers = #tpu.dot_dimension_numbers<[1], [0], [0], [1], [0, 0, 1, 1], [], []>} : vector<2x784xf32>, vector<784x32xf32>, vector<2x32xf32> -> vector<2x32xf32>
    %252 = arith.addf %239, %251 : vector<2x32xf32>
    %c3_136 = arith.constant 3 : index
    %253 = memref.load %arg2[%c3_136] : memref<4xf32, #tpu.memory_space<smem>>
    %254 = vector.broadcast %253 : f32 to vector<2x784xf32>
    %255 = arith.addf %209, %254 : vector<2x784xf32>
    %c0_137 = arith.constant 0 : index
    %c0_138 = arith.constant 0 : index
    %256 = vector.load %arg10[%c0_137, %c0_138] : memref<2x816xf32, #tpu.memory_space<vmem>>, vector<2x784xf32>
    tpu.vector_store %arg10[%c0_137, %c0_138], %255 {strides = array<i32>} : memref<2x816xf32, #tpu.memory_space<vmem>>, vector<2x784xf32>,
    %c0_139 = arith.constant 0 : index
    %c1_140 = arith.constant 1 : index
    %257 = vector.load %arg10[%c0_139, %c1_140] : memref<2x816xf32, #tpu.memory_space<vmem>>, vector<2x784xf32>
    %c0_141 = arith.constant 0 : index
    %c28_142 = arith.constant 28 : index
    %258 = vector.load %arg10[%c0_141, %c28_142] : memref<2x816xf32, #tpu.memory_space<vmem>>, vector<2x784xf32>
    %c0_143 = arith.constant 0 : index
    %c29_144 = arith.constant 29 : index
    %259 = vector.load %arg10[%c0_143, %c29_144] : memref<2x816xf32, #tpu.memory_space<vmem>>, vector<2x784xf32>
    %260 = arith.maximumf %255, %257 : vector<2x784xf32>
    %261 = arith.maximumf %258, %259 : vector<2x784xf32>
    %262 = arith.maximumf %260, %261 : vector<2x784xf32>
    %c0_145 = arith.constant 0 : index
    %c96 = arith.constant 96 : index
    %263 = vector.load %arg4[%c0_145, %c96] : memref<784x128xf32, #tpu.memory_space<vmem>>, vector<784x32xf32>
    %cst_146 = arith.constant dense<0.000000e+00> : vector<2x32xf32>
    %264 = tpu.matmul %262, %263, %cst_146 {dimension_numbers = #tpu.dot_dimension_numbers<[1], [0], [0], [1], [0, 0, 1, 1], [], []>} : vector<2x784xf32>, vector<784x32xf32>, vector<2x32xf32> -> vector<2x32xf32>
    %265 = arith.addf %252, %264 : vector<2x32xf32>
    %cst_147 = arith.constant 0.000000e+00 : f32
    %266 = vector.broadcast %cst_147 : f32 to vector<2x32xf32>
    %267 = arith.maximumf %265, %266 : vector<2x32xf32>
    %c0_148 = arith.constant 0 : index
    %c0_149 = arith.constant 0 : index
    %268 = vector.load %arg6[%c0_148, %c0_149] : memref<32x10xf32, #tpu.memory_space<vmem>>, vector<32x10xf32>
    %cst_150 = arith.constant dense<0.000000e+00> : vector<2x10xf32>
    %269 = tpu.matmul %267, %268, %cst_150 {dimension_numbers = #tpu.dot_dimension_numbers<[1], [0], [0], [1], [0, 0, 1, 1], [], []>} : vector<2x32xf32>, vector<32x10xf32>, vector<2x10xf32> -> vector<2x10xf32>
    %c0_151 = arith.constant 0 : index
    %c0_152 = arith.constant 0 : index
    %270 = vector.load %arg7[%c0_151, %c0_152] : memref<1x10xf32, #tpu.memory_space<vmem>>, vector<1x10xf32>
    %271 = vector.broadcast %270 : vector<1x10xf32> to vector<2x10xf32>
    %272 = arith.addf %269, %271 : vector<2x10xf32>
    %cst_153 = arith.constant dense<0xFF800000> : vector<2xf32>
    %273 = vector.multi_reduction <maximumf>, %272, %cst_153 [1] : vector<2x10xf32> to vector<2xf32>
    %274 = vector.shape_cast %273 : vector<2xf32> to vector<2x1xf32>
    %275 = vector.broadcast %274 : vector<2x1xf32> to vector<2x10xf32>
    %276 = arith.subf %272, %275 : vector<2x10xf32>
    %277 = math.exp %276 : vector<2x10xf32>
    %cst_154 = arith.constant dense<0.000000e+00> : vector<2xf32>
    %278 = vector.multi_reduction <add>, %277, %cst_154 [1] : vector<2x10xf32> to vector<2xf32>
    %279 = vector.shape_cast %278 : vector<2xf32> to vector<2x1xf32>
    %280 = math.log %279 : vector<2x1xf32>
    %281 = arith.addf %274, %280 : vector<2x1xf32>
    %282 = vector.broadcast %281 : vector<2x1xf32> to vector<2x10xf32>
    %283 = arith.subf %272, %282 : vector<2x10xf32>
    %c0_155 = arith.constant 0 : index
    %c0_156 = arith.constant 0 : index
    %284 = vector.load %arg8[%c0_155, %c0_156] : memref<2x10xf32, #tpu.memory_space<vmem>>, vector<2x10xf32>
    tpu.vector_store %arg8[%c0_155, %c0_156], %283 {strides = array<i32>} : memref<2x10xf32, #tpu.memory_space<vmem>>, vector<2x10xf32>,
    return
  }
  func.func @transform_0(%arg0: i32) -> (i32, i32) {
    %c0_i32 = arith.constant 0 : i32
    %c0_i32_0 = arith.constant 0 : i32
    %c0_i32_1 = arith.constant 0 : i32
    return %c0_i32, %c0_i32_0 : i32, i32
  }
  func.func @transform_1(%arg0: i32) -> i32 {
    %c0_i32 = arith.constant 0 : i32
    %c0_i32_0 = arith.constant 0 : i32
    return %c0_i32 : i32
  }
  func.func @transform_2(%arg0: i32) -> (i32, i32) {
    %c0_i32 = arith.constant 0 : i32
    %c0_i32_0 = arith.constant 0 : i32
    return %arg0, %c0_i32 : i32, i32
  }
  func.func @transform_3(%arg0: i32) -> (i32, i32) {
    %c0_i32 = arith.constant 0 : i32
    %c0_i32_0 = arith.constant 0 : i32
    %c0_i32_1 = arith.constant 0 : i32
    return %c0_i32, %c0_i32_0 : i32, i32
  }
  func.func @transform_4(%arg0: i32) -> (i32, i32) {
    %c0_i32 = arith.constant 0 : i32
    %c0_i32_0 = arith.constant 0 : i32
    %c0_i32_1 = arith.constant 0 : i32
    return %c0_i32, %c0_i32_0 : i32, i32
  }
  func.func @transform_5(%arg0: i32) -> (i32, i32) {
    %c0_i32 = arith.constant 0 : i32
    %c0_i32_0 = arith.constant 0 : i32
    %c0_i32_1 = arith.constant 0 : i32
    return %c0_i32, %c0_i32_0 : i32, i32
  }
  func.func @transform_6(%arg0: i32) -> (i32, i32) {
    %c0_i32 = arith.constant 0 : i32
    %c0_i32_0 = arith.constant 0 : i32
    %c0_i32_1 = arith.constant 0 : i32
    return %c0_i32, %c0_i32_0 : i32, i32
  }
  func.func @transform_7(%arg0: i32) -> (i32, i32) {
    %c0_i32 = arith.constant 0 : i32
    %c0_i32_0 = arith.constant 0 : i32
    return %arg0, %c0_i32 : i32, i32
  }
}

</mosaic_0001>

<llo_original>
// kernel: cnn_forward.1
$region0: #{cnn_forward.1}
  #allocation0 [shape = 'u32[]', space=smem, size = 0x4, offset = 0x4, fixed_abs, tag = 'smem constant byte address 0x4 - core index']
  #allocation1 [shape = 'u32[144,128]{1,0:T(1,128)}', space=vmem, size = 0x12000, scoped, tag = 'internal scratch']
  #allocation2 [shape = 'f32[2,842]{1,0:T(2,128)}', space=vmem, size = 0x1c00, scoped, tag = 'scratch operand']
  #allocation3 [shape = 'f32[2,816]{1,0:T(2,128)}', space=vmem, size = 0x1c00, scoped, tag = 'scratch operand']
  %s0 = inlined_call_operand.vmem [shape: f32[4,9], index: 0, kind: input, shape index: {}]
  %s1 = inlined_call_operand.vmem [shape: f32[4], index: 1, kind: input, shape index: {}]
  %s2 = inlined_call_operand.vmem [shape: f32[2,784], index: 2, kind: input, shape index: {}]
  %s3 = inlined_call_operand.vmem [shape: f32[784,128], index: 3, kind: input, shape index: {}]
  %s4 = inlined_call_operand.vmem [shape: f32[1,32], index: 4, kind: input, shape index: {}]
  %s5 = inlined_call_operand.vmem [shape: f32[32,10], index: 5, kind: input, shape index: {}]
  %s6 = inlined_call_operand.vmem [shape: f32[1,10], index: 6, kind: input, shape index: {}]
  %s7 = inlined_call_operand.hbm [shape: f32[2,10], index: 7, kind: output, shape index: {}]
  %s8 = sld [smem:[#allocation0]]
  $region46: #{cnn_forward.1} parent=0
    _
  %s10 = ssub.s32 1, %s8
  %s11 = scalar_select 0, %s10, %s8
  $region1: #{cnn_forward.1} parent=0
    #allocation4 [shape = 'u8[2048]{0}', space=smem, size = 0x800, scoped, tag = 'input window, operand 0, single buffered']
    #allocation5 [shape = 's32[1]{0}', space=sflag, size = 0x4, scoped, tag = 'scoped memory for cnn_forward.1']
    #allocation6 [shape = 's32[1]{0}', space=sflag, size = 0x4, scoped, tag = 'scoped memory for cnn_forward.1']
    #allocation7 [shape = 'u8[512]{0}', space=smem, size = 0x200, scoped, tag = 'input window, operand 1, single buffered']
    #allocation8 [shape = 's32[1]{0}', space=sflag, size = 0x4, scoped, tag = 'scoped memory for cnn_forward.1']
    #allocation9 [shape = 'u8[1024]{0}', space=vmem, size = 0x400, scoped, tag = 'output window, operand 0, single buffered']
    %12 = vsyncpa [#allocation6], 0
    %13 = vsyncpa [#allocation8], 0
    %14 = vsyncpa [#allocation5], 0
    // Predicated region
    $region2: #{cnn_forward.1} parent=1 // pred_check
      _
    $region3: #{cnn_forward.1} parent=1 // pred_check_branch
      %16 = sbr.rel (0) target = $region5
    $region4: #{cnn_forward.1} parent=1 // pred_region
      %s18 = ssub.s32 64, 64
      %19 = vsyncadd [#allocation6], %s18
      %s21 = sshll.u32 %s0, 4
      %s22 = int_to_ptr.vmem [resolvable:$true] %s21
      %24 = dma.vmem_to_smem %s22, 64, [#allocation4], [#allocation6]
    $region5: #{cnn_forward.1} parent=1 // pred_fallthru
      _
    // Predicated region
    $region6: #{cnn_forward.1} parent=1 // pred_check
      _
    $region7: #{cnn_forward.1} parent=1 // pred_check_branch
      %26 = sbr.rel (0) target = $region9
    $region8: #{cnn_forward.1} parent=1 // pred_region
      %s28 = ssub.s32 16, 16
      %29 = vsyncadd [#allocation8], %s28
      %s31 = sshll.u32 %s1, 4
      %s32 = int_to_ptr.vmem [resolvable:$true] %s31
      %34 = dma.vmem_to_smem %s32, 16, [#allocation7], [#allocation8]
    $region9: #{cnn_forward.1} parent=1 // pred_fallthru
      _
    // Predicated region
    $region10: #{cnn_forward.1} parent=1 // pred_check
      _
    $region11: #{cnn_forward.1} parent=1 // pred_check_branch
      %36 = sbr.rel (0) target = $region13
    $region12: #{cnn_forward.1} parent=1 // pred_region
      _
    $region13: #{cnn_forward.1} parent=1 // pred_fallthru
      _
    // Predicated region
    $region14: #{cnn_forward.1} parent=1 // pred_check
      _
    $region15: #{cnn_forward.1} parent=1 // pred_check_branch
      %38 = sbr.rel (0) target = $region17
    $region16: #{cnn_forward.1} parent=1 // pred_region
      _
    $region17: #{cnn_forward.1} parent=1 // pred_fallthru
      _
    // Predicated region
    $region18: #{cnn_forward.1} parent=1 // pred_check
      _
    $region19: #{cnn_forward.1} parent=1 // pred_check_branch
      %40 = sbr.rel (0) target = $region21
    $region20: #{cnn_forward.1} parent=1 // pred_region
      _
    $region21: #{cnn_forward.1} parent=1 // pred_fallthru
      _
    // Predicated region
    $region22: #{cnn_forward.1} parent=1 // pred_check
      _
    $region23: #{cnn_forward.1} parent=1 // pred_check_branch
      %42 = sbr.rel (0) target = $region25
    $region24: #{cnn_forward.1} parent=1 // pred_region
      _
    $region25: #{cnn_forward.1} parent=1 // pred_fallthru
      _
    // Predicated region
    $region26: #{cnn_forward.1} parent=1 // pred_check
      _
    $region27: #{cnn_forward.1} parent=1 // pred_check_branch
      %44 = sbr.rel (0) target = $region29
    $region28: #{cnn_forward.1} parent=1 // pred_region
      _
    $region29: #{cnn_forward.1} parent=1 // pred_fallthru
      _
    // Predicated region
    $region30: #{cnn_forward.1} parent=1 // pred_check
      _
    $region31: #{cnn_forward.1} parent=1 // pred_check_branch
      %46 = sbr.rel (0) target = $region33
    $region32: #{cnn_forward.1} parent=1 // pred_region
      %47 = dma.done [#allocation6], 64
    $region33: #{cnn_forward.1} parent=1 // pred_fallthru
      _
    // Predicated region
    $region34: #{cnn_forward.1} parent=1 // pred_check
      _
    $region35: #{cnn_forward.1} parent=1 // pred_check_branch
      %49 = sbr.rel (0) target = $region37
    $region36: #{cnn_forward.1} parent=1 // pred_region
      %50 = dma.done [#allocation8], 16
    $region37: #{cnn_forward.1} parent=1 // pred_fallthru
      _
    %51 = sfence
    %vm52 = vcmask 230400
    %53 = vst.msk [vmem:[#allocation2] sm:$0x3] %vm52, 0.0
    %vm54 = vcmask 599400
    %55 = vst.msk [vmem:[#allocation2 + $0xc] sm:$0x3] %vm54, 0.0
    %v56 = vld [vmem:[%s2] sm:$0xff]
    %v57 = vld [vmem:[%s2 + $0x8] sm:$0x3f]
    %60 = vrot.lane.b32.xlu0 %v56, 29
    %v61 = vpop.permute.xlu0 %60
    %62 = vrot.lane.b32.xlu0 %v57, 29
    %v63 = vpop.permute.xlu0 %62
    %v64 = vrot.slane %v61, 6
    %v65 = vrot.slane %v63, 6
    %vm66 = vcmask 236544
    %v67 = vsel %vm66, %v64, %v61
    %vm68 = vcmask 1041408
    %v69 = vsel %vm68, %v64, %v65
    %v70 = vsel %vm66, %v69, %v63
    %vm73 = vcmask 1041640
    %vm74 = vcmask 1043458
    %vm75 = vmor %vm74, %vm73
    %vm76 = vcmask 1045508
    %vm77 = vmor %vm76, %vm75
    %vm78 = vcmask 1047558
    %vm79 = vmor %vm78, %vm77
    %80 = vst.msk [vmem:[#allocation2] sm:$0xff] %vm79, %v67
    %vm81 = vmor %vm74, %vm68
    %vm82 = vcmask 365572
    %vm83 = vmor %vm82, %vm81
    %84 = vst.msk [vmem:[#allocation2 + $0x8] sm:$0x3f] %vm83, %v70
    %vm85 = vcmask 386176
    %86 = vst.msk [vmem:[#allocation3 + $0xc] sm:$0x3] %vm85, 0.0
    %v87 = vlaneseq
    %v88 = vand.u32 %v87, 127
    %v89 = vadd.s32 %v88, 128
    %v90 = vadd.s32 %v88, 256
    %v91 = vadd.s32 %v88, 384
    %v92 = vadd.s32 %v88, 512
    %v93 = vadd.s32 %v88, 640
    %v94 = vadd.s32 %v88, 768
    %vm95 = vcmp.lt.s32.totalorder %v88, 0
    %v96 = vsub.s32 0, %v88
    %v97 = vsel %vm95, %v96, %v88
    %v98 = vmul.u32.u64.compose %v97, 2454267026
    %v99 = vextract.low.u32 %v98
    %v100 = vextract.high.u32 %v98
    %vm101 = vc.u32 %v99, 2454267026
    %v102 = vsel %vm101, 1, 0
    %v103 = vadd.s32 %v100, %v102
    %v104 = vshrl.u32 %v103, 4
    %v105 = vmul.u32 %v104, 28
    %v106 = vsub.s32 %v97, %v105
    %v107 = vsub.s32 0, %v106
    %v108 = vsel %vm95, %v107, %v106
    %vm109 = vcmp.lt.s32.totalorder %v89, 0
    %v110 = vsub.s32 0, %v89
    %v111 = vsel %vm109, %v110, %v89
    %v112 = vmul.u32.u64.compose %v111, 2454267026
    %v113 = vextract.low.u32 %v112
    %v114 = vextract.high.u32 %v112
    %vm115 = vc.u32 %v113, 2454267026
    %v116 = vsel %vm115, 1, 0
    %v117 = vadd.s32 %v114, %v116
    %v118 = vshrl.u32 %v117, 4
    %v119 = vmul.u32 %v118, 28
    %v120 = vsub.s32 %v111, %v119
    %v121 = vsub.s32 0, %v120
    %v122 = vsel %vm109, %v121, %v120
    %vm123 = vcmp.lt.s32.totalorder %v90, 0
    %v124 = vsub.s32 0, %v90
    %v125 = vsel %vm123, %v124, %v90
    %v126 = vmul.u32.u64.compose %v125, 2454267026
    %v127 = vextract.low.u32 %v126
    %v128 = vextract.high.u32 %v126
    %vm129 = vc.u32 %v127, 2454267026
    %v130 = vsel %vm129, 1, 0
    %v131 = vadd.s32 %v128, %v130
    %v132 = vshrl.u32 %v131, 4
    %v133 = vmul.u32 %v132, 28
    %v134 = vsub.s32 %v125, %v133
    %v135 = vsub.s32 0, %v134
    %v136 = vsel %vm123, %v135, %v134
    %vm137 = vcmp.lt.s32.totalorder %v91, 0
    %v138 = vsub.s32 0, %v91
    %v139 = vsel %vm137, %v138, %v91
    %v140 = vmul.u32.u64.compose %v139, 2454267026
    %v141 = vextract.low.u32 %v140
    %v142 = vextract.high.u32 %v140
    %vm143 = vc.u32 %v141, 2454267026
    %v144 = vsel %vm143, 1, 0
    %v145 = vadd.s32 %v142, %v144
    %v146 = vshrl.u32 %v145, 4
    %v147 = vmul.u32 %v146, 28
    %v148 = vsub.s32 %v139, %v147
    %v149 = vsub.s32 0, %v148
    %v150 = vsel %vm137, %v149, %v148
    %vm151 = vcmp.lt.s32.totalorder %v92, 0
    %v152 = vsub.s32 0, %v92
    %v153 = vsel %vm151, %v152, %v92
    %v154 = vmul.u32.u64.compose %v153, 2454267026
    %v155 = vextract.low.u32 %v154
    %v156 = vextract.high.u32 %v154
    %vm157 = vc.u32 %v155, 2454267026
    %v158 = vsel %vm157, 1, 0
    %v159 = vadd.s32 %v156, %v158
    %v160 = vshrl.u32 %v159, 4
    %v161 = vmul.u32 %v160, 28
    %v162 = vsub.s32 %v153, %v161
    %v163 = vsub.s32 0, %v162
    %v164 = vsel %vm151, %v163, %v162
    %vm165 = vcmp.lt.s32.totalorder %v93, 0
    %v166 = vsub.s32 0, %v93
    %v167 = vsel %vm165, %v166, %v93
    %v168 = vmul.u32.u64.compose %v167, 2454267026
    %v169 = vextract.low.u32 %v168
    %v170 = vextract.high.u32 %v168
    %vm171 = vc.u32 %v169, 2454267026
    %v172 = vsel %vm171, 1, 0
    %v173 = vadd.s32 %v170, %v172
    %v174 = vshrl.u32 %v173, 4
    %v175 = vmul.u32 %v174, 28
    %v176 = vsub.s32 %v167, %v175
    %v177 = vsub.s32 0, %v176
    %v178 = vsel %vm165, %v177, %v176
    %vm179 = vcmp.lt.s32.totalorder %v94, 0
    %v180 = vsub.s32 0, %v94
    %v181 = vsel %vm179, %v180, %v94
    %v182 = vmul.u32.u64.compose %v181, 2454267026
    %v183 = vextract.low.u32 %v182
    %v184 = vextract.high.u32 %v182
    %vm185 = vc.u32 %v183, 2454267026
    %v186 = vsel %vm185, 1, 0
    %v187 = vadd.s32 %v184, %v186
    %v188 = vshrl.u32 %v187, 4
    %v189 = vmul.u32 %v188, 28
    %v190 = vsub.s32 %v181, %v189
    %v191 = vsub.s32 0, %v190
    %v192 = vsel %vm179, %v191, %v190
    %vm193 = vcmp.ne.s32.totalorder %v108, 0
    %vm194 = vcmp.ne.s32.totalorder %v122, 0
    %vm195 = vcmp.ne.s32.totalorder %v136, 0
    %vm196 = vcmp.ne.s32.totalorder %v150, 0
    %vm197 = vcmp.ne.s32.totalorder %v164, 0
    %vm198 = vcmp.ne.s32.totalorder %v178, 0
    %vm199 = vcmp.ne.s32.totalorder %v192, 0
    %vm200 = vcmp.lt.s32.totalorder %v108, 0
    %vm201 = vcmp.lt.s32.totalorder %v122, 0
    %vm202 = vcmp.lt.s32.totalorder %v136, 0
    %vm203 = vcmp.lt.s32.totalorder %v150, 0
    %vm204 = vcmp.lt.s32.totalorder %v164, 0
    %vm205 = vcmp.lt.s32.totalorder %v178, 0
    %vm206 = vcmp.lt.s32.totalorder %v192, 0
    %vm207 = vmand %vm200, %vm193
    %vm208 = vmand %vm201, %vm194
    %vm209 = vmand %vm202, %vm195
    %vm210 = vmand %vm203, %vm196
    %vm211 = vmand %vm204, %vm197
    %vm212 = vmand %vm205, %vm198
    %vm213 = vmand %vm206, %vm199
    %v214 = vadd.s32 %v108, 28
    %v215 = vadd.s32 %v122, 28
    %v216 = vadd.s32 %v136, 28
    %v217 = vadd.s32 %v150, 28
    %v218 = vadd.s32 %v164, 28
    %v219 = vadd.s32 %v178, 28
    %v220 = vadd.s32 %v192, 28
    %v221 = vsel %vm207, %v214, %v108
    %v222 = vsel %vm208, %v215, %v122
    %v223 = vsel %vm209, %v216, %v136
    %v224 = vsel %vm210, %v217, %v150
    %v225 = vsel %vm211, %v218, %v164
    %v226 = vsel %vm212, %v219, %v178
    %v227 = vsel %vm213, %v220, %v192
    %vm228 = vcmp.ge.s32.totalorder %v221, 1
    %vm229 = vcmp.ge.s32.totalorder %v222, 1
    %vm230 = vcmp.ge.s32.totalorder %v223, 1
    %vm231 = vcmp.ge.s32.totalorder %v224, 1
    %vm232 = vcmp.ge.s32.totalorder %v225, 1
    %vm233 = vcmp.ge.s32.totalorder %v226, 1
    %vm234 = vcmp.ge.s32.totalorder %v227, 1
    %vm235 = vcmp.le.s32.totalorder %v221, 26
    %vm236 = vcmp.le.s32.totalorder %v222, 26
    %vm237 = vcmp.le.s32.totalorder %v223, 26
    %vm238 = vcmp.le.s32.totalorder %v224, 26
    %vm239 = vcmp.le.s32.totalorder %v225, 26
    %vm240 = vcmp.le.s32.totalorder %v226, 26
    %vm241 = vcmp.le.s32.totalorder %v227, 26
    %v242 = vld [vmem:[#allocation2] sm:$0xff]
    %v243 = vld [vmem:[#allocation2 + $0x8] sm:$0x3f]
    %v244 = vsel %vm228, 1, 0
    %v245 = vsel %vm229, 1, 0
    %v246 = vsel %vm230, 1, 0
    %v247 = vsel %vm231, 1, 0
    %v248 = vsel %vm232, 1, 0
    %v249 = vsel %vm233, 1, 0
    %v250 = vsel %vm234, 1, 0
    %vm251 = vcmp.eq.s32.totalorder %v244, 1
    %vm252 = vcmp.eq.s32.totalorder %v245, 1
    %vm253 = vcmp.eq.s32.totalorder %v246, 1
    %vm254 = vcmp.eq.s32.totalorder %v247, 1
    %vm255 = vcmp.eq.s32.totalorder %v248, 1
    %vm256 = vcmp.eq.s32.totalorder %v249, 1
    %vm257 = vcmp.eq.s32.totalorder %v250, 1
    %v260 = vcombine.high %v242, %v242
    %v262 = vunpack.c.l.s4 1983009808
    %v263 = vunpack.c.0.s8 %v262
    %v264 = vlaneseq
    %v265 = vshrl.u32 %v264, 7
    %v266 = vsub.s32 %v263, %v265
    %v267 = vrot.slane %v242, %v266
    %v269 = vunpack.c.l.s4 1983009808
    %v270 = vunpack.c.0.s8 %v269
    %v271 = vlaneseq
    %v272 = vshrl.u32 %v271, 7
    %v273 = vsub.s32 %v270, %v272
    %v274 = vrot.slane %v260, %v273
    %v275 = vcombine.high %v267, %v267
    %v276 = vcombine.high %v274, %v274
    %v277 = vcombine.high %v243, %v243
    %v279 = vunpack.c.l.s4 1983009808
    %v280 = vunpack.c.0.s8 %v279
    %v281 = vlaneseq
    %v282 = vshrl.u32 %v281, 7
    %v283 = vsub.s32 %v280, %v282
    %v284 = vrot.slane %v243, %v283
    %v286 = vunpack.c.l.s4 1983009808
    %v287 = vunpack.c.0.s8 %v286
    %v288 = vlaneseq
    %v289 = vshrl.u32 %v288, 7
    %v290 = vsub.s32 %v287, %v289
    %v291 = vrot.slane %v277, %v290
    %v292 = vcombine.high %v284, %v284
    %v300 = vsel %vm251, %v267, 0.0
    %v301 = vsel %vm252, %v275, 0.0
    %v302 = vsel %vm253, %v274, 0.0
    %v303 = vsel %vm254, %v276, 0.0
    %v304 = vsel %vm255, %v284, 0.0
    %v305 = vsel %vm256, %v292, 0.0
    %v306 = vsel %vm257, %v291, 0.0
    %s307 = sld [smem:[#allocation4]]
    %v308 = vstv %s307
    %v309 = vmul.f32 %v308, %v300
    %v310 = vmul.f32 %v308, %v301
    %v311 = vmul.f32 %v308, %v302
    %v312 = vmul.f32 %v308, %v303
    %v313 = vmul.f32 %v308, %v304
    %v314 = vmul.f32 %v308, %v305
    %v315 = vmul.f32 %v308, %v306
    %v316 = vadd.f32 %v309, 0.0
    %v317 = vadd.f32 %v310, 0.0
    %v318 = vadd.f32 %v311, 0.0
    %v319 = vadd.f32 %v312, 0.0
    %v320 = vadd.f32 %v313, 0.0
    %v321 = vadd.f32 %v314, 0.0
    %v322 = vadd.f32 %v315, 0.0
    %s323 = sld [smem:[#allocation4 + $0x80]]
    %v324 = vstv %s323
    %v325 = vmul.f32 %v324, %v300
    %v326 = vmul.f32 %v324, %v301
    %v327 = vmul.f32 %v324, %v302
    %v328 = vmul.f32 %v324, %v303
    %v329 = vmul.f32 %v324, %v304
    %v330 = vmul.f32 %v324, %v305
    %v331 = vmul.f32 %v324, %v306
    %v332 = vadd.f32 %v325, 0.0
    %v333 = vadd.f32 %v326, 0.0
    %v334 = vadd.f32 %v327, 0.0
    %v335 = vadd.f32 %v328, 0.0
    %v336 = vadd.f32 %v329, 0.0
    %v337 = vadd.f32 %v330, 0.0
    %v338 = vadd.f32 %v331, 0.0
    %s339 = sld [smem:[#allocation4 + $0x100]]
    %v340 = vstv %s339
    %v341 = vmul.f32 %v340, %v300
    %v342 = vmul.f32 %v340, %v301
    %v343 = vmul.f32 %v340, %v302
    %v344 = vmul.f32 %v340, %v303
    %v345 = vmul.f32 %v340, %v304
    %v346 = vmul.f32 %v340, %v305
    %v347 = vmul.f32 %v340, %v306
    %v348 = vadd.f32 %v341, 0.0
    %v349 = vadd.f32 %v342, 0.0
    %v350 = vadd.f32 %v343, 0.0
    %v351 = vadd.f32 %v344, 0.0
    %v352 = vadd.f32 %v345, 0.0
    %v353 = vadd.f32 %v346, 0.0
    %v354 = vadd.f32 %v347, 0.0
    %s355 = sld [smem:[#allocation4 + $0x180]]
    %v356 = vstv %s355
    %v357 = vmul.f32 %v356, %v300
    %v358 = vmul.f32 %v356, %v301
    %v359 = vmul.f32 %v356, %v302
    %v360 = vmul.f32 %v356, %v303
    %v361 = vmul.f32 %v356, %v304
    %v362 = vmul.f32 %v356, %v305
    %v363 = vmul.f32 %v356, %v306
    %v364 = vadd.f32 %v357, 0.0
    %v365 = vadd.f32 %v358, 0.0
    %v366 = vadd.f32 %v359, 0.0
    %v367 = vadd.f32 %v360, 0.0
    %v368 = vadd.f32 %v361, 0.0
    %v369 = vadd.f32 %v362, 0.0
    %v370 = vadd.f32 %v363, 0.0
    %v371 = vld [vmem:[#allocation2] sm:$0xff]
    %v372 = vld [vmem:[#allocation2 + $0x8] sm:$0x3f]
    %s373 = sld [smem:[#allocation4 + $0x1]]
    %v374 = vstv %s373
    %v375 = vmul.f32 %v374, %v371
    %v376 = vmul.f32 %v374, %v372
    %v379 = vcombine.high %v375, %v375
    %v381 = vunpack.c.l.s4 1983009808
    %v382 = vunpack.c.0.s8 %v381
    %v383 = vlaneseq
    %v384 = vshrl.u32 %v383, 7
    %v385 = vsub.s32 %v382, %v384
    %v386 = vrot.slane %v375, %v385
    %v388 = vunpack.c.l.s4 1983009808
    %v389 = vunpack.c.0.s8 %v388
    %v390 = vlaneseq
    %v391 = vshrl.u32 %v390, 7
    %v392 = vsub.s32 %v389, %v391
    %v393 = vrot.slane %v379, %v392
    %v394 = vcombine.high %v386, %v386
    %v395 = vcombine.high %v393, %v393
    %v396 = vcombine.high %v376, %v376
    %v398 = vunpack.c.l.s4 1983009808
    %v399 = vunpack.c.0.s8 %v398
    %v400 = vlaneseq
    %v401 = vshrl.u32 %v400, 7
    %v402 = vsub.s32 %v399, %v401
    %v403 = vrot.slane %v376, %v402
    %v405 = vunpack.c.l.s4 1983009808
    %v406 = vunpack.c.0.s8 %v405
    %v407 = vlaneseq
    %v408 = vshrl.u32 %v407, 7
    %v409 = vsub.s32 %v406, %v408
    %v410 = vrot.slane %v396, %v409
    %v411 = vcombine.high %v403, %v403
    %412 = vrot.lane.b32.xlu0 %v386, 127
    %v413 = vpop.permute.xlu0 %412
    %414 = vrot.lane.b32.xlu0 %v394, 127
    %v415 = vpop.permute.xlu0 %414
    %416 = vrot.lane.b32.xlu0 %v393, 127
    %v417 = vpop.permute.xlu0 %416
    %418 = vrot.lane.b32.xlu0 %v395, 127
    %v419 = vpop.permute.xlu0 %418
    %420 = vrot.lane.b32.xlu0 %v403, 127
    %v421 = vpop.permute.xlu0 %420
    %422 = vrot.lane.b32.xlu0 %v411, 127
    %v423 = vpop.permute.xlu0 %422
    %424 = vrot.lane.b32.xlu0 %v410, 127
    %v425 = vpop.permute.xlu0 %424
    %vm426 = vcmask 1039360
    %v427 = vsel %vm426, %v413, %v415
    %v428 = vsel %vm426, %v415, %v417
    %v429 = vsel %vm426, %v417, %v419
    %v430 = vsel %vm426, %v419, %v421
    %v431 = vsel %vm426, %v421, %v423
    %v432 = vsel %vm426, %v423, %v425
    %v440 = vadd.f32 %v316, %v427
    %v441 = vadd.f32 %v317, %v428
    %v442 = vadd.f32 %v318, %v429
    %v443 = vadd.f32 %v319, %v430
    %v444 = vadd.f32 %v320, %v431
    %v445 = vadd.f32 %v321, %v432
    %v446 = vadd.f32 %v322, %v425
    %s447 = sld [smem:[#allocation4 + $0x81]]
    %v448 = vstv %s447
    %v449 = vmul.f32 %v448, %v371
    %v450 = vmul.f32 %v448, %v372
    %v453 = vcombine.high %v449, %v449
    %v455 = vunpack.c.l.s4 1983009808
    %v456 = vunpack.c.0.s8 %v455
    %v457 = vlaneseq
    %v458 = vshrl.u32 %v457, 7
    %v459 = vsub.s32 %v456, %v458
    %v460 = vrot.slane %v449, %v459
    %v462 = vunpack.c.l.s4 1983009808
    %v463 = vunpack.c.0.s8 %v462
    %v464 = vlaneseq
    %v465 = vshrl.u32 %v464, 7
    %v466 = vsub.s32 %v463, %v465
    %v467 = vrot.slane %v453, %v466
    %v468 = vcombine.high %v460, %v460
    %v469 = vcombine.high %v467, %v467
    %v470 = vcombine.high %v450, %v450
    %v472 = vunpack.c.l.s4 1983009808
    %v473 = vunpack.c.0.s8 %v472
    %v474 = vlaneseq
    %v475 = vshrl.u32 %v474, 7
    %v476 = vsub.s32 %v473, %v475
    %v477 = vrot.slane %v450, %v476
    %v479 = vunpack.c.l.s4 1983009808
    %v480 = vunpack.c.0.s8 %v479
    %v481 = vlaneseq
    %v482 = vshrl.u32 %v481, 7
    %v483 = vsub.s32 %v480, %v482
    %v484 = vrot.slane %v470, %v483
    %v485 = vcombine.high %v477, %v477
    %486 = vrot.lane.b32.xlu0 %v460, 127
    %v487 = vpop.permute.xlu0 %486
    %488 = vrot.lane.b32.xlu0 %v468, 127
    %v489 = vpop.permute.xlu0 %488
    %490 = vrot.lane.b32.xlu0 %v467, 127
    %v491 = vpop.permute.xlu0 %490
    %492 = vrot.lane.b32.xlu0 %v469, 127
    %v493 = vpop.permute.xlu0 %492
    %494 = vrot.lane.b32.xlu0 %v477, 127
    %v495 = vpop.permute.xlu0 %494
    %496 = vrot.lane.b32.xlu0 %v485, 127
    %v497 = vpop.permute.xlu0 %496
    %498 = vrot.lane.b32.xlu0 %v484, 127
    %v499 = vpop.permute.xlu0 %498
    %v500 = vsel %vm426, %v487, %v489
    %v501 = vsel %vm426, %v489, %v491
    %v502 = vsel %vm426, %v491, %v493
    %v503 = vsel %vm426, %v493, %v495
    %v504 = vsel %vm426, %v495, %v497
    %v505 = vsel %vm426, %v497, %v499
    %v513 = vadd.f32 %v332, %v500
    %v514 = vadd.f32 %v333, %v501
    %v515 = vadd.f32 %v334, %v502
    %v516 = vadd.f32 %v335, %v503
    %v517 = vadd.f32 %v336, %v504
    %v518 = vadd.f32 %v337, %v505
    %v519 = vadd.f32 %v338, %v499
    %s520 = sld [smem:[#allocation4 + $0x101]]
    %v521 = vstv %s520
    %v522 = vmul.f32 %v521, %v371
    %v523 = vmul.f32 %v521, %v372
    %v526 = vcombine.high %v522, %v522
    %v528 = vunpack.c.l.s4 1983009808
    %v529 = vunpack.c.0.s8 %v528
    %v530 = vlaneseq
    %v531 = vshrl.u32 %v530, 7
    %v532 = vsub.s32 %v529, %v531
    %v533 = vrot.slane %v522, %v532
    %v535 = vunpack.c.l.s4 1983009808
    %v536 = vunpack.c.0.s8 %v535
    %v537 = vlaneseq
    %v538 = vshrl.u32 %v537, 7
    %v539 = vsub.s32 %v536, %v538
    %v540 = vrot.slane %v526, %v539
    %v541 = vcombine.high %v533, %v533
    %v542 = vcombine.high %v540, %v540
    %v543 = vcombine.high %v523, %v523
    %v545 = vunpack.c.l.s4 1983009808
    %v546 = vunpack.c.0.s8 %v545
    %v547 = vlaneseq
    %v548 = vshrl.u32 %v547, 7
    %v549 = vsub.s32 %v546, %v548
    %v550 = vrot.slane %v523, %v549
    %v552 = vunpack.c.l.s4 1983009808
    %v553 = vunpack.c.0.s8 %v552
    %v554 = vlaneseq
    %v555 = vshrl.u32 %v554, 7
    %v556 = vsub.s32 %v553, %v555
    %v557 = vrot.slane %v543, %v556
    %v558 = vcombine.high %v550, %v550
    %559 = vrot.lane.b32.xlu0 %v533, 127
    %v560 = vpop.permute.xlu0 %559
    %561 = vrot.lane.b32.xlu0 %v541, 127
    %v562 = vpop.permute.xlu0 %561
    %563 = vrot.lane.b32.xlu0 %v540, 127
    %v564 = vpop.permute.xlu0 %563
    %565 = vrot.lane.b32.xlu0 %v542, 127
    %v566 = vpop.permute.xlu0 %565
    %567 = vrot.lane.b32.xlu0 %v550, 127
    %v568 = vpop.permute.xlu0 %567
    %569 = vrot.lane.b32.xlu0 %v558, 127
    %v570 = vpop.permute.xlu0 %569
    %571 = vrot.lane.b32.xlu0 %v557, 127
    %v572 = vpop.permute.xlu0 %571
    %v573 = vsel %vm426, %v560, %v562
    %v574 = vsel %vm426, %v562, %v564
    %v575 = vsel %vm426, %v564, %v566
    %v576 = vsel %vm426, %v566, %v568
    %v577 = vsel %vm426, %v568, %v570
    %v578 = vsel %vm426, %v570, %v572
    %v586 = vadd.f32 %v348, %v573
    %v587 = vadd.f32 %v349, %v574
    %v588 = vadd.f32 %v350, %v575
    %v589 = vadd.f32 %v351, %v576
    %v590 = vadd.f32 %v352, %v577
    %v591 = vadd.f32 %v353, %v578
    %v592 = vadd.f32 %v354, %v572
    %s593 = sld [smem:[#allocation4 + $0x181]]
    %v594 = vstv %s593
    %v595 = vmul.f32 %v594, %v371
    %v596 = vmul.f32 %v594, %v372
    %v599 = vcombine.high %v595, %v595
    %v601 = vunpack.c.l.s4 1983009808
    %v602 = vunpack.c.0.s8 %v601
    %v603 = vlaneseq
    %v604 = vshrl.u32 %v603, 7
    %v605 = vsub.s32 %v602, %v604
    %v606 = vrot.slane %v595, %v605
    %v608 = vunpack.c.l.s4 1983009808
    %v609 = vunpack.c.0.s8 %v608
    %v610 = vlaneseq
    %v611 = vshrl.u32 %v610, 7
    %v612 = vsub.s32 %v609, %v611
    %v613 = vrot.slane %v599, %v612
    %v614 = vcombine.high %v606, %v606
    %v615 = vcombine.high %v613, %v613
    %v616 = vcombine.high %v596, %v596
    %v618 = vunpack.c.l.s4 1983009808
    %v619 = vunpack.c.0.s8 %v618
    %v620 = vlaneseq
    %v621 = vshrl.u32 %v620, 7
    %v622 = vsub.s32 %v619, %v621
    %v623 = vrot.slane %v596, %v622
    %v625 = vunpack.c.l.s4 1983009808
    %v626 = vunpack.c.0.s8 %v625
    %v627 = vlaneseq
    %v628 = vshrl.u32 %v627, 7
    %v629 = vsub.s32 %v626, %v628
    %v630 = vrot.slane %v616, %v629
    %v631 = vcombine.high %v623, %v623
    %632 = vrot.lane.b32.xlu0 %v606, 127
    %v633 = vpop.permute.xlu0 %632
    %634 = vrot.lane.b32.xlu0 %v614, 127
    %v635 = vpop.permute.xlu0 %634
    %636 = vrot.lane.b32.xlu0 %v613, 127
    %v637 = vpop.permute.xlu0 %636
    %638 = vrot.lane.b32.xlu0 %v615, 127
    %v639 = vpop.permute.xlu0 %638
    %640 = vrot.lane.b32.xlu0 %v623, 127
    %v641 = vpop.permute.xlu0 %640
    %642 = vrot.lane.b32.xlu0 %v631, 127
    %v643 = vpop.permute.xlu0 %642
    %644 = vrot.lane.b32.xlu0 %v630, 127
    %v645 = vpop.permute.xlu0 %644
    %v646 = vsel %vm426, %v633, %v635
    %v647 = vsel %vm426, %v635, %v637
    %v648 = vsel %vm426, %v637, %v639
    %v649 = vsel %vm426, %v639, %v641
    %v650 = vsel %vm426, %v641, %v643
    %v651 = vsel %vm426, %v643, %v645
    %v659 = vadd.f32 %v364, %v646
    %v660 = vadd.f32 %v365, %v647
    %v661 = vadd.f32 %v366, %v648
    %v662 = vadd.f32 %v367, %v649
    %v663 = vadd.f32 %v368, %v650
    %v664 = vadd.f32 %v369, %v651
    %v665 = vadd.f32 %v370, %v645
    %v666 = vld [vmem:[#allocation2] sm:$0xff]
    %v667 = vld [vmem:[#allocation2 + $0x8] sm:$0x3f]
    %v668 = vsel %vm235, 1, 0
    %v669 = vsel %vm236, 1, 0
    %v670 = vsel %vm237, 1, 0
    %v671 = vsel %vm238, 1, 0
    %v672 = vsel %vm239, 1, 0
    %v673 = vsel %vm240, 1, 0
    %v674 = vsel %vm241, 1, 0
    %vm675 = vcmp.eq.s32.totalorder %v668, 1
    %vm676 = vcmp.eq.s32.totalorder %v669, 1
    %vm677 = vcmp.eq.s32.totalorder %v670, 1
    %vm678 = vcmp.eq.s32.totalorder %v671, 1
    %vm679 = vcmp.eq.s32.totalorder %v672, 1
    %vm680 = vcmp.eq.s32.totalorder %v673, 1
    %vm681 = vcmp.eq.s32.totalorder %v674, 1
    %v684 = vcombine.high %v666, %v666
    %v686 = vunpack.c.l.s4 1983009808
    %v687 = vunpack.c.0.s8 %v686
    %v688 = vlaneseq
    %v689 = vshrl.u32 %v688, 7
    %v690 = vsub.s32 %v687, %v689
    %v691 = vrot.slane %v666, %v690
    %v693 = vunpack.c.l.s4 1983009808
    %v694 = vunpack.c.0.s8 %v693
    %v695 = vlaneseq
    %v696 = vshrl.u32 %v695, 7
    %v697 = vsub.s32 %v694, %v696
    %v698 = vrot.slane %v684, %v697
    %v699 = vcombine.high %v691, %v691
    %v700 = vcombine.high %v698, %v698
    %v701 = vcombine.high %v667, %v667
    %v703 = vunpack.c.l.s4 1983009808
    %v704 = vunpack.c.0.s8 %v703
    %v705 = vlaneseq
    %v706 = vshrl.u32 %v705, 7
    %v707 = vsub.s32 %v704, %v706
    %v708 = vrot.slane %v667, %v707
    %v710 = vunpack.c.l.s4 1983009808
    %v711 = vunpack.c.0.s8 %v710
    %v712 = vlaneseq
    %v713 = vshrl.u32 %v712, 7
    %v714 = vsub.s32 %v711, %v713
    %v715 = vrot.slane %v701, %v714
    %v716 = vcombine.high %v708, %v708
    %717 = vrot.lane.b32.xlu0 %v691, 126
    %v718 = vpop.permute.xlu0 %717
    %719 = vrot.lane.b32.xlu0 %v699, 126
    %v720 = vpop.permute.xlu0 %719
    %721 = vrot.lane.b32.xlu0 %v698, 126
    %v722 = vpop.permute.xlu0 %721
    %723 = vrot.lane.b32.xlu0 %v700, 126
    %v724 = vpop.permute.xlu0 %723
    %725 = vrot.lane.b32.xlu0 %v708, 126
    %v726 = vpop.permute.xlu0 %725
    %727 = vrot.lane.b32.xlu0 %v716, 126
    %v728 = vpop.permute.xlu0 %727
    %729 = vrot.lane.b32.xlu0 %v715, 126
    %v730 = vpop.permute.xlu0 %729
    %vm731 = vcmask 1031168
    %v732 = vsel %vm731, %v718, %v720
    %v733 = vsel %vm731, %v720, %v722
    %v734 = vsel %vm731, %v722, %v724
    %v735 = vsel %vm731, %v724, %v726
    %v736 = vsel %vm731, %v726, %v728
    %v737 = vsel %vm731, %v728, %v730
    %v745 = vsel %vm675, %v732, 0.0
    %v746 = vsel %vm676, %v733, 0.0
    %v747 = vsel %vm677, %v734, 0.0
    %v748 = vsel %vm678, %v735, 0.0
    %v749 = vsel %vm679, %v736, 0.0
    %v750 = vsel %vm680, %v737, 0.0
    %v751 = vsel %vm681, %v730, 0.0
    %s752 = sld [smem:[#allocation4 + $0x2]]
    %v753 = vstv %s752
    %v754 = vmul.f32 %v753, %v745
    %v755 = vmul.f32 %v753, %v746
    %v756 = vmul.f32 %v753, %v747
    %v757 = vmul.f32 %v753, %v748
    %v758 = vmul.f32 %v753, %v749
    %v759 = vmul.f32 %v753, %v750
    %v760 = vmul.f32 %v753, %v751
    %v761 = vadd.f32 %v440, %v754
    %v762 = vadd.f32 %v441, %v755
    %v763 = vadd.f32 %v442, %v756
    %v764 = vadd.f32 %v443, %v757
    %v765 = vadd.f32 %v444, %v758
    %v766 = vadd.f32 %v445, %v759
    %v767 = vadd.f32 %v446, %v760
    %s768 = sld [smem:[#allocation4 + $0x82]]
    %v769 = vstv %s768
    %v770 = vmul.f32 %v769, %v745
    %v771 = vmul.f32 %v769, %v746
    %v772 = vmul.f32 %v769, %v747
    %v773 = vmul.f32 %v769, %v748
    %v774 = vmul.f32 %v769, %v749
    %v775 = vmul.f32 %v769, %v750
    %v776 = vmul.f32 %v769, %v751
    %v777 = vadd.f32 %v513, %v770
    %v778 = vadd.f32 %v514, %v771
    %v779 = vadd.f32 %v515, %v772
    %v780 = vadd.f32 %v516, %v773
    %v781 = vadd.f32 %v517, %v774
    %v782 = vadd.f32 %v518, %v775
    %v783 = vadd.f32 %v519, %v776
    %s784 = sld [smem:[#allocation4 + $0x102]]
    %v785 = vstv %s784
    %v786 = vmul.f32 %v785, %v745
    %v787 = vmul.f32 %v785, %v746
    %v788 = vmul.f32 %v785, %v747
    %v789 = vmul.f32 %v785, %v748
    %v790 = vmul.f32 %v785, %v749
    %v791 = vmul.f32 %v785, %v750
    %v792 = vmul.f32 %v785, %v751
    %v793 = vadd.f32 %v586, %v786
    %v794 = vadd.f32 %v587, %v787
    %v795 = vadd.f32 %v588, %v788
    %v796 = vadd.f32 %v589, %v789
    %v797 = vadd.f32 %v590, %v790
    %v798 = vadd.f32 %v591, %v791
    %v799 = vadd.f32 %v592, %v792
    %s800 = sld [smem:[#allocation4 + $0x182]]
    %v801 = vstv %s800
    %v802 = vmul.f32 %v801, %v745
    %v803 = vmul.f32 %v801, %v746
    %v804 = vmul.f32 %v801, %v747
    %v805 = vmul.f32 %v801, %v748
    %v806 = vmul.f32 %v801, %v749
    %v807 = vmul.f32 %v801, %v750
    %v808 = vmul.f32 %v801, %v751
    %v809 = vadd.f32 %v659, %v802
    %v810 = vadd.f32 %v660, %v803
    %v811 = vadd.f32 %v661, %v804
    %v812 = vadd.f32 %v662, %v805
    %v813 = vadd.f32 %v663, %v806
    %v814 = vadd.f32 %v664, %v807
    %v815 = vadd.f32 %v665, %v808
    %v816 = vld [vmem:[#allocation2] sm:$0xff]
    %v817 = vld [vmem:[#allocation2 + $0x8] sm:$0x3f]
    %v820 = vcombine.high %v816, %v816
    %v822 = vunpack.c.l.s4 1983009808
    %v823 = vunpack.c.0.s8 %v822
    %v824 = vlaneseq
    %v825 = vshrl.u32 %v824, 7
    %v826 = vsub.s32 %v823, %v825
    %v827 = vrot.slane %v816, %v826
    %v829 = vunpack.c.l.s4 1983009808
    %v830 = vunpack.c.0.s8 %v829
    %v831 = vlaneseq
    %v832 = vshrl.u32 %v831, 7
    %v833 = vsub.s32 %v830, %v832
    %v834 = vrot.slane %v820, %v833
    %v835 = vcombine.high %v827, %v827
    %v836 = vcombine.high %v834, %v834
    %v837 = vcombine.high %v817, %v817
    %v839 = vunpack.c.l.s4 1983009808
    %v840 = vunpack.c.0.s8 %v839
    %v841 = vlaneseq
    %v842 = vshrl.u32 %v841, 7
    %v843 = vsub.s32 %v840, %v842
    %v844 = vrot.slane %v817, %v843
    %v846 = vunpack.c.l.s4 1983009808
    %v847 = vunpack.c.0.s8 %v846
    %v848 = vlaneseq
    %v849 = vshrl.u32 %v848, 7
    %v850 = vsub.s32 %v847, %v849
    %v851 = vrot.slane %v837, %v850
    %v852 = vcombine.high %v844, %v844
    %853 = vrot.lane.b32.xlu0 %v827, 100
    %v854 = vpop.permute.xlu0 %853
    %855 = vrot.lane.b32.xlu0 %v835, 100
    %v856 = vpop.permute.xlu0 %855
    %857 = vrot.lane.b32.xlu0 %v834, 100
    %v858 = vpop.permute.xlu0 %857
    %859 = vrot.lane.b32.xlu0 %v836, 100
    %v860 = vpop.permute.xlu0 %859
    %861 = vrot.lane.b32.xlu0 %v844, 100
    %v862 = vpop.permute.xlu0 %861
    %863 = vrot.lane.b32.xlu0 %v852, 100
    %v864 = vpop.permute.xlu0 %863
    %865 = vrot.lane.b32.xlu0 %v851, 100
    %v866 = vpop.permute.xlu0 %865
    %vm867 = vcmask 818176
    %v868 = vsel %vm867, %v854, %v856
    %v869 = vsel %vm867, %v856, %v858
    %v870 = vsel %vm867, %v858, %v860
    %v871 = vsel %vm867, %v860, %v862
    %v872 = vsel %vm867, %v862, %v864
    %v873 = vsel %vm867, %v864, %v866
    %v881 = vsel %vm251, %v868, 0.0
    %v882 = vsel %vm252, %v869, 0.0
    %v883 = vsel %vm253, %v870, 0.0
    %v884 = vsel %vm254, %v871, 0.0
    %v885 = vsel %vm255, %v872, 0.0
    %v886 = vsel %vm256, %v873, 0.0
    %v887 = vsel %vm257, %v866, 0.0
    %s888 = sld [smem:[#allocation4 + $0x3]]
    %v889 = vstv %s888
    %v890 = vmul.f32 %v889, %v881
    %v891 = vmul.f32 %v889, %v882
    %v892 = vmul.f32 %v889, %v883
    %v893 = vmul.f32 %v889, %v884
    %v894 = vmul.f32 %v889, %v885
    %v895 = vmul.f32 %v889, %v886
    %v896 = vmul.f32 %v889, %v887
    %v897 = vadd.f32 %v761, %v890
    %v898 = vadd.f32 %v762, %v891
    %v899 = vadd.f32 %v763, %v892
    %v900 = vadd.f32 %v764, %v893
    %v901 = vadd.f32 %v765, %v894
    %v902 = vadd.f32 %v766, %v895
    %v903 = vadd.f32 %v767, %v896
    %s904 = sld [smem:[#allocation4 + $0x83]]
    %v905 = vstv %s904
    %v906 = vmul.f32 %v905, %v881
    %v907 = vmul.f32 %v905, %v882
    %v908 = vmul.f32 %v905, %v883
    %v909 = vmul.f32 %v905, %v884
    %v910 = vmul.f32 %v905, %v885
    %v911 = vmul.f32 %v905, %v886
    %v912 = vmul.f32 %v905, %v887
    %v913 = vadd.f32 %v777, %v906
    %v914 = vadd.f32 %v778, %v907
    %v915 = vadd.f32 %v779, %v908
    %v916 = vadd.f32 %v780, %v909
    %v917 = vadd.f32 %v781, %v910
    %v918 = vadd.f32 %v782, %v911
    %v919 = vadd.f32 %v783, %v912
    %s920 = sld [smem:[#allocation4 + $0x103]]
    %v921 = vstv %s920
    %v922 = vmul.f32 %v921, %v881
    %v923 = vmul.f32 %v921, %v882
    %v924 = vmul.f32 %v921, %v883
    %v925 = vmul.f32 %v921, %v884
    %v926 = vmul.f32 %v921, %v885
    %v927 = vmul.f32 %v921, %v886
    %v928 = vmul.f32 %v921, %v887
    %v929 = vadd.f32 %v793, %v922
    %v930 = vadd.f32 %v794, %v923
    %v931 = vadd.f32 %v795, %v924
    %v932 = vadd.f32 %v796, %v925
    %v933 = vadd.f32 %v797, %v926
    %v934 = vadd.f32 %v798, %v927
    %v935 = vadd.f32 %v799, %v928
    %s936 = sld [smem:[#allocation4 + $0x183]]
    %v937 = vstv %s936
    %v938 = vmul.f32 %v937, %v881
    %v939 = vmul.f32 %v937, %v882
    %v940 = vmul.f32 %v937, %v883
    %v941 = vmul.f32 %v937, %v884
    %v942 = vmul.f32 %v937, %v885
    %v943 = vmul.f32 %v937, %v886
    %v944 = vmul.f32 %v937, %v887
    %v945 = vadd.f32 %v809, %v938
    %v946 = vadd.f32 %v810, %v939
    %v947 = vadd.f32 %v811, %v940
    %v948 = vadd.f32 %v812, %v941
    %v949 = vadd.f32 %v813, %v942
    %v950 = vadd.f32 %v814, %v943
    %v951 = vadd.f32 %v815, %v944
    %v952 = vld [vmem:[#allocation2] sm:$0xff]
    %v953 = vld [vmem:[#allocation2 + $0x8] sm:$0x3f]
    %s954 = sld [smem:[#allocation4 + $0x4]]
    %v955 = vstv %s954
    %v956 = vmul.f32 %v955, %v952
    %v957 = vmul.f32 %v955, %v953
    %v960 = vcombine.high %v956, %v956
    %v962 = vunpack.c.l.s4 1983009808
    %v963 = vunpack.c.0.s8 %v962
    %v964 = vlaneseq
    %v965 = vshrl.u32 %v964, 7
    %v966 = vsub.s32 %v963, %v965
    %v967 = vrot.slane %v956, %v966
    %v969 = vunpack.c.l.s4 1983009808
    %v970 = vunpack.c.0.s8 %v969
    %v971 = vlaneseq
    %v972 = vshrl.u32 %v971, 7
    %v973 = vsub.s32 %v970, %v972
    %v974 = vrot.slane %v960, %v973
    %v975 = vcombine.high %v967, %v967
    %v976 = vcombine.high %v974, %v974
    %v977 = vcombine.high %v957, %v957
    %v979 = vunpack.c.l.s4 1983009808
    %v980 = vunpack.c.0.s8 %v979
    %v981 = vlaneseq
    %v982 = vshrl.u32 %v981, 7
    %v983 = vsub.s32 %v980, %v982
    %v984 = vrot.slane %v957, %v983
    %v986 = vunpack.c.l.s4 1983009808
    %v987 = vunpack.c.0.s8 %v986
    %v988 = vlaneseq
    %v989 = vshrl.u32 %v988, 7
    %v990 = vsub.s32 %v987, %v989
    %v991 = vrot.slane %v977, %v990
    %v992 = vcombine.high %v984, %v984
    %993 = vrot.lane.b32.xlu0 %v967, 99
    %v994 = vpop.permute.xlu0 %993
    %995 = vrot.lane.b32.xlu0 %v975, 99
    %v996 = vpop.permute.xlu0 %995
    %997 = vrot.lane.b32.xlu0 %v974, 99
    %v998 = vpop.permute.xlu0 %997
    %999 = vrot.lane.b32.xlu0 %v976, 99
    %v1000 = vpop.permute.xlu0 %999
    %1001 = vrot.lane.b32.xlu0 %v984, 99
    %v1002 = vpop.permute.xlu0 %1001
    %1003 = vrot.lane.b32.xlu0 %v992, 99
    %v1004 = vpop.permute.xlu0 %1003
    %1005 = vrot.lane.b32.xlu0 %v991, 99
    %v1006 = vpop.permute.xlu0 %1005
    %vm1007 = vcmask 809984
    %v1008 = vsel %vm1007, %v994, %v996
    %v1009 = vsel %vm1007, %v996, %v998
    %v1010 = vsel %vm1007, %v998, %v1000
    %v1011 = vsel %vm1007, %v1000, %v1002
    %v1012 = vsel %vm1007, %v1002, %v1004
    %v1013 = vsel %vm1007, %v1004, %v1006
    %v1021 = vadd.f32 %v897, %v1008
    %v1022 = vadd.f32 %v898, %v1009
    %v1023 = vadd.f32 %v899, %v1010
    %v1024 = vadd.f32 %v900, %v1011
    %v1025 = vadd.f32 %v901, %v1012
    %v1026 = vadd.f32 %v902, %v1013
    %v1027 = vadd.f32 %v903, %v1006
    %s1028 = sld [smem:[#allocation4 + $0x84]]
    %v1029 = vstv %s1028
    %v1030 = vmul.f32 %v1029, %v952
    %v1031 = vmul.f32 %v1029, %v953
    %v1034 = vcombine.high %v1030, %v1030
    %v1036 = vunpack.c.l.s4 1983009808
    %v1037 = vunpack.c.0.s8 %v1036
    %v1038 = vlaneseq
    %v1039 = vshrl.u32 %v1038, 7
    %v1040 = vsub.s32 %v1037, %v1039
    %v1041 = vrot.slane %v1030, %v1040
    %v1043 = vunpack.c.l.s4 1983009808
    %v1044 = vunpack.c.0.s8 %v1043
    %v1045 = vlaneseq
    %v1046 = vshrl.u32 %v1045, 7
    %v1047 = vsub.s32 %v1044, %v1046
    %v1048 = vrot.slane %v1034, %v1047
    %v1049 = vcombine.high %v1041, %v1041
    %v1050 = vcombine.high %v1048, %v1048
    %v1051 = vcombine.high %v1031, %v1031
    %v1053 = vunpack.c.l.s4 1983009808
    %v1054 = vunpack.c.0.s8 %v1053
    %v1055 = vlaneseq
    %v1056 = vshrl.u32 %v1055, 7
    %v1057 = vsub.s32 %v1054, %v1056
    %v1058 = vrot.slane %v1031, %v1057
    %v1060 = vunpack.c.l.s4 1983009808
    %v1061 = vunpack.c.0.s8 %v1060
    %v1062 = vlaneseq
    %v1063 = vshrl.u32 %v1062, 7
    %v1064 = vsub.s32 %v1061, %v1063
    %v1065 = vrot.slane %v1051, %v1064
    %v1066 = vcombine.high %v1058, %v1058
    %1067 = vrot.lane.b32.xlu0 %v1041, 99
    %v1068 = vpop.permute.xlu0 %1067
    %1069 = vrot.lane.b32.xlu0 %v1049, 99
    %v1070 = vpop.permute.xlu0 %1069
    %1071 = vrot.lane.b32.xlu0 %v1048, 99
    %v1072 = vpop.permute.xlu0 %1071
    %1073 = vrot.lane.b32.xlu0 %v1050, 99
    %v1074 = vpop.permute.xlu0 %1073
    %1075 = vrot.lane.b32.xlu0 %v1058, 99
    %v1076 = vpop.permute.xlu0 %1075
    %1077 = vrot.lane.b32.xlu0 %v1066, 99
    %v1078 = vpop.permute.xlu0 %1077
    %1079 = vrot.lane.b32.xlu0 %v1065, 99
    %v1080 = vpop.permute.xlu0 %1079
    %v1081 = vsel %vm1007, %v1068, %v1070
    %v1082 = vsel %vm1007, %v1070, %v1072
    %v1083 = vsel %vm1007, %v1072, %v1074
    %v1084 = vsel %vm1007, %v1074, %v1076
    %v1085 = vsel %vm1007, %v1076, %v1078
    %v1086 = vsel %vm1007, %v1078, %v1080
    %v1094 = vadd.f32 %v913, %v1081
    %v1095 = vadd.f32 %v914, %v1082
    %v1096 = vadd.f32 %v915, %v1083
    %v1097 = vadd.f32 %v916, %v1084
    %v1098 = vadd.f32 %v917, %v1085
    %v1099 = vadd.f32 %v918, %v1086
    %v1100 = vadd.f32 %v919, %v1080
    %s1101 = sld [smem:[#allocation4 + $0x104]]
    %v1102 = vstv %s1101
    %v1103 = vmul.f32 %v1102, %v952
    %v1104 = vmul.f32 %v1102, %v953
    %v1107 = vcombine.high %v1103, %v1103
    %v1109 = vunpack.c.l.s4 1983009808
    %v1110 = vunpack.c.0.s8 %v1109
    %v1111 = vlaneseq
    %v1112 = vshrl.u32 %v1111, 7
    %v1113 = vsub.s32 %v1110, %v1112
    %v1114 = vrot.slane %v1103, %v1113
    %v1116 = vunpack.c.l.s4 1983009808
    %v1117 = vunpack.c.0.s8 %v1116
    %v1118 = vlaneseq
    %v1119 = vshrl.u32 %v1118, 7
    %v1120 = vsub.s32 %v1117, %v1119
    %v1121 = vrot.slane %v1107, %v1120
    %v1122 = vcombine.high %v1114, %v1114
    %v1123 = vcombine.high %v1121, %v1121
    %v1124 = vcombine.high %v1104, %v1104
    %v1126 = vunpack.c.l.s4 1983009808
    %v1127 = vunpack.c.0.s8 %v1126
    %v1128 = vlaneseq
    %v1129 = vshrl.u32 %v1128, 7
    %v1130 = vsub.s32 %v1127, %v1129
    %v1131 = vrot.slane %v1104, %v1130
    %v1133 = vunpack.c.l.s4 1983009808
    %v1134 = vunpack.c.0.s8 %v1133
    %v1135 = vlaneseq
    %v1136 = vshrl.u32 %v1135, 7
    %v1137 = vsub.s32 %v1134, %v1136
    %v1138 = vrot.slane %v1124, %v1137
    %v1139 = vcombine.high %v1131, %v1131
    %1140 = vrot.lane.b32.xlu0 %v1114, 99
    %v1141 = vpop.permute.xlu0 %1140
    %1142 = vrot.lane.b32.xlu0 %v1122, 99
    %v1143 = vpop.permute.xlu0 %1142
    %1144 = vrot.lane.b32.xlu0 %v1121, 99
    %v1145 = vpop.permute.xlu0 %1144
    %1146 = vrot.lane.b32.xlu0 %v1123, 99
    %v1147 = vpop.permute.xlu0 %1146
    %1148 = vrot.lane.b32.xlu0 %v1131, 99
    %v1149 = vpop.permute.xlu0 %1148
    %1150 = vrot.lane.b32.xlu0 %v1139, 99
    %v1151 = vpop.permute.xlu0 %1150
    %1152 = vrot.lane.b32.xlu0 %v1138, 99
    %v1153 = vpop.permute.xlu0 %1152
    %v1154 = vsel %vm1007, %v1141, %v1143
    %v1155 = vsel %vm1007, %v1143, %v1145
    %v1156 = vsel %vm1007, %v1145, %v1147
    %v1157 = vsel %vm1007, %v1147, %v1149
    %v1158 = vsel %vm1007, %v1149, %v1151
    %v1159 = vsel %vm1007, %v1151, %v1153
    %v1167 = vadd.f32 %v929, %v1154
    %v1168 = vadd.f32 %v930, %v1155
    %v1169 = vadd.f32 %v931, %v1156
    %v1170 = vadd.f32 %v932, %v1157
    %v1171 = vadd.f32 %v933, %v1158
    %v1172 = vadd.f32 %v934, %v1159
    %v1173 = vadd.f32 %v935, %v1153
    %s1174 = sld [smem:[#allocation4 + $0x184]]
    %v1175 = vstv %s1174
    %v1176 = vmul.f32 %v1175, %v952
    %v1177 = vmul.f32 %v1175, %v953
    %v1180 = vcombine.high %v1176, %v1176
    %v1182 = vunpack.c.l.s4 1983009808
    %v1183 = vunpack.c.0.s8 %v1182
    %v1184 = vlaneseq
    %v1185 = vshrl.u32 %v1184, 7
    %v1186 = vsub.s32 %v1183, %v1185
    %v1187 = vrot.slane %v1176, %v1186
    %v1189 = vunpack.c.l.s4 1983009808
    %v1190 = vunpack.c.0.s8 %v1189
    %v1191 = vlaneseq
    %v1192 = vshrl.u32 %v1191, 7
    %v1193 = vsub.s32 %v1190, %v1192
    %v1194 = vrot.slane %v1180, %v1193
    %v1195 = vcombine.high %v1187, %v1187
    %v1196 = vcombine.high %v1194, %v1194
    %v1197 = vcombine.high %v1177, %v1177
    %v1199 = vunpack.c.l.s4 1983009808
    %v1200 = vunpack.c.0.s8 %v1199
    %v1201 = vlaneseq
    %v1202 = vshrl.u32 %v1201, 7
    %v1203 = vsub.s32 %v1200, %v1202
    %v1204 = vrot.slane %v1177, %v1203
    %v1206 = vunpack.c.l.s4 1983009808
    %v1207 = vunpack.c.0.s8 %v1206
    %v1208 = vlaneseq
    %v1209 = vshrl.u32 %v1208, 7
    %v1210 = vsub.s32 %v1207, %v1209
    %v1211 = vrot.slane %v1197, %v1210
    %v1212 = vcombine.high %v1204, %v1204
    %1213 = vrot.lane.b32.xlu0 %v1187, 99
    %v1214 = vpop.permute.xlu0 %1213
    %1215 = vrot.lane.b32.xlu0 %v1195, 99
    %v1216 = vpop.permute.xlu0 %1215
    %1217 = vrot.lane.b32.xlu0 %v1194, 99
    %v1218 = vpop.permute.xlu0 %1217
    %1219 = vrot.lane.b32.xlu0 %v1196, 99
    %v1220 = vpop.permute.xlu0 %1219
    %1221 = vrot.lane.b32.xlu0 %v1204, 99
    %v1222 = vpop.permute.xlu0 %1221
    %1223 = vrot.lane.b32.xlu0 %v1212, 99
    %v1224 = vpop.permute.xlu0 %1223
    %1225 = vrot.lane.b32.xlu0 %v1211, 99
    %v1226 = vpop.permute.xlu0 %1225
    %v1227 = vsel %vm1007, %v1214, %v1216
    %v1228 = vsel %vm1007, %v1216, %v1218
    %v1229 = vsel %vm1007, %v1218, %v1220
    %v1230 = vsel %vm1007, %v1220, %v1222
    %v1231 = vsel %vm1007, %v1222, %v1224
    %v1232 = vsel %vm1007, %v1224, %v1226
    %v1240 = vadd.f32 %v945, %v1227
    %v1241 = vadd.f32 %v946, %v1228
    %v1242 = vadd.f32 %v947, %v1229
    %v1243 = vadd.f32 %v948, %v1230
    %v1244 = vadd.f32 %v949, %v1231
    %v1245 = vadd.f32 %v950, %v1232
    %v1246 = vadd.f32 %v951, %v1226
    %v1247 = vld [vmem:[#allocation2] sm:$0xff]
    %v1248 = vld [vmem:[#allocation2 + $0x8] sm:$0x3f]
    %v1251 = vcombine.high %v1247, %v1247
    %v1253 = vunpack.c.l.s4 1983009808
    %v1254 = vunpack.c.0.s8 %v1253
    %v1255 = vlaneseq
    %v1256 = vshrl.u32 %v1255, 7
    %v1257 = vsub.s32 %v1254, %v1256
    %v1258 = vrot.slane %v1247, %v1257
    %v1260 = vunpack.c.l.s4 1983009808
    %v1261 = vunpack.c.0.s8 %v1260
    %v1262 = vlaneseq
    %v1263 = vshrl.u32 %v1262, 7
    %v1264 = vsub.s32 %v1261, %v1263
    %v1265 = vrot.slane %v1251, %v1264
    %v1266 = vcombine.high %v1258, %v1258
    %v1267 = vcombine.high %v1265, %v1265
    %v1268 = vcombine.high %v1248, %v1248
    %v1270 = vunpack.c.l.s4 1983009808
    %v1271 = vunpack.c.0.s8 %v1270
    %v1272 = vlaneseq
    %v1273 = vshrl.u32 %v1272, 7
    %v1274 = vsub.s32 %v1271, %v1273
    %v1275 = vrot.slane %v1248, %v1274
    %v1277 = vunpack.c.l.s4 1983009808
    %v1278 = vunpack.c.0.s8 %v1277
    %v1279 = vlaneseq
    %v1280 = vshrl.u32 %v1279, 7
    %v1281 = vsub.s32 %v1278, %v1280
    %v1282 = vrot.slane %v1268, %v1281
    %v1283 = vcombine.high %v1275, %v1275
    %1284 = vrot.lane.b32.xlu0 %v1258, 98
    %v1285 = vpop.permute.xlu0 %1284
    %1286 = vrot.lane.b32.xlu0 %v1266, 98
    %v1287 = vpop.permute.xlu0 %1286
    %1288 = vrot.lane.b32.xlu0 %v1265, 98
    %v1289 = vpop.permute.xlu0 %1288
    %1290 = vrot.lane.b32.xlu0 %v1267, 98
    %v1291 = vpop.permute.xlu0 %1290
    %1292 = vrot.lane.b32.xlu0 %v1275, 98
    %v1293 = vpop.permute.xlu0 %1292
    %1294 = vrot.lane.b32.xlu0 %v1283, 98
    %v1295 = vpop.permute.xlu0 %1294
    %1296 = vrot.lane.b32.xlu0 %v1282, 98
    %v1297 = vpop.permute.xlu0 %1296
    %vm1298 = vcmask 801792
    %v1299 = vsel %vm1298, %v1285, %v1287
    %v1300 = vsel %vm1298, %v1287, %v1289
    %v1301 = vsel %vm1298, %v1289, %v1291
    %v1302 = vsel %vm1298, %v1291, %v1293
    %v1303 = vsel %vm1298, %v1293, %v1295
    %v1304 = vsel %vm1298, %v1295, %v1297
    %v1312 = vsel %vm675, %v1299, 0.0
    %v1313 = vsel %vm676, %v1300, 0.0
    %v1314 = vsel %vm677, %v1301, 0.0
    %v1315 = vsel %vm678, %v1302, 0.0
    %v1316 = vsel %vm679, %v1303, 0.0
    %v1317 = vsel %vm680, %v1304, 0.0
    %v1318 = vsel %vm681, %v1297, 0.0
    %s1319 = sld [smem:[#allocation4 + $0x5]]
    %v1320 = vstv %s1319
    %v1321 = vmul.f32 %v1320, %v1312
    %v1322 = vmul.f32 %v1320, %v1313
    %v1323 = vmul.f32 %v1320, %v1314
    %v1324 = vmul.f32 %v1320, %v1315
    %v1325 = vmul.f32 %v1320, %v1316
    %v1326 = vmul.f32 %v1320, %v1317
    %v1327 = vmul.f32 %v1320, %v1318
    %v1328 = vadd.f32 %v1021, %v1321
    %v1329 = vadd.f32 %v1022, %v1322
    %v1330 = vadd.f32 %v1023, %v1323
    %v1331 = vadd.f32 %v1024, %v1324
    %v1332 = vadd.f32 %v1025, %v1325
    %v1333 = vadd.f32 %v1026, %v1326
    %v1334 = vadd.f32 %v1027, %v1327
    %s1335 = sld [smem:[#allocation4 + $0x85]]
    %v1336 = vstv %s1335
    %v1337 = vmul.f32 %v1336, %v1312
    %v1338 = vmul.f32 %v1336, %v1313
    %v1339 = vmul.f32 %v1336, %v1314
    %v1340 = vmul.f32 %v1336, %v1315
    %v1341 = vmul.f32 %v1336, %v1316
    %v1342 = vmul.f32 %v1336, %v1317
    %v1343 = vmul.f32 %v1336, %v1318
    %v1344 = vadd.f32 %v1094, %v1337
    %v1345 = vadd.f32 %v1095, %v1338
    %v1346 = vadd.f32 %v1096, %v1339
    %v1347 = vadd.f32 %v1097, %v1340
    %v1348 = vadd.f32 %v1098, %v1341
    %v1349 = vadd.f32 %v1099, %v1342
    %v1350 = vadd.f32 %v1100, %v1343
    %s1351 = sld [smem:[#allocation4 + $0x105]]
    %v1352 = vstv %s1351
    %v1353 = vmul.f32 %v1352, %v1312
    %v1354 = vmul.f32 %v1352, %v1313
    %v1355 = vmul.f32 %v1352, %v1314
    %v1356 = vmul.f32 %v1352, %v1315
    %v1357 = vmul.f32 %v1352, %v1316
    %v1358 = vmul.f32 %v1352, %v1317
    %v1359 = vmul.f32 %v1352, %v1318
    %v1360 = vadd.f32 %v1167, %v1353
    %v1361 = vadd.f32 %v1168, %v1354
    %v1362 = vadd.f32 %v1169, %v1355
    %v1363 = vadd.f32 %v1170, %v1356
    %v1364 = vadd.f32 %v1171, %v1357
    %v1365 = vadd.f32 %v1172, %v1358
    %v1366 = vadd.f32 %v1173, %v1359
    %s1367 = sld [smem:[#allocation4 + $0x185]]
    %v1368 = vstv %s1367
    %v1369 = vmul.f32 %v1368, %v1312
    %v1370 = vmul.f32 %v1368, %v1313
    %v1371 = vmul.f32 %v1368, %v1314
    %v1372 = vmul.f32 %v1368, %v1315
    %v1373 = vmul.f32 %v1368, %v1316
    %v1374 = vmul.f32 %v1368, %v1317
    %v1375 = vmul.f32 %v1368, %v1318
    %v1376 = vadd.f32 %v1240, %v1369
    %v1377 = vadd.f32 %v1241, %v1370
    %v1378 = vadd.f32 %v1242, %v1371
    %v1379 = vadd.f32 %v1243, %v1372
    %v1380 = vadd.f32 %v1244, %v1373
    %v1381 = vadd.f32 %v1245, %v1374
    %v1382 = vadd.f32 %v1246, %v1375
    %v1383 = vld [vmem:[#allocation2] sm:$0xff]
    %v1384 = vld [vmem:[#allocation2 + $0x8] sm:$0x3f]
    %v1387 = vcombine.high %v1383, %v1383
    %v1389 = vunpack.c.l.s4 1983009808
    %v1390 = vunpack.c.0.s8 %v1389
    %v1391 = vlaneseq
    %v1392 = vshrl.u32 %v1391, 7
    %v1393 = vsub.s32 %v1390, %v1392
    %v1394 = vrot.slane %v1383, %v1393
    %v1396 = vunpack.c.l.s4 1983009808
    %v1397 = vunpack.c.0.s8 %v1396
    %v1398 = vlaneseq
    %v1399 = vshrl.u32 %v1398, 7
    %v1400 = vsub.s32 %v1397, %v1399
    %v1401 = vrot.slane %v1387, %v1400
    %v1402 = vcombine.high %v1394, %v1394
    %v1403 = vcombine.high %v1401, %v1401
    %v1404 = vcombine.high %v1384, %v1384
    %v1406 = vunpack.c.l.s4 1983009808
    %v1407 = vunpack.c.0.s8 %v1406
    %v1408 = vlaneseq
    %v1409 = vshrl.u32 %v1408, 7
    %v1410 = vsub.s32 %v1407, %v1409
    %v1411 = vrot.slane %v1384, %v1410
    %v1413 = vunpack.c.l.s4 1983009808
    %v1414 = vunpack.c.0.s8 %v1413
    %v1415 = vlaneseq
    %v1416 = vshrl.u32 %v1415, 7
    %v1417 = vsub.s32 %v1414, %v1416
    %v1418 = vrot.slane %v1404, %v1417
    %v1419 = vcombine.high %v1411, %v1411
    %1420 = vrot.lane.b32.xlu0 %v1394, 72
    %v1421 = vpop.permute.xlu0 %1420
    %1422 = vrot.lane.b32.xlu0 %v1402, 72
    %v1423 = vpop.permute.xlu0 %1422
    %1424 = vrot.lane.b32.xlu0 %v1401, 72
    %v1425 = vpop.permute.xlu0 %1424
    %1426 = vrot.lane.b32.xlu0 %v1403, 72
    %v1427 = vpop.permute.xlu0 %1426
    %1428 = vrot.lane.b32.xlu0 %v1411, 72
    %v1429 = vpop.permute.xlu0 %1428
    %1430 = vrot.lane.b32.xlu0 %v1419, 72
    %v1431 = vpop.permute.xlu0 %1430
    %1432 = vrot.lane.b32.xlu0 %v1418, 72
    %v1433 = vpop.permute.xlu0 %1432
    %vm1434 = vcmask 588800
    %v1435 = vsel %vm1434, %v1421, %v1423
    %v1436 = vsel %vm1434, %v1423, %v1425
    %v1437 = vsel %vm1434, %v1425, %v1427
    %v1438 = vsel %vm1434, %v1427, %v1429
    %v1439 = vsel %vm1434, %v1429, %v1431
    %v1440 = vsel %vm1434, %v1431, %v1433
    %v1448 = vsel %vm251, %v1435, 0.0
    %v1449 = vsel %vm252, %v1436, 0.0
    %v1450 = vsel %vm253, %v1437, 0.0
    %v1451 = vsel %vm254, %v1438, 0.0
    %v1452 = vsel %vm255, %v1439, 0.0
    %v1453 = vsel %vm256, %v1440, 0.0
    %v1454 = vsel %vm257, %v1433, 0.0
    %s1455 = sld [smem:[#allocation4 + $0x6]]
    %v1456 = vstv %s1455
    %v1457 = vmul.f32 %v1456, %v1448
    %v1458 = vmul.f32 %v1456, %v1449
    %v1459 = vmul.f32 %v1456, %v1450
    %v1460 = vmul.f32 %v1456, %v1451
    %v1461 = vmul.f32 %v1456, %v1452
    %v1462 = vmul.f32 %v1456, %v1453
    %v1463 = vmul.f32 %v1456, %v1454
    %v1464 = vadd.f32 %v1328, %v1457
    %v1465 = vadd.f32 %v1329, %v1458
    %v1466 = vadd.f32 %v1330, %v1459
    %v1467 = vadd.f32 %v1331, %v1460
    %v1468 = vadd.f32 %v1332, %v1461
    %v1469 = vadd.f32 %v1333, %v1462
    %v1470 = vadd.f32 %v1334, %v1463
    %s1471 = sld [smem:[#allocation4 + $0x86]]
    %v1472 = vstv %s1471
    %v1473 = vmul.f32 %v1472, %v1448
    %v1474 = vmul.f32 %v1472, %v1449
    %v1475 = vmul.f32 %v1472, %v1450
    %v1476 = vmul.f32 %v1472, %v1451
    %v1477 = vmul.f32 %v1472, %v1452
    %v1478 = vmul.f32 %v1472, %v1453
    %v1479 = vmul.f32 %v1472, %v1454
    %v1480 = vadd.f32 %v1344, %v1473
    %v1481 = vadd.f32 %v1345, %v1474
    %v1482 = vadd.f32 %v1346, %v1475
    %v1483 = vadd.f32 %v1347, %v1476
    %v1484 = vadd.f32 %v1348, %v1477
    %v1485 = vadd.f32 %v1349, %v1478
    %v1486 = vadd.f32 %v1350, %v1479
    %s1487 = sld [smem:[#allocation4 + $0x106]]
    %v1488 = vstv %s1487
    %v1489 = vmul.f32 %v1488, %v1448
    %v1490 = vmul.f32 %v1488, %v1449
    %v1491 = vmul.f32 %v1488, %v1450
    %v1492 = vmul.f32 %v1488, %v1451
    %v1493 = vmul.f32 %v1488, %v1452
    %v1494 = vmul.f32 %v1488, %v1453
    %v1495 = vmul.f32 %v1488, %v1454
    %v1496 = vadd.f32 %v1360, %v1489
    %v1497 = vadd.f32 %v1361, %v1490
    %v1498 = vadd.f32 %v1362, %v1491
    %v1499 = vadd.f32 %v1363, %v1492
    %v1500 = vadd.f32 %v1364, %v1493
    %v1501 = vadd.f32 %v1365, %v1494
    %v1502 = vadd.f32 %v1366, %v1495
    %s1503 = sld [smem:[#allocation4 + $0x186]]
    %v1504 = vstv %s1503
    %v1505 = vmul.f32 %v1504, %v1448
    %v1506 = vmul.f32 %v1504, %v1449
    %v1507 = vmul.f32 %v1504, %v1450
    %v1508 = vmul.f32 %v1504, %v1451
    %v1509 = vmul.f32 %v1504, %v1452
    %v1510 = vmul.f32 %v1504, %v1453
    %v1511 = vmul.f32 %v1504, %v1454
    %v1512 = vadd.f32 %v1376, %v1505
    %v1513 = vadd.f32 %v1377, %v1506
    %v1514 = vadd.f32 %v1378, %v1507
    %v1515 = vadd.f32 %v1379, %v1508
    %v1516 = vadd.f32 %v1380, %v1509
    %v1517 = vadd.f32 %v1381, %v1510
    %v1518 = vadd.f32 %v1382, %v1511
    %v1519 = vld [vmem:[#allocation2] sm:$0xff]
    %v1520 = vld [vmem:[#allocation2 + $0x8] sm:$0x3f]
    %s1521 = sld [smem:[#allocation4 + $0x7]]
    %v1522 = vstv %s1521
    %v1523 = vmul.f32 %v1522, %v1519
    %v1524 = vmul.f32 %v1522, %v1520
    %v1527 = vcombine.high %v1523, %v1523
    %v1529 = vunpack.c.l.s4 1983009808
    %v1530 = vunpack.c.0.s8 %v1529
    %v1531 = vlaneseq
    %v1532 = vshrl.u32 %v1531, 7
    %v1533 = vsub.s32 %v1530, %v1532
    %v1534 = vrot.slane %v1523, %v1533
    %v1536 = vunpack.c.l.s4 1983009808
    %v1537 = vunpack.c.0.s8 %v1536
    %v1538 = vlaneseq
    %v1539 = vshrl.u32 %v1538, 7
    %v1540 = vsub.s32 %v1537, %v1539
    %v1541 = vrot.slane %v1527, %v1540
    %v1542 = vcombine.high %v1534, %v1534
    %v1543 = vcombine.high %v1541, %v1541
    %v1544 = vcombine.high %v1524, %v1524
    %v1546 = vunpack.c.l.s4 1983009808
    %v1547 = vunpack.c.0.s8 %v1546
    %v1548 = vlaneseq
    %v1549 = vshrl.u32 %v1548, 7
    %v1550 = vsub.s32 %v1547, %v1549
    %v1551 = vrot.slane %v1524, %v1550
    %v1553 = vunpack.c.l.s4 1983009808
    %v1554 = vunpack.c.0.s8 %v1553
    %v1555 = vlaneseq
    %v1556 = vshrl.u32 %v1555, 7
    %v1557 = vsub.s32 %v1554, %v1556
    %v1558 = vrot.slane %v1544, %v1557
    %v1559 = vcombine.high %v1551, %v1551
    %1560 = vrot.lane.b32.xlu0 %v1534, 71
    %v1561 = vpop.permute.xlu0 %1560
    %1562 = vrot.lane.b32.xlu0 %v1542, 71
    %v1563 = vpop.permute.xlu0 %1562
    %1564 = vrot.lane.b32.xlu0 %v1541, 71
    %v1565 = vpop.permute.xlu0 %1564
    %1566 = vrot.lane.b32.xlu0 %v1543, 71
    %v1567 = vpop.permute.xlu0 %1566
    %1568 = vrot.lane.b32.xlu0 %v1551, 71
    %v1569 = vpop.permute.xlu0 %1568
    %1570 = vrot.lane.b32.xlu0 %v1559, 71
    %v1571 = vpop.permute.xlu0 %1570
    %1572 = vrot.lane.b32.xlu0 %v1558, 71
    %v1573 = vpop.permute.xlu0 %1572
    %vm1574 = vcmask 580608
    %v1575 = vsel %vm1574, %v1561, %v1563
    %v1576 = vsel %vm1574, %v1563, %v1565
    %v1577 = vsel %vm1574, %v1565, %v1567
    %v1578 = vsel %vm1574, %v1567, %v1569
    %v1579 = vsel %vm1574, %v1569, %v1571
    %v1580 = vsel %vm1574, %v1571, %v1573
    %v1588 = vadd.f32 %v1464, %v1575
    %v1589 = vadd.f32 %v1465, %v1576
    %v1590 = vadd.f32 %v1466, %v1577
    %v1591 = vadd.f32 %v1467, %v1578
    %v1592 = vadd.f32 %v1468, %v1579
    %v1593 = vadd.f32 %v1469, %v1580
    %v1594 = vadd.f32 %v1470, %v1573
    %s1595 = sld [smem:[#allocation4 + $0x87]]
    %v1596 = vstv %s1595
    %v1597 = vmul.f32 %v1596, %v1519
    %v1598 = vmul.f32 %v1596, %v1520
    %v1601 = vcombine.high %v1597, %v1597
    %v1603 = vunpack.c.l.s4 1983009808
    %v1604 = vunpack.c.0.s8 %v1603
    %v1605 = vlaneseq
    %v1606 = vshrl.u32 %v1605, 7
    %v1607 = vsub.s32 %v1604, %v1606
    %v1608 = vrot.slane %v1597, %v1607
    %v1610 = vunpack.c.l.s4 1983009808
    %v1611 = vunpack.c.0.s8 %v1610
    %v1612 = vlaneseq
    %v1613 = vshrl.u32 %v1612, 7
    %v1614 = vsub.s32 %v1611, %v1613
    %v1615 = vrot.slane %v1601, %v1614
    %v1616 = vcombine.high %v1608, %v1608
    %v1617 = vcombine.high %v1615, %v1615
    %v1618 = vcombine.high %v1598, %v1598
    %v1620 = vunpack.c.l.s4 1983009808
    %v1621 = vunpack.c.0.s8 %v1620
    %v1622 = vlaneseq
    %v1623 = vshrl.u32 %v1622, 7
    %v1624 = vsub.s32 %v1621, %v1623
    %v1625 = vrot.slane %v1598, %v1624
    %v1627 = vunpack.c.l.s4 1983009808
    %v1628 = vunpack.c.0.s8 %v1627
    %v1629 = vlaneseq
    %v1630 = vshrl.u32 %v1629, 7
    %v1631 = vsub.s32 %v1628, %v1630
    %v1632 = vrot.slane %v1618, %v1631
    %v1633 = vcombine.high %v1625, %v1625
    %1634 = vrot.lane.b32.xlu0 %v1608, 71
    %v1635 = vpop.permute.xlu0 %1634
    %1636 = vrot.lane.b32.xlu0 %v1616, 71
    %v1637 = vpop.permute.xlu0 %1636
    %1638 = vrot.lane.b32.xlu0 %v1615, 71
    %v1639 = vpop.permute.xlu0 %1638
    %1640 = vrot.lane.b32.xlu0 %v1617, 71
    %v1641 = vpop.permute.xlu0 %1640
    %1642 = vrot.lane.b32.xlu0 %v1625, 71
    %v1643 = vpop.permute.xlu0 %1642
    %1644 = vrot.lane.b32.xlu0 %v1633, 71
    %v1645 = vpop.permute.xlu0 %1644
    %1646 = vrot.lane.b32.xlu0 %v1632, 71
    %v1647 = vpop.permute.xlu0 %1646
    %v1648 = vsel %vm1574, %v1635, %v1637
    %v1649 = vsel %vm1574, %v1637, %v1639
    %v1650 = vsel %vm1574, %v1639, %v1641
    %v1651 = vsel %vm1574, %v1641, %v1643
    %v1652 = vsel %vm1574, %v1643, %v1645
    %v1653 = vsel %vm1574, %v1645, %v1647
    %v1661 = vadd.f32 %v1480, %v1648
    %v1662 = vadd.f32 %v1481, %v1649
    %v1663 = vadd.f32 %v1482, %v1650
    %v1664 = vadd.f32 %v1483, %v1651
    %v1665 = vadd.f32 %v1484, %v1652
    %v1666 = vadd.f32 %v1485, %v1653
    %v1667 = vadd.f32 %v1486, %v1647
    %s1668 = sld [smem:[#allocation4 + $0x107]]
    %v1669 = vstv %s1668
    %v1670 = vmul.f32 %v1669, %v1519
    %v1671 = vmul.f32 %v1669, %v1520
    %v1674 = vcombine.high %v1670, %v1670
    %v1676 = vunpack.c.l.s4 1983009808
    %v1677 = vunpack.c.0.s8 %v1676
    %v1678 = vlaneseq
    %v1679 = vshrl.u32 %v1678, 7
    %v1680 = vsub.s32 %v1677, %v1679
    %v1681 = vrot.slane %v1670, %v1680
    %v1683 = vunpack.c.l.s4 1983009808
    %v1684 = vunpack.c.0.s8 %v1683
    %v1685 = vlaneseq
    %v1686 = vshrl.u32 %v1685, 7
    %v1687 = vsub.s32 %v1684, %v1686
    %v1688 = vrot.slane %v1674, %v1687
    %v1689 = vcombine.high %v1681, %v1681
    %v1690 = vcombine.high %v1688, %v1688
    %v1691 = vcombine.high %v1671, %v1671
    %v1693 = vunpack.c.l.s4 1983009808
    %v1694 = vunpack.c.0.s8 %v1693
    %v1695 = vlaneseq
    %v1696 = vshrl.u32 %v1695, 7
    %v1697 = vsub.s32 %v1694, %v1696
    %v1698 = vrot.slane %v1671, %v1697
    %v1700 = vunpack.c.l.s4 1983009808
    %v1701 = vunpack.c.0.s8 %v1700
    %v1702 = vlaneseq
    %v1703 = vshrl.u32 %v1702, 7
    %v1704 = vsub.s32 %v1701, %v1703
    %v1705 = vrot.slane %v1691, %v1704
    %v1706 = vcombine.high %v1698, %v1698
    %1707 = vrot.lane.b32.xlu0 %v1681, 71
    %v1708 = vpop.permute.xlu0 %1707
    %1709 = vrot.lane.b32.xlu0 %v1689, 71
    %v1710 = vpop.permute.xlu0 %1709
    %1711 = vrot.lane.b32.xlu0 %v1688, 71
    %v1712 = vpop.permute.xlu0 %1711
    %1713 = vrot.lane.b32.xlu0 %v1690, 71
    %v1714 = vpop.permute.xlu0 %1713
    %1715 = vrot.lane.b32.xlu0 %v1698, 71
    %v1716 = vpop.permute.xlu0 %1715
    %1717 = vrot.lane.b32.xlu0 %v1706, 71
    %v1718 = vpop.permute.xlu0 %1717
    %1719 = vrot.lane.b32.xlu0 %v1705, 71
    %v1720 = vpop.permute.xlu0 %1719
    %v1721 = vsel %vm1574, %v1708, %v1710
    %v1722 = vsel %vm1574, %v1710, %v1712
    %v1723 = vsel %vm1574, %v1712, %v1714
    %v1724 = vsel %vm1574, %v1714, %v1716
    %v1725 = vsel %vm1574, %v1716, %v1718
    %v1726 = vsel %vm1574, %v1718, %v1720
    %v1734 = vadd.f32 %v1496, %v1721
    %v1735 = vadd.f32 %v1497, %v1722
    %v1736 = vadd.f32 %v1498, %v1723
    %v1737 = vadd.f32 %v1499, %v1724
    %v1738 = vadd.f32 %v1500, %v1725
    %v1739 = vadd.f32 %v1501, %v1726
    %v1740 = vadd.f32 %v1502, %v1720
    %s1741 = sld [smem:[#allocation4 + $0x187]]
    %v1742 = vstv %s1741
    %v1743 = vmul.f32 %v1742, %v1519
    %v1744 = vmul.f32 %v1742, %v1520
    %v1747 = vcombine.high %v1743, %v1743
    %v1749 = vunpack.c.l.s4 1983009808
    %v1750 = vunpack.c.0.s8 %v1749
    %v1751 = vlaneseq
    %v1752 = vshrl.u32 %v1751, 7
    %v1753 = vsub.s32 %v1750, %v1752
    %v1754 = vrot.slane %v1743, %v1753
    %v1756 = vunpack.c.l.s4 1983009808
    %v1757 = vunpack.c.0.s8 %v1756
    %v1758 = vlaneseq
    %v1759 = vshrl.u32 %v1758, 7
    %v1760 = vsub.s32 %v1757, %v1759
    %v1761 = vrot.slane %v1747, %v1760
    %v1762 = vcombine.high %v1754, %v1754
    %v1763 = vcombine.high %v1761, %v1761
    %v1764 = vcombine.high %v1744, %v1744
    %v1766 = vunpack.c.l.s4 1983009808
    %v1767 = vunpack.c.0.s8 %v1766
    %v1768 = vlaneseq
    %v1769 = vshrl.u32 %v1768, 7
    %v1770 = vsub.s32 %v1767, %v1769
    %v1771 = vrot.slane %v1744, %v1770
    %v1773 = vunpack.c.l.s4 1983009808
    %v1774 = vunpack.c.0.s8 %v1773
    %v1775 = vlaneseq
    %v1776 = vshrl.u32 %v1775, 7
    %v1777 = vsub.s32 %v1774, %v1776
    %v1778 = vrot.slane %v1764, %v1777
    %v1779 = vcombine.high %v1771, %v1771
    %1780 = vrot.lane.b32.xlu0 %v1754, 71
    %v1781 = vpop.permute.xlu0 %1780
    %1782 = vrot.lane.b32.xlu0 %v1762, 71
    %v1783 = vpop.permute.xlu0 %1782
    %1784 = vrot.lane.b32.xlu0 %v1761, 71
    %v1785 = vpop.permute.xlu0 %1784
    %1786 = vrot.lane.b32.xlu0 %v1763, 71
    %v1787 = vpop.permute.xlu0 %1786
    %1788 = vrot.lane.b32.xlu0 %v1771, 71
    %v1789 = vpop.permute.xlu0 %1788
    %1790 = vrot.lane.b32.xlu0 %v1779, 71
    %v1791 = vpop.permute.xlu0 %1790
    %1792 = vrot.lane.b32.xlu0 %v1778, 71
    %v1793 = vpop.permute.xlu0 %1792
    %v1794 = vsel %vm1574, %v1781, %v1783
    %v1795 = vsel %vm1574, %v1783, %v1785
    %v1796 = vsel %vm1574, %v1785, %v1787
    %v1797 = vsel %vm1574, %v1787, %v1789
    %v1798 = vsel %vm1574, %v1789, %v1791
    %v1799 = vsel %vm1574, %v1791, %v1793
    %v1807 = vadd.f32 %v1512, %v1794
    %v1808 = vadd.f32 %v1513, %v1795
    %v1809 = vadd.f32 %v1514, %v1796
    %v1810 = vadd.f32 %v1515, %v1797
    %v1811 = vadd.f32 %v1516, %v1798
    %v1812 = vadd.f32 %v1517, %v1799
    %v1813 = vadd.f32 %v1518, %v1793
    %v1814 = vld [vmem:[#allocation2] sm:$0xff]
    %v1815 = vld [vmem:[#allocation2 + $0x8] sm:$0x3f]
    %v1818 = vcombine.high %v1814, %v1814
    %v1820 = vunpack.c.l.s4 1983009808
    %v1821 = vunpack.c.0.s8 %v1820
    %v1822 = vlaneseq
    %v1823 = vshrl.u32 %v1822, 7
    %v1824 = vsub.s32 %v1821, %v1823
    %v1825 = vrot.slane %v1814, %v1824
    %v1827 = vunpack.c.l.s4 1983009808
    %v1828 = vunpack.c.0.s8 %v1827
    %v1829 = vlaneseq
    %v1830 = vshrl.u32 %v1829, 7
    %v1831 = vsub.s32 %v1828, %v1830
    %v1832 = vrot.slane %v1818, %v1831
    %v1833 = vcombine.high %v1825, %v1825
    %v1834 = vcombine.high %v1832, %v1832
    %v1835 = vcombine.high %v1815, %v1815
    %v1837 = vunpack.c.l.s4 1983009808
    %v1838 = vunpack.c.0.s8 %v1837
    %v1839 = vlaneseq
    %v1840 = vshrl.u32 %v1839, 7
    %v1841 = vsub.s32 %v1838, %v1840
    %v1842 = vrot.slane %v1815, %v1841
    %v1844 = vunpack.c.l.s4 1983009808
    %v1845 = vunpack.c.0.s8 %v1844
    %v1846 = vlaneseq
    %v1847 = vshrl.u32 %v1846, 7
    %v1848 = vsub.s32 %v1845, %v1847
    %v1849 = vrot.slane %v1835, %v1848
    %v1850 = vcombine.high %v1842, %v1842
    %1851 = vrot.lane.b32.xlu0 %v1825, 70
    %v1852 = vpop.permute.xlu0 %1851
    %1853 = vrot.lane.b32.xlu0 %v1833, 70
    %v1854 = vpop.permute.xlu0 %1853
    %1855 = vrot.lane.b32.xlu0 %v1832, 70
    %v1856 = vpop.permute.xlu0 %1855
    %1857 = vrot.lane.b32.xlu0 %v1834, 70
    %v1858 = vpop.permute.xlu0 %1857
    %1859 = vrot.lane.b32.xlu0 %v1842, 70
    %v1860 = vpop.permute.xlu0 %1859
    %1861 = vrot.lane.b32.xlu0 %v1850, 70
    %v1862 = vpop.permute.xlu0 %1861
    %1863 = vrot.lane.b32.xlu0 %v1849, 70
    %v1864 = vpop.permute.xlu0 %1863
    %vm1865 = vcmask 572416
    %v1866 = vsel %vm1865, %v1852, %v1854
    %v1867 = vsel %vm1865, %v1854, %v1856
    %v1868 = vsel %vm1865, %v1856, %v1858
    %v1869 = vsel %vm1865, %v1858, %v1860
    %v1870 = vsel %vm1865, %v1860, %v1862
    %v1871 = vsel %vm1865, %v1862, %v1864
    %v1879 = vsel %vm675, %v1866, 0.0
    %v1880 = vsel %vm676, %v1867, 0.0
    %v1881 = vsel %vm677, %v1868, 0.0
    %v1882 = vsel %vm678, %v1869, 0.0
    %v1883 = vsel %vm679, %v1870, 0.0
    %v1884 = vsel %vm680, %v1871, 0.0
    %v1885 = vsel %vm681, %v1864, 0.0
    %s1886 = sld [smem:[#allocation4 + $0x8]]
    %v1887 = vstv %s1886
    %v1888 = vmul.f32 %v1887, %v1879
    %v1889 = vmul.f32 %v1887, %v1880
    %v1890 = vmul.f32 %v1887, %v1881
    %v1891 = vmul.f32 %v1887, %v1882
    %v1892 = vmul.f32 %v1887, %v1883
    %v1893 = vmul.f32 %v1887, %v1884
    %v1894 = vmul.f32 %v1887, %v1885
    %v1895 = vadd.f32 %v1588, %v1888
    %v1896 = vadd.f32 %v1589, %v1889
    %v1897 = vadd.f32 %v1590, %v1890
    %v1898 = vadd.f32 %v1591, %v1891
    %v1899 = vadd.f32 %v1592, %v1892
    %v1900 = vadd.f32 %v1593, %v1893
    %v1901 = vadd.f32 %v1594, %v1894
    %s1902 = sld [smem:[#allocation4 + $0x88]]
    %v1903 = vstv %s1902
    %v1904 = vmul.f32 %v1903, %v1879
    %v1905 = vmul.f32 %v1903, %v1880
    %v1906 = vmul.f32 %v1903, %v1881
    %v1907 = vmul.f32 %v1903, %v1882
    %v1908 = vmul.f32 %v1903, %v1883
    %v1909 = vmul.f32 %v1903, %v1884
    %v1910 = vmul.f32 %v1903, %v1885
    %v1911 = vadd.f32 %v1661, %v1904
    %v1912 = vadd.f32 %v1662, %v1905
    %v1913 = vadd.f32 %v1663, %v1906
    %v1914 = vadd.f32 %v1664, %v1907
    %v1915 = vadd.f32 %v1665, %v1908
    %v1916 = vadd.f32 %v1666, %v1909
    %v1917 = vadd.f32 %v1667, %v1910
    %s1918 = sld [smem:[#allocation4 + $0x108]]
    %v1919 = vstv %s1918
    %v1920 = vmul.f32 %v1919, %v1879
    %v1921 = vmul.f32 %v1919, %v1880
    %v1922 = vmul.f32 %v1919, %v1881
    %v1923 = vmul.f32 %v1919, %v1882
    %v1924 = vmul.f32 %v1919, %v1883
    %v1925 = vmul.f32 %v1919, %v1884
    %v1926 = vmul.f32 %v1919, %v1885
    %v1927 = vadd.f32 %v1734, %v1920
    %v1928 = vadd.f32 %v1735, %v1921
    %v1929 = vadd.f32 %v1736, %v1922
    %v1930 = vadd.f32 %v1737, %v1923
    %v1931 = vadd.f32 %v1738, %v1924
    %v1932 = vadd.f32 %v1739, %v1925
    %v1933 = vadd.f32 %v1740, %v1926
    %s1934 = sld [smem:[#allocation4 + $0x188]]
    %v1935 = vstv %s1934
    %v1936 = vmul.f32 %v1935, %v1879
    %v1937 = vmul.f32 %v1935, %v1880
    %v1938 = vmul.f32 %v1935, %v1881
    %v1939 = vmul.f32 %v1935, %v1882
    %v1940 = vmul.f32 %v1935, %v1883
    %v1941 = vmul.f32 %v1935, %v1884
    %v1942 = vmul.f32 %v1935, %v1885
    %v1943 = vadd.f32 %v1807, %v1936
    %v1944 = vadd.f32 %v1808, %v1937
    %v1945 = vadd.f32 %v1809, %v1938
    %v1946 = vadd.f32 %v1810, %v1939
    %v1947 = vadd.f32 %v1811, %v1940
    %v1948 = vadd.f32 %v1812, %v1941
    %v1949 = vadd.f32 %v1813, %v1942
    %v1950 = vld [vmem:[%s4] sm:$0x1]
    %v1952 = vlaneseq
    %v1953 = vshrl.u32 %v1952, 7
    %v1954 = vsub.s32 0, %v1953
    %v1955 = vrot.slane %v1950, %v1954
    %v1957 = vadd.f32 %v1955, 0.0
    %s1958 = sld [smem:[#allocation7]]
    %v1959 = vstv %s1958
    %v1960 = vadd.f32 %v1895, %v1959
    %v1961 = vadd.f32 %v1896, %v1959
    %v1962 = vadd.f32 %v1897, %v1959
    %v1963 = vadd.f32 %v1898, %v1959
    %v1964 = vadd.f32 %v1899, %v1959
    %v1965 = vadd.f32 %v1900, %v1959
    %v1966 = vadd.f32 %v1901, %v1959
    %v1974 = vcombine.low %v1960, %v1961
    %v1975 = vcombine.low %v1962, %v1963
    %v1977 = vunpack.c.l.s4 1983009808
    %v1978 = vunpack.c.0.s8 %v1977
    %v1979 = vlaneseq
    %v1980 = vshrl.u32 %v1979, 7
    %v1981 = vsub.s32 %v1978, %v1980
    %v1982 = vrot.slane %v1974, %v1981
    %v1984 = vunpack.c.l.s4 1983009808
    %v1985 = vunpack.c.0.s8 %v1984
    %v1986 = vlaneseq
    %v1987 = vshrl.u32 %v1986, 7
    %v1988 = vsub.s32 %v1985, %v1987
    %v1989 = vrot.slane %v1975, %v1988
    %v1990 = vcombine.low %v1982, %v1989
    %v1991 = vcombine.low %v1964, %v1965
    %v1993 = vunpack.c.l.s4 1983009808
    %v1994 = vunpack.c.0.s8 %v1993
    %v1995 = vlaneseq
    %v1996 = vshrl.u32 %v1995, 7
    %v1997 = vsub.s32 %v1994, %v1996
    %v1998 = vrot.slane %v1991, %v1997
    %v2000 = vunpack.c.l.s4 1983009808
    %v2001 = vunpack.c.0.s8 %v2000
    %v2002 = vlaneseq
    %v2003 = vshrl.u32 %v2002, 7
    %v2004 = vsub.s32 %v2001, %v2003
    %v2005 = vrot.slane %v1966, %v2004
    %v2006 = vcombine.low %v1998, %v2005
    %2009 = vst [vmem:[#allocation3] sm:$0xff] %v1990
    %vm2010 = vcmask 128004
    %vm2011 = vmor %vm2010, %vm81
    %2012 = vst.msk [vmem:[#allocation3 + $0x8] sm:$0x3f] %vm2011, %v2006
    %v2013 = vld [vmem:[#allocation3] sm:$0xff]
    %v2014 = vld [vmem:[#allocation3 + $0x8] sm:$0x3f]
    %v2017 = vcombine.high %v2013, %v2013
    %v2019 = vunpack.c.l.s4 1983009808
    %v2020 = vunpack.c.0.s8 %v2019
    %v2021 = vlaneseq
    %v2022 = vshrl.u32 %v2021, 7
    %v2023 = vsub.s32 %v2020, %v2022
    %v2024 = vrot.slane %v2013, %v2023
    %v2026 = vunpack.c.l.s4 1983009808
    %v2027 = vunpack.c.0.s8 %v2026
    %v2028 = vlaneseq
    %v2029 = vshrl.u32 %v2028, 7
    %v2030 = vsub.s32 %v2027, %v2029
    %v2031 = vrot.slane %v2017, %v2030
    %v2032 = vcombine.high %v2024, %v2024
    %v2033 = vcombine.high %v2031, %v2031
    %v2034 = vcombine.high %v2014, %v2014
    %v2036 = vunpack.c.l.s4 1983009808
    %v2037 = vunpack.c.0.s8 %v2036
    %v2038 = vlaneseq
    %v2039 = vshrl.u32 %v2038, 7
    %v2040 = vsub.s32 %v2037, %v2039
    %v2041 = vrot.slane %v2014, %v2040
    %v2043 = vunpack.c.l.s4 1983009808
    %v2044 = vunpack.c.0.s8 %v2043
    %v2045 = vlaneseq
    %v2046 = vshrl.u32 %v2045, 7
    %v2047 = vsub.s32 %v2044, %v2046
    %v2048 = vrot.slane %v2034, %v2047
    %v2049 = vcombine.high %v2041, %v2041
    %2050 = vrot.lane.b32.xlu0 %v2024, 127
    %v2051 = vpop.permute.xlu0 %2050
    %2052 = vrot.lane.b32.xlu0 %v2032, 127
    %v2053 = vpop.permute.xlu0 %2052
    %2054 = vrot.lane.b32.xlu0 %v2031, 127
    %v2055 = vpop.permute.xlu0 %2054
    %2056 = vrot.lane.b32.xlu0 %v2033, 127
    %v2057 = vpop.permute.xlu0 %2056
    %2058 = vrot.lane.b32.xlu0 %v2041, 127
    %v2059 = vpop.permute.xlu0 %2058
    %2060 = vrot.lane.b32.xlu0 %v2049, 127
    %v2061 = vpop.permute.xlu0 %2060
    %2062 = vrot.lane.b32.xlu0 %v2048, 127
    %v2063 = vpop.permute.xlu0 %2062
    %v2064 = vsel %vm426, %v2051, %v2053
    %v2065 = vsel %vm426, %v2053, %v2055
    %v2066 = vsel %vm426, %v2055, %v2057
    %v2067 = vsel %vm426, %v2057, %v2059
    %v2068 = vsel %vm426, %v2059, %v2061
    %v2069 = vsel %vm426, %v2061, %v2063
    %v2077 = vmax.f32 %v1960, %v2064
    %v2078 = vmax.f32 %v1961, %v2065
    %v2079 = vmax.f32 %v1962, %v2066
    %v2080 = vmax.f32 %v1963, %v2067
    %v2081 = vmax.f32 %v1964, %v2068
    %v2082 = vmax.f32 %v1965, %v2069
    %v2083 = vmax.f32 %v1966, %v2063
    %2084 = vrot.lane.b32.xlu0 %v2013, 127
    %v2085 = vpop.permute.xlu0 %2084
    %2086 = vrot.lane.b32.xlu0 %v2014, 127
    %v2087 = vpop.permute.xlu0 %2086
    %v2088 = vrot.slane %v2085, 2
    %v2089 = vrot.slane %v2087, 2
    %vm2090 = vcmask 1045504
    %v2091 = vsel %vm2090, %v2088, %v2089
    %v2092 = vsel %vm426, %v2085, %v2091
    %v2093 = vsel %vm426, %v2087, %v2089
    %v2096 = vmax.f32 %v2013, %v2092
    %v2097 = vmax.f32 %v2014, %v2093
    %v2100 = vcombine.high %v2096, %v2096
    %v2102 = vunpack.c.l.s4 1983009808
    %v2103 = vunpack.c.0.s8 %v2102
    %v2104 = vlaneseq
    %v2105 = vshrl.u32 %v2104, 7
    %v2106 = vsub.s32 %v2103, %v2105
    %v2107 = vrot.slane %v2096, %v2106
    %v2109 = vunpack.c.l.s4 1983009808
    %v2110 = vunpack.c.0.s8 %v2109
    %v2111 = vlaneseq
    %v2112 = vshrl.u32 %v2111, 7
    %v2113 = vsub.s32 %v2110, %v2112
    %v2114 = vrot.slane %v2100, %v2113
    %v2115 = vcombine.high %v2107, %v2107
    %v2116 = vcombine.high %v2114, %v2114
    %v2117 = vcombine.high %v2097, %v2097
    %v2119 = vunpack.c.l.s4 1983009808
    %v2120 = vunpack.c.0.s8 %v2119
    %v2121 = vlaneseq
    %v2122 = vshrl.u32 %v2121, 7
    %v2123 = vsub.s32 %v2120, %v2122
    %v2124 = vrot.slane %v2097, %v2123
    %v2126 = vunpack.c.l.s4 1983009808
    %v2127 = vunpack.c.0.s8 %v2126
    %v2128 = vlaneseq
    %v2129 = vshrl.u32 %v2128, 7
    %v2130 = vsub.s32 %v2127, %v2129
    %v2131 = vrot.slane %v2117, %v2130
    %v2132 = vcombine.high %v2124, %v2124
    %2133 = vrot.lane.b32.xlu0 %v2107, 100
    %v2134 = vpop.permute.xlu0 %2133
    %2135 = vrot.lane.b32.xlu0 %v2115, 100
    %v2136 = vpop.permute.xlu0 %2135
    %2137 = vrot.lane.b32.xlu0 %v2114, 100
    %v2138 = vpop.permute.xlu0 %2137
    %2139 = vrot.lane.b32.xlu0 %v2116, 100
    %v2140 = vpop.permute.xlu0 %2139
    %2141 = vrot.lane.b32.xlu0 %v2124, 100
    %v2142 = vpop.permute.xlu0 %2141
    %2143 = vrot.lane.b32.xlu0 %v2132, 100
    %v2144 = vpop.permute.xlu0 %2143
    %2145 = vrot.lane.b32.xlu0 %v2131, 100
    %v2146 = vpop.permute.xlu0 %2145
    %v2147 = vsel %vm867, %v2134, %v2136
    %v2148 = vsel %vm867, %v2136, %v2138
    %v2149 = vsel %vm867, %v2138, %v2140
    %v2150 = vsel %vm867, %v2140, %v2142
    %v2151 = vsel %vm867, %v2142, %v2144
    %v2152 = vsel %vm867, %v2144, %v2146
    %v2160 = vmax.f32 %v2077, %v2147
    %v2161 = vmax.f32 %v2078, %v2148
    %v2162 = vmax.f32 %v2079, %v2149
    %v2163 = vmax.f32 %v2080, %v2150
    %v2164 = vmax.f32 %v2081, %v2151
    %v2165 = vmax.f32 %v2082, %v2152
    %v2166 = vmax.f32 %v2083, %v2146
    %v2167 = vld [vmem:[%s3] sm:$0xff]
    %v2168 = vld [vmem:[%s3 + $0x8] sm:$0xff]
    %v2169 = vld [vmem:[%s3 + $0x10] sm:$0xff]
    %v2170 = vld [vmem:[%s3 + $0x18] sm:$0xff]
    %v2171 = vld [vmem:[%s3 + $0x20] sm:$0xff]
    %v2172 = vld [vmem:[%s3 + $0x28] sm:$0xff]
    %v2173 = vld [vmem:[%s3 + $0x30] sm:$0xff]
    %v2174 = vld [vmem:[%s3 + $0x38] sm:$0xff]
    %v2175 = vld [vmem:[%s3 + $0x40] sm:$0xff]
    %v2176 = vld [vmem:[%s3 + $0x48] sm:$0xff]
    %v2177 = vld [vmem:[%s3 + $0x50] sm:$0xff]
    %v2178 = vld [vmem:[%s3 + $0x58] sm:$0xff]
    %v2179 = vld [vmem:[%s3 + $0x60] sm:$0xff]
    %v2180 = vld [vmem:[%s3 + $0x68] sm:$0xff]
    %v2181 = vld [vmem:[%s3 + $0x70] sm:$0xff]
    %v2182 = vld [vmem:[%s3 + $0x78] sm:$0xff]
    %v2183 = vld [vmem:[%s3 + $0x80] sm:$0xff]
    %v2184 = vld [vmem:[%s3 + $0x88] sm:$0xff]
    %v2185 = vld [vmem:[%s3 + $0x90] sm:$0xff]
    %v2186 = vld [vmem:[%s3 + $0x98] sm:$0xff]
    %v2187 = vld [vmem:[%s3 + $0xa0] sm:$0xff]
    %v2188 = vld [vmem:[%s3 + $0xa8] sm:$0xff]
    %v2189 = vld [vmem:[%s3 + $0xb0] sm:$0xff]
    %v2190 = vld [vmem:[%s3 + $0xb8] sm:$0xff]
    %v2191 = vld [vmem:[%s3 + $0xc0] sm:$0xff]
    %v2192 = vld [vmem:[%s3 + $0xc8] sm:$0xff]
    %v2193 = vld [vmem:[%s3 + $0xd0] sm:$0xff]
    %v2194 = vld [vmem:[%s3 + $0xd8] sm:$0xff]
    %v2195 = vld [vmem:[%s3 + $0xe0] sm:$0xff]
    %v2196 = vld [vmem:[%s3 + $0xe8] sm:$0xff]
    %v2197 = vld [vmem:[%s3 + $0xf0] sm:$0xff]
    %v2198 = vld [vmem:[%s3 + $0xf8] sm:$0xff]
    %v2199 = vld [vmem:[%s3 + $0x100] sm:$0xff]
    %v2200 = vld [vmem:[%s3 + $0x108] sm:$0xff]
    %v2201 = vld [vmem:[%s3 + $0x110] sm:$0xff]
    %v2202 = vld [vmem:[%s3 + $0x118] sm:$0xff]
    %v2203 = vld [vmem:[%s3 + $0x120] sm:$0xff]
    %v2204 = vld [vmem:[%s3 + $0x128] sm:$0xff]
    %v2205 = vld [vmem:[%s3 + $0x130] sm:$0xff]
    %v2206 = vld [vmem:[%s3 + $0x138] sm:$0xff]
    %v2207 = vld [vmem:[%s3 + $0x140] sm:$0xff]
    %v2208 = vld [vmem:[%s3 + $0x148] sm:$0xff]
    %v2209 = vld [vmem:[%s3 + $0x150] sm:$0xff]
    %v2210 = vld [vmem:[%s3 + $0x158] sm:$0xff]
    %v2211 = vld [vmem:[%s3 + $0x160] sm:$0xff]
    %v2212 = vld [vmem:[%s3 + $0x168] sm:$0xff]
    %v2213 = vld [vmem:[%s3 + $0x170] sm:$0xff]
    %v2214 = vld [vmem:[%s3 + $0x178] sm:$0xff]
    %v2215 = vld [vmem:[%s3 + $0x180] sm:$0xff]
    %v2216 = vld [vmem:[%s3 + $0x188] sm:$0xff]
    %v2217 = vld [vmem:[%s3 + $0x190] sm:$0xff]
    %v2218 = vld [vmem:[%s3 + $0x198] sm:$0xff]
    %v2219 = vld [vmem:[%s3 + $0x1a0] sm:$0xff]
    %v2220 = vld [vmem:[%s3 + $0x1a8] sm:$0xff]
    %v2221 = vld [vmem:[%s3 + $0x1b0] sm:$0xff]
    %v2222 = vld [vmem:[%s3 + $0x1b8] sm:$0xff]
    %v2223 = vld [vmem:[%s3 + $0x1c0] sm:$0xff]
    %v2224 = vld [vmem:[%s3 + $0x1c8] sm:$0xff]
    %v2225 = vld [vmem:[%s3 + $0x1d0] sm:$0xff]
    %v2226 = vld [vmem:[%s3 + $0x1d8] sm:$0xff]
    %v2227 = vld [vmem:[%s3 + $0x1e0] sm:$0xff]
    %v2228 = vld [vmem:[%s3 + $0x1e8] sm:$0xff]
    %v2229 = vld [vmem:[%s3 + $0x1f0] sm:$0xff]
    %v2230 = vld [vmem:[%s3 + $0x1f8] sm:$0xff]
    %v2231 = vld [vmem:[%s3 + $0x200] sm:$0xff]
    %v2232 = vld [vmem:[%s3 + $0x208] sm:$0xff]
    %v2233 = vld [vmem:[%s3 + $0x210] sm:$0xff]
    %v2234 = vld [vmem:[%s3 + $0x218] sm:$0xff]
    %v2235 = vld [vmem:[%s3 + $0x220] sm:$0xff]
    %v2236 = vld [vmem:[%s3 + $0x228] sm:$0xff]
    %v2237 = vld [vmem:[%s3 + $0x230] sm:$0xff]
    %v2238 = vld [vmem:[%s3 + $0x238] sm:$0xff]
    %v2239 = vld [vmem:[%s3 + $0x240] sm:$0xff]
    %v2240 = vld [vmem:[%s3 + $0x248] sm:$0xff]
    %v2241 = vld [vmem:[%s3 + $0x250] sm:$0xff]
    %v2242 = vld [vmem:[%s3 + $0x258] sm:$0xff]
    %v2243 = vld [vmem:[%s3 + $0x260] sm:$0xff]
    %v2244 = vld [vmem:[%s3 + $0x268] sm:$0xff]
    %v2245 = vld [vmem:[%s3 + $0x270] sm:$0xff]
    %v2246 = vld [vmem:[%s3 + $0x278] sm:$0xff]
    %v2247 = vld [vmem:[%s3 + $0x280] sm:$0xff]
    %v2248 = vld [vmem:[%s3 + $0x288] sm:$0xff]
    %v2249 = vld [vmem:[%s3 + $0x290] sm:$0xff]
    %v2250 = vld [vmem:[%s3 + $0x298] sm:$0xff]
    %v2251 = vld [vmem:[%s3 + $0x2a0] sm:$0xff]
    %v2252 = vld [vmem:[%s3 + $0x2a8] sm:$0xff]
    %v2253 = vld [vmem:[%s3 + $0x2b0] sm:$0xff]
    %v2254 = vld [vmem:[%s3 + $0x2b8] sm:$0xff]
    %v2255 = vld [vmem:[%s3 + $0x2c0] sm:$0xff]
    %v2256 = vld [vmem:[%s3 + $0x2c8] sm:$0xff]
    %v2257 = vld [vmem:[%s3 + $0x2d0] sm:$0xff]
    %v2258 = vld [vmem:[%s3 + $0x2d8] sm:$0xff]
    %v2259 = vld [vmem:[%s3 + $0x2e0] sm:$0xff]
    %v2260 = vld [vmem:[%s3 + $0x2e8] sm:$0xff]
    %v2261 = vld [vmem:[%s3 + $0x2f0] sm:$0xff]
    %v2262 = vld [vmem:[%s3 + $0x2f8] sm:$0xff]
    %v2263 = vld [vmem:[%s3 + $0x300] sm:$0xff]
    %v2264 = vld [vmem:[%s3 + $0x308] sm:$0xff]
    %vm2265 = vcmask 130048
    %v2267 = vsel %vm2265, %v2166, 0
    %2269 = vmatprep.subr.mxu0 0.0
    %2270 = vmatpush1.msra.mxu0 %v2182
    %2271 = vmatprep.subr.mxu0 0.0
    %2272 = vmatpush1.msra.mxu0 %v2181
    %2273 = vmatprep.subr.mxu0 0.0
    %2274 = vmatpush1.msra.mxu0 %v2180
    %2275 = vmatprep.subr.mxu0 0.0
    %2276 = vmatpush1.msra.mxu0 %v2179
    %2277 = vmatprep.subr.mxu0 0.0
    %2278 = vmatpush1.msra.mxu0 %v2178
    %2279 = vmatprep.subr.mxu0 0.0
    %2280 = vmatpush1.msra.mxu0 %v2177
    %2281 = vmatprep.subr.mxu0 0.0
    %2282 = vmatpush1.msra.mxu0 %v2176
    %2283 = vmatprep.subr.mxu0 0.0
    %2284 = vmatpush1.msra.mxu0 %v2175
    %2285 = vmatprep.subr.mxu0 0.0
    %2286 = vmatpush1.msra.mxu0 %v2174
    %2287 = vmatprep.subr.mxu0 0.0
    %2288 = vmatpush1.msra.mxu0 %v2173
    %2289 = vmatprep.subr.mxu0 0.0
    %2290 = vmatpush1.msra.mxu0 %v2172
    %2291 = vmatprep.subr.mxu0 0.0
    %2292 = vmatpush1.msra.mxu0 %v2171
    %2293 = vmatprep.subr.mxu0 0.0
    %2294 = vmatpush1.msra.mxu0 %v2170
    %2295 = vmatprep.subr.mxu0 0.0
    %2296 = vmatpush1.msra.mxu0 %v2169
    %2297 = vmatprep.subr.mxu0 0.0
    %2298 = vmatpush1.msra.mxu0 %v2168
    %2299 = vmatprep.subr.mxu0 0.0
    %2300 = vmatpush1.msra.mxu0 %v2167
    %2301 = vmatprep.subr.mxu0 0.0
    %2302 = vmatpush2.msra.mxu0 %v2198
    %2303 = vmatprep.subr.mxu0 0.0
    %2304 = vmatpush2.msra.mxu0 %v2197
    %2305 = vmatprep.subr.mxu0 0.0
    %2306 = vmatpush2.msra.mxu0 %v2196
    %2307 = vmatprep.subr.mxu0 0.0
    %2308 = vmatpush2.msra.mxu0 %v2195
    %2309 = vmatprep.subr.mxu0 0.0
    %2310 = vmatpush2.msra.mxu0 %v2194
    %2311 = vmatprep.subr.mxu0 0.0
    %2312 = vmatpush2.msra.mxu0 %v2193
    %2313 = vmatprep.subr.mxu0 0.0
    %2314 = vmatpush2.msra.mxu0 %v2192
    %2315 = vmatprep.subr.mxu0 0.0
    %2316 = vmatpush2.msra.mxu0 %v2191
    %2317 = vmatprep.subr.mxu0 0.0
    %2318 = vmatpush2.msra.mxu0 %v2190
    %2319 = vmatprep.subr.mxu0 0.0
    %2320 = vmatpush2.msra.mxu0 %v2189
    %2321 = vmatprep.subr.mxu0 0.0
    %2322 = vmatpush2.msra.mxu0 %v2188
    %2323 = vmatprep.subr.mxu0 0.0
    %2324 = vmatpush2.msra.mxu0 %v2187
    %2325 = vmatprep.subr.mxu0 0.0
    %2326 = vmatpush2.msra.mxu0 %v2186
    %2327 = vmatprep.subr.mxu0 0.0
    %2328 = vmatpush2.msra.mxu0 %v2185
    %2329 = vmatprep.subr.mxu0 0.0
    %2330 = vmatpush2.msra.mxu0 %v2184
    %2331 = vmatprep.subr.mxu0 0.0
    %2332 = vmatpush2.msra.mxu0 %v2183
    %2333 = vmatprep.mubr.f32.mxu0 %v2161
    %2334 = vmatmul.mubr.f32.gmra.mxu0 %v2160
    %v2335 = vpop.f32.mrf.mxu0
    %v2336 = vadd.f32 0.0, %v2335
    %v2337 = vpop.f32.mrf.mxu0
    %2338 = vdwg.mxu0
    %2339 = vmatprep.subr.mxu0 0.0
    %2340 = vmatpush1.msra.mxu0 %v2214
    %2341 = vmatprep.subr.mxu0 0.0
    %2342 = vmatpush1.msra.mxu0 %v2213
    %2343 = vmatprep.subr.mxu0 0.0
    %2344 = vmatpush1.msra.mxu0 %v2212
    %2345 = vmatprep.subr.mxu0 0.0
    %2346 = vmatpush1.msra.mxu0 %v2211
    %2347 = vmatprep.subr.mxu0 0.0
    %2348 = vmatpush1.msra.mxu0 %v2210
    %2349 = vmatprep.subr.mxu0 0.0
    %2350 = vmatpush1.msra.mxu0 %v2209
    %2351 = vmatprep.subr.mxu0 0.0
    %2352 = vmatpush1.msra.mxu0 %v2208
    %2353 = vmatprep.subr.mxu0 0.0
    %2354 = vmatpush1.msra.mxu0 %v2207
    %2355 = vmatprep.subr.mxu0 0.0
    %2356 = vmatpush1.msra.mxu0 %v2206
    %2357 = vmatprep.subr.mxu0 0.0
    %2358 = vmatpush1.msra.mxu0 %v2205
    %2359 = vmatprep.subr.mxu0 0.0
    %2360 = vmatpush1.msra.mxu0 %v2204
    %2361 = vmatprep.subr.mxu0 0.0
    %2362 = vmatpush1.msra.mxu0 %v2203
    %2363 = vmatprep.subr.mxu0 0.0
    %2364 = vmatpush1.msra.mxu0 %v2202
    %2365 = vmatprep.subr.mxu0 0.0
    %2366 = vmatpush1.msra.mxu0 %v2201
    %2367 = vmatprep.subr.mxu0 0.0
    %2368 = vmatpush1.msra.mxu0 %v2200
    %2369 = vmatprep.subr.mxu0 0.0
    %2370 = vmatpush1.msra.mxu0 %v2199
    %2371 = vmatprep.subr.mxu0 0.0
    %2372 = vmatpush2.msra.mxu0 %v2230
    %2373 = vmatprep.subr.mxu0 0.0
    %2374 = vmatpush2.msra.mxu0 %v2229
    %2375 = vmatprep.subr.mxu0 0.0
    %2376 = vmatpush2.msra.mxu0 %v2228
    %2377 = vmatprep.subr.mxu0 0.0
    %2378 = vmatpush2.msra.mxu0 %v2227
    %2379 = vmatprep.subr.mxu0 0.0
    %2380 = vmatpush2.msra.mxu0 %v2226
    %2381 = vmatprep.subr.mxu0 0.0
    %2382 = vmatpush2.msra.mxu0 %v2225
    %2383 = vmatprep.subr.mxu0 0.0
    %2384 = vmatpush2.msra.mxu0 %v2224
    %2385 = vmatprep.subr.mxu0 0.0
    %2386 = vmatpush2.msra.mxu0 %v2223
    %2387 = vmatprep.subr.mxu0 0.0
    %2388 = vmatpush2.msra.mxu0 %v2222
    %2389 = vmatprep.subr.mxu0 0.0
    %2390 = vmatpush2.msra.mxu0 %v2221
    %2391 = vmatprep.subr.mxu0 0.0
    %2392 = vmatpush2.msra.mxu0 %v2220
    %2393 = vmatprep.subr.mxu0 0.0
    %2394 = vmatpush2.msra.mxu0 %v2219
    %2395 = vmatprep.subr.mxu0 0.0
    %2396 = vmatpush2.msra.mxu0 %v2218
    %2397 = vmatprep.subr.mxu0 0.0
    %2398 = vmatpush2.msra.mxu0 %v2217
    %2399 = vmatprep.subr.mxu0 0.0
    %2400 = vmatpush2.msra.mxu0 %v2216
    %2401 = vmatprep.subr.mxu0 0.0
    %2402 = vmatpush2.msra.mxu0 %v2215
    %2403 = vmatprep.mubr.f32.mxu0 %v2163
    %2404 = vmatmul.mubr.f32.gmra.mxu0 %v2162
    %v2405 = vpop.f32.mrf.mxu0
    %v2406 = vadd.f32 %v2336, %v2405
    %v2407 = vpop.f32.mrf.mxu0
    %2408 = vdwg.mxu0
    %2409 = vmatprep.subr.mxu0 0.0
    %2410 = vmatpush1.msra.mxu0 %v2246
    %2411 = vmatprep.subr.mxu0 0.0
    %2412 = vmatpush1.msra.mxu0 %v2245
    %2413 = vmatprep.subr.mxu0 0.0
    %2414 = vmatpush1.msra.mxu0 %v2244
    %2415 = vmatprep.subr.mxu0 0.0
    %2416 = vmatpush1.msra.mxu0 %v2243
    %2417 = vmatprep.subr.mxu0 0.0
    %2418 = vmatpush1.msra.mxu0 %v2242
    %2419 = vmatprep.subr.mxu0 0.0
    %2420 = vmatpush1.msra.mxu0 %v2241
    %2421 = vmatprep.subr.mxu0 0.0
    %2422 = vmatpush1.msra.mxu0 %v2240
    %2423 = vmatprep.subr.mxu0 0.0
    %2424 = vmatpush1.msra.mxu0 %v2239
    %2425 = vmatprep.subr.mxu0 0.0
    %2426 = vmatpush1.msra.mxu0 %v2238
    %2427 = vmatprep.subr.mxu0 0.0
    %2428 = vmatpush1.msra.mxu0 %v2237
    %2429 = vmatprep.subr.mxu0 0.0
    %2430 = vmatpush1.msra.mxu0 %v2236
    %2431 = vmatprep.subr.mxu0 0.0
    %2432 = vmatpush1.msra.mxu0 %v2235
    %2433 = vmatprep.subr.mxu0 0.0
    %2434 = vmatpush1.msra.mxu0 %v2234
    %2435 = vmatprep.subr.mxu0 0.0
    %2436 = vmatpush1.msra.mxu0 %v2233
    %2437 = vmatprep.subr.mxu0 0.0
    %2438 = vmatpush1.msra.mxu0 %v2232
    %2439 = vmatprep.subr.mxu0 0.0
    %2440 = vmatpush1.msra.mxu0 %v2231
    %2441 = vmatprep.subr.mxu0 0.0
    %2442 = vmatpush2.msra.mxu0 %v2262
    %2443 = vmatprep.subr.mxu0 0.0
    %2444 = vmatpush2.msra.mxu0 %v2261
    %2445 = vmatprep.subr.mxu0 0.0
    %2446 = vmatpush2.msra.mxu0 %v2260
    %2447 = vmatprep.subr.mxu0 0.0
    %2448 = vmatpush2.msra.mxu0 %v2259
    %2449 = vmatprep.subr.mxu0 0.0
    %2450 = vmatpush2.msra.mxu0 %v2258
    %2451 = vmatprep.subr.mxu0 0.0
    %2452 = vmatpush2.msra.mxu0 %v2257
    %2453 = vmatprep.subr.mxu0 0.0
    %2454 = vmatpush2.msra.mxu0 %v2256
    %2455 = vmatprep.subr.mxu0 0.0
    %2456 = vmatpush2.msra.mxu0 %v2255
    %2457 = vmatprep.subr.mxu0 0.0
    %2458 = vmatpush2.msra.mxu0 %v2254
    %2459 = vmatprep.subr.mxu0 0.0
    %2460 = vmatpush2.msra.mxu0 %v2253
    %2461 = vmatprep.subr.mxu0 0.0
    %2462 = vmatpush2.msra.mxu0 %v2252
    %2463 = vmatprep.subr.mxu0 0.0
    %2464 = vmatpush2.msra.mxu0 %v2251
    %2465 = vmatprep.subr.mxu0 0.0
    %2466 = vmatpush2.msra.mxu0 %v2250
    %2467 = vmatprep.subr.mxu0 0.0
    %2468 = vmatpush2.msra.mxu0 %v2249
    %2469 = vmatprep.subr.mxu0 0.0
    %2470 = vmatpush2.msra.mxu0 %v2248
    %2471 = vmatprep.subr.mxu0 0.0
    %2472 = vmatpush2.msra.mxu0 %v2247
    %2473 = vmatprep.mubr.f32.mxu0 %v2165
    %2474 = vmatmul.mubr.f32.gmra.mxu0 %v2164
    %v2475 = vpop.f32.mrf.mxu0
    %v2476 = vadd.f32 %v2406, %v2475
    %v2477 = vpop.f32.mrf.mxu0
    %2478 = vdwg.mxu0
    %2479 = vmatprep.subr.mxu0 0.0
    %2480 = vmatpush1.msra.mxu0 0.0
    %2481 = vmatprep.subr.mxu0 0.0
    %2482 = vmatpush1.msra.mxu0 0.0
    %2483 = vmatprep.subr.mxu0 0.0
    %2484 = vmatpush1.msra.mxu0 0.0
    %2485 = vmatprep.subr.mxu0 0.0
    %2486 = vmatpush1.msra.mxu0 0.0
    %2487 = vmatprep.subr.mxu0 0.0
    %2488 = vmatpush1.msra.mxu0 0.0
    %2489 = vmatprep.subr.mxu0 0.0
    %2490 = vmatpush1.msra.mxu0 0.0
    %2491 = vmatprep.subr.mxu0 0.0
    %2492 = vmatpush1.msra.mxu0 0.0
    %2493 = vmatprep.subr.mxu0 0.0
    %2494 = vmatpush1.msra.mxu0 0.0
    %2495 = vmatprep.subr.mxu0 0.0
    %2496 = vmatpush1.msra.mxu0 0.0
    %2497 = vmatprep.subr.mxu0 0.0
    %2498 = vmatpush1.msra.mxu0 0.0
    %2499 = vmatprep.subr.mxu0 0.0
    %2500 = vmatpush1.msra.mxu0 0.0
    %2501 = vmatprep.subr.mxu0 0.0
    %2502 = vmatpush1.msra.mxu0 0.0
    %2503 = vmatprep.subr.mxu0 0.0
    %2504 = vmatpush1.msra.mxu0 0.0
    %2505 = vmatprep.subr.mxu0 0.0
    %2506 = vmatpush1.msra.mxu0 0.0
    %2507 = vmatprep.subr.mxu0 0.0
    %2508 = vmatpush1.msra.mxu0 %v2264
    %2509 = vmatprep.subr.mxu0 0.0
    %2510 = vmatpush1.msra.mxu0 %v2263
    %2511 = vmatprep.subr.mxu0 0.0
    %2512 = vmatpush2.msra.mxu0 0.0
    %2513 = vmatprep.subr.mxu0 0.0
    %2514 = vmatpush2.msra.mxu0 0.0
    %2515 = vmatprep.subr.mxu0 0.0
    %2516 = vmatpush2.msra.mxu0 0.0
    %2517 = vmatprep.subr.mxu0 0.0
    %2518 = vmatpush2.msra.mxu0 0.0
    %2519 = vmatprep.subr.mxu0 0.0
    %2520 = vmatpush2.msra.mxu0 0.0
    %2521 = vmatprep.subr.mxu0 0.0
    %2522 = vmatpush2.msra.mxu0 0.0
    %2523 = vmatprep.subr.mxu0 0.0
    %2524 = vmatpush2.msra.mxu0 0.0
    %2525 = vmatprep.subr.mxu0 0.0
    %2526 = vmatpush2.msra.mxu0 0.0
    %2527 = vmatprep.subr.mxu0 0.0
    %2528 = vmatpush2.msra.mxu0 0.0
    %2529 = vmatprep.subr.mxu0 0.0
    %2530 = vmatpush2.msra.mxu0 0.0
    %2531 = vmatprep.subr.mxu0 0.0
    %2532 = vmatpush2.msra.mxu0 0.0
    %2533 = vmatprep.subr.mxu0 0.0
    %2534 = vmatpush2.msra.mxu0 0.0
    %2535 = vmatprep.subr.mxu0 0.0
    %2536 = vmatpush2.msra.mxu0 0.0
    %2537 = vmatprep.subr.mxu0 0.0
    %2538 = vmatpush2.msra.mxu0 0.0
    %2539 = vmatprep.subr.mxu0 0.0
    %2540 = vmatpush2.msra.mxu0 0.0
    %2541 = vmatprep.subr.mxu0 0.0
    %2542 = vmatpush2.msra.mxu0 0.0
    %2543 = vmatprep.mubr.f32.mxu0 0.0
    %2544 = vmatmul.mubr.f32.gmra.mxu0 %v2267
    %v2545 = vpop.f32.mrf.mxu0
    %v2546 = vadd.f32 %v2476, %v2545
    %v2547 = vpop.f32.mrf.mxu0
    %2548 = vdwg.mxu0
    %v2549 = vadd.f32 %v1957, %v2546
    %s2550 = sld [smem:[#allocation7 + $0x1]]
    %v2551 = vstv %s2550
    %v2552 = vadd.f32 %v1911, %v2551
    %v2553 = vadd.f32 %v1912, %v2551
    %v2554 = vadd.f32 %v1913, %v2551
    %v2555 = vadd.f32 %v1914, %v2551
    %v2556 = vadd.f32 %v1915, %v2551
    %v2557 = vadd.f32 %v1916, %v2551
    %v2558 = vadd.f32 %v1917, %v2551
    %v2566 = vcombine.low %v2552, %v2553
    %v2567 = vcombine.low %v2554, %v2555
    %v2569 = vunpack.c.l.s4 1983009808
    %v2570 = vunpack.c.0.s8 %v2569
    %v2571 = vlaneseq
    %v2572 = vshrl.u32 %v2571, 7
    %v2573 = vsub.s32 %v2570, %v2572
    %v2574 = vrot.slane %v2566, %v2573
    %v2576 = vunpack.c.l.s4 1983009808
    %v2577 = vunpack.c.0.s8 %v2576
    %v2578 = vlaneseq
    %v2579 = vshrl.u32 %v2578, 7
    %v2580 = vsub.s32 %v2577, %v2579
    %v2581 = vrot.slane %v2567, %v2580
    %v2582 = vcombine.low %v2574, %v2581
    %v2583 = vcombine.low %v2556, %v2557
    %v2585 = vunpack.c.l.s4 1983009808
    %v2586 = vunpack.c.0.s8 %v2585
    %v2587 = vlaneseq
    %v2588 = vshrl.u32 %v2587, 7
    %v2589 = vsub.s32 %v2586, %v2588
    %v2590 = vrot.slane %v2583, %v2589
    %v2592 = vunpack.c.l.s4 1983009808
    %v2593 = vunpack.c.0.s8 %v2592
    %v2594 = vlaneseq
    %v2595 = vshrl.u32 %v2594, 7
    %v2596 = vsub.s32 %v2593, %v2595
    %v2597 = vrot.slane %v2558, %v2596
    %v2598 = vcombine.low %v2590, %v2597
    %2601 = vst [vmem:[#allocation3] sm:$0xff] %v2582
    %2602 = vst.msk [vmem:[#allocation3 + $0x8] sm:$0x3f] %vm2011, %v2598
    %v2603 = vld [vmem:[#allocation3] sm:$0xff]
    %v2604 = vld [vmem:[#allocation3 + $0x8] sm:$0x3f]
    %v2607 = vcombine.high %v2603, %v2603
    %v2609 = vunpack.c.l.s4 1983009808
    %v2610 = vunpack.c.0.s8 %v2609
    %v2611 = vlaneseq
    %v2612 = vshrl.u32 %v2611, 7
    %v2613 = vsub.s32 %v2610, %v2612
    %v2614 = vrot.slane %v2603, %v2613
    %v2616 = vunpack.c.l.s4 1983009808
    %v2617 = vunpack.c.0.s8 %v2616
    %v2618 = vlaneseq
    %v2619 = vshrl.u32 %v2618, 7
    %v2620 = vsub.s32 %v2617, %v2619
    %v2621 = vrot.slane %v2607, %v2620
    %v2622 = vcombine.high %v2614, %v2614
    %v2623 = vcombine.high %v2621, %v2621
    %v2624 = vcombine.high %v2604, %v2604
    %v2626 = vunpack.c.l.s4 1983009808
    %v2627 = vunpack.c.0.s8 %v2626
    %v2628 = vlaneseq
    %v2629 = vshrl.u32 %v2628, 7
    %v2630 = vsub.s32 %v2627, %v2629
    %v2631 = vrot.slane %v2604, %v2630
    %v2633 = vunpack.c.l.s4 1983009808
    %v2634 = vunpack.c.0.s8 %v2633
    %v2635 = vlaneseq
    %v2636 = vshrl.u32 %v2635, 7
    %v2637 = vsub.s32 %v2634, %v2636
    %v2638 = vrot.slane %v2624, %v2637
    %v2639 = vcombine.high %v2631, %v2631
    %2640 = vrot.lane.b32.xlu0 %v2614, 127
    %v2641 = vpop.permute.xlu0 %2640
    %2642 = vrot.lane.b32.xlu0 %v2622, 127
    %v2643 = vpop.permute.xlu0 %2642
    %2644 = vrot.lane.b32.xlu0 %v2621, 127
    %v2645 = vpop.permute.xlu0 %2644
    %2646 = vrot.lane.b32.xlu0 %v2623, 127
    %v2647 = vpop.permute.xlu0 %2646
    %2648 = vrot.lane.b32.xlu0 %v2631, 127
    %v2649 = vpop.permute.xlu0 %2648
    %2650 = vrot.lane.b32.xlu0 %v2639, 127
    %v2651 = vpop.permute.xlu0 %2650
    %2652 = vrot.lane.b32.xlu0 %v2638, 127
    %v2653 = vpop.permute.xlu0 %2652
    %v2654 = vsel %vm426, %v2641, %v2643
    %v2655 = vsel %vm426, %v2643, %v2645
    %v2656 = vsel %vm426, %v2645, %v2647
    %v2657 = vsel %vm426, %v2647, %v2649
    %v2658 = vsel %vm426, %v2649, %v2651
    %v2659 = vsel %vm426, %v2651, %v2653
    %v2667 = vmax.f32 %v2552, %v2654
    %v2668 = vmax.f32 %v2553, %v2655
    %v2669 = vmax.f32 %v2554, %v2656
    %v2670 = vmax.f32 %v2555, %v2657
    %v2671 = vmax.f32 %v2556, %v2658
    %v2672 = vmax.f32 %v2557, %v2659
    %v2673 = vmax.f32 %v2558, %v2653
    %2674 = vrot.lane.b32.xlu0 %v2603, 127
    %v2675 = vpop.permute.xlu0 %2674
    %2676 = vrot.lane.b32.xlu0 %v2604, 127
    %v2677 = vpop.permute.xlu0 %2676
    %v2678 = vrot.slane %v2675, 2
    %v2679 = vrot.slane %v2677, 2
    %v2680 = vsel %vm2090, %v2678, %v2679
    %v2681 = vsel %vm426, %v2675, %v2680
    %v2682 = vsel %vm426, %v2677, %v2679
    %v2685 = vmax.f32 %v2603, %v2681
    %v2686 = vmax.f32 %v2604, %v2682
    %v2689 = vcombine.high %v2685, %v2685
    %v2691 = vunpack.c.l.s4 1983009808
    %v2692 = vunpack.c.0.s8 %v2691
    %v2693 = vlaneseq
    %v2694 = vshrl.u32 %v2693, 7
    %v2695 = vsub.s32 %v2692, %v2694
    %v2696 = vrot.slane %v2685, %v2695
    %v2698 = vunpack.c.l.s4 1983009808
    %v2699 = vunpack.c.0.s8 %v2698
    %v2700 = vlaneseq
    %v2701 = vshrl.u32 %v2700, 7
    %v2702 = vsub.s32 %v2699, %v2701
    %v2703 = vrot.slane %v2689, %v2702
    %v2704 = vcombine.high %v2696, %v2696
    %v2705 = vcombine.high %v2703, %v2703
    %v2706 = vcombine.high %v2686, %v2686
    %v2708 = vunpack.c.l.s4 1983009808
    %v2709 = vunpack.c.0.s8 %v2708
    %v2710 = vlaneseq
    %v2711 = vshrl.u32 %v2710, 7
    %v2712 = vsub.s32 %v2709, %v2711
    %v2713 = vrot.slane %v2686, %v2712
    %v2715 = vunpack.c.l.s4 1983009808
    %v2716 = vunpack.c.0.s8 %v2715
    %v2717 = vlaneseq
    %v2718 = vshrl.u32 %v2717, 7
    %v2719 = vsub.s32 %v2716, %v2718
    %v2720 = vrot.slane %v2706, %v2719
    %v2721 = vcombine.high %v2713, %v2713
    %2722 = vrot.lane.b32.xlu0 %v2696, 100
    %v2723 = vpop.permute.xlu0 %2722
    %2724 = vrot.lane.b32.xlu0 %v2704, 100
    %v2725 = vpop.permute.xlu0 %2724
    %2726 = vrot.lane.b32.xlu0 %v2703, 100
    %v2727 = vpop.permute.xlu0 %2726
    %2728 = vrot.lane.b32.xlu0 %v2705, 100
    %v2729 = vpop.permute.xlu0 %2728
    %2730 = vrot.lane.b32.xlu0 %v2713, 100
    %v2731 = vpop.permute.xlu0 %2730
    %2732 = vrot.lane.b32.xlu0 %v2721, 100
    %v2733 = vpop.permute.xlu0 %2732
    %2734 = vrot.lane.b32.xlu0 %v2720, 100
    %v2735 = vpop.permute.xlu0 %2734
    %v2736 = vsel %vm867, %v2723, %v2725
    %v2737 = vsel %vm867, %v2725, %v2727
    %v2738 = vsel %vm867, %v2727, %v2729
    %v2739 = vsel %vm867, %v2729, %v2731
    %v2740 = vsel %vm867, %v2731, %v2733
    %v2741 = vsel %vm867, %v2733, %v2735
    %v2749 = vmax.f32 %v2667, %v2736
    %v2750 = vmax.f32 %v2668, %v2737
    %v2751 = vmax.f32 %v2669, %v2738
    %v2752 = vmax.f32 %v2670, %v2739
    %v2753 = vmax.f32 %v2671, %v2740
    %v2754 = vmax.f32 %v2672, %v2741
    %v2755 = vmax.f32 %v2673, %v2735
    %v2756 = vld [vmem:[%s3] sm:$0xff]
    %v2757 = vld [vmem:[%s3 + $0x8] sm:$0xff]
    %v2758 = vld [vmem:[%s3 + $0x10] sm:$0xff]
    %v2759 = vld [vmem:[%s3 + $0x18] sm:$0xff]
    %v2760 = vld [vmem:[%s3 + $0x20] sm:$0xff]
    %v2761 = vld [vmem:[%s3 + $0x28] sm:$0xff]
    %v2762 = vld [vmem:[%s3 + $0x30] sm:$0xff]
    %v2763 = vld [vmem:[%s3 + $0x38] sm:$0xff]
    %v2764 = vld [vmem:[%s3 + $0x40] sm:$0xff]
    %v2765 = vld [vmem:[%s3 + $0x48] sm:$0xff]
    %v2766 = vld [vmem:[%s3 + $0x50] sm:$0xff]
    %v2767 = vld [vmem:[%s3 + $0x58] sm:$0xff]
    %v2768 = vld [vmem:[%s3 + $0x60] sm:$0xff]
    %v2769 = vld [vmem:[%s3 + $0x68] sm:$0xff]
    %v2770 = vld [vmem:[%s3 + $0x70] sm:$0xff]
    %v2771 = vld [vmem:[%s3 + $0x78] sm:$0xff]
    %v2772 = vld [vmem:[%s3 + $0x80] sm:$0xff]
    %v2773 = vld [vmem:[%s3 + $0x88] sm:$0xff]
    %v2774 = vld [vmem:[%s3 + $0x90] sm:$0xff]
    %v2775 = vld [vmem:[%s3 + $0x98] sm:$0xff]
    %v2776 = vld [vmem:[%s3 + $0xa0] sm:$0xff]
    %v2777 = vld [vmem:[%s3 + $0xa8] sm:$0xff]
    %v2778 = vld [vmem:[%s3 + $0xb0] sm:$0xff]
    %v2779 = vld [vmem:[%s3 + $0xb8] sm:$0xff]
    %v2780 = vld [vmem:[%s3 + $0xc0] sm:$0xff]
    %v2781 = vld [vmem:[%s3 + $0xc8] sm:$0xff]
    %v2782 = vld [vmem:[%s3 + $0xd0] sm:$0xff]
    %v2783 = vld [vmem:[%s3 + $0xd8] sm:$0xff]
    %v2784 = vld [vmem:[%s3 + $0xe0] sm:$0xff]
    %v2785 = vld [vmem:[%s3 + $0xe8] sm:$0xff]
    %v2786 = vld [vmem:[%s3 + $0xf0] sm:$0xff]
    %v2787 = vld [vmem:[%s3 + $0xf8] sm:$0xff]
    %v2788 = vld [vmem:[%s3 + $0x100] sm:$0xff]
    %v2789 = vld [vmem:[%s3 + $0x108] sm:$0xff]
    %v2790 = vld [vmem:[%s3 + $0x110] sm:$0xff]
    %v2791 = vld [vmem:[%s3 + $0x118] sm:$0xff]
    %v2792 = vld [vmem:[%s3 + $0x120] sm:$0xff]
    %v2793 = vld [vmem:[%s3 + $0x128] sm:$0xff]
    %v2794 = vld [vmem:[%s3 + $0x130] sm:$0xff]
    %v2795 = vld [vmem:[%s3 + $0x138] sm:$0xff]
    %v2796 = vld [vmem:[%s3 + $0x140] sm:$0xff]
    %v2797 = vld [vmem:[%s3 + $0x148] sm:$0xff]
    %v2798 = vld [vmem:[%s3 + $0x150] sm:$0xff]
    %v2799 = vld [vmem:[%s3 + $0x158] sm:$0xff]
    %v2800 = vld [vmem:[%s3 + $0x160] sm:$0xff]
    %v2801 = vld [vmem:[%s3 + $0x168] sm:$0xff]
    %v2802 = vld [vmem:[%s3 + $0x170] sm:$0xff]
    %v2803 = vld [vmem:[%s3 + $0x178] sm:$0xff]
    %v2804 = vld [vmem:[%s3 + $0x180] sm:$0xff]
    %v2805 = vld [vmem:[%s3 + $0x188] sm:$0xff]
    %v2806 = vld [vmem:[%s3 + $0x190] sm:$0xff]
    %v2807 = vld [vmem:[%s3 + $0x198] sm:$0xff]
    %v2808 = vld [vmem:[%s3 + $0x1a0] sm:$0xff]
    %v2809 = vld [vmem:[%s3 + $0x1a8] sm:$0xff]
    %v2810 = vld [vmem:[%s3 + $0x1b0] sm:$0xff]
    %v2811 = vld [vmem:[%s3 + $0x1b8] sm:$0xff]
    %v2812 = vld [vmem:[%s3 + $0x1c0] sm:$0xff]
    %v2813 = vld [vmem:[%s3 + $0x1c8] sm:$0xff]
    %v2814 = vld [vmem:[%s3 + $0x1d0] sm:$0xff]
    %v2815 = vld [vmem:[%s3 + $0x1d8] sm:$0xff]
    %v2816 = vld [vmem:[%s3 + $0x1e0] sm:$0xff]
    %v2817 = vld [vmem:[%s3 + $0x1e8] sm:$0xff]
    %v2818 = vld [vmem:[%s3 + $0x1f0] sm:$0xff]
    %v2819 = vld [vmem:[%s3 + $0x1f8] sm:$0xff]
    %v2820 = vld [vmem:[%s3 + $0x200] sm:$0xff]
    %v2821 = vld [vmem:[%s3 + $0x208] sm:$0xff]
    %v2822 = vld [vmem:[%s3 + $0x210] sm:$0xff]
    %v2823 = vld [vmem:[%s3 + $0x218] sm:$0xff]
    %v2824 = vld [vmem:[%s3 + $0x220] sm:$0xff]
    %v2825 = vld [vmem:[%s3 + $0x228] sm:$0xff]
    %v2826 = vld [vmem:[%s3 + $0x230] sm:$0xff]
    %v2827 = vld [vmem:[%s3 + $0x238] sm:$0xff]
    %v2828 = vld [vmem:[%s3 + $0x240] sm:$0xff]
    %v2829 = vld [vmem:[%s3 + $0x248] sm:$0xff]
    %v2830 = vld [vmem:[%s3 + $0x250] sm:$0xff]
    %v2831 = vld [vmem:[%s3 + $0x258] sm:$0xff]
    %v2832 = vld [vmem:[%s3 + $0x260] sm:$0xff]
    %v2833 = vld [vmem:[%s3 + $0x268] sm:$0xff]
    %v2834 = vld [vmem:[%s3 + $0x270] sm:$0xff]
    %v2835 = vld [vmem:[%s3 + $0x278] sm:$0xff]
    %v2836 = vld [vmem:[%s3 + $0x280] sm:$0xff]
    %v2837 = vld [vmem:[%s3 + $0x288] sm:$0xff]
    %v2838 = vld [vmem:[%s3 + $0x290] sm:$0xff]
    %v2839 = vld [vmem:[%s3 + $0x298] sm:$0xff]
    %v2840 = vld [vmem:[%s3 + $0x2a0] sm:$0xff]
    %v2841 = vld [vmem:[%s3 + $0x2a8] sm:$0xff]
    %v2842 = vld [vmem:[%s3 + $0x2b0] sm:$0xff]
    %v2843 = vld [vmem:[%s3 + $0x2b8] sm:$0xff]
    %v2844 = vld [vmem:[%s3 + $0x2c0] sm:$0xff]
    %v2845 = vld [vmem:[%s3 + $0x2c8] sm:$0xff]
    %v2846 = vld [vmem:[%s3 + $0x2d0] sm:$0xff]
    %v2847 = vld [vmem:[%s3 + $0x2d8] sm:$0xff]
    %v2848 = vld [vmem:[%s3 + $0x2e0] sm:$0xff]
    %v2849 = vld [vmem:[%s3 + $0x2e8] sm:$0xff]
    %v2850 = vld [vmem:[%s3 + $0x2f0] sm:$0xff]
    %v2851 = vld [vmem:[%s3 + $0x2f8] sm:$0xff]
    %v2852 = vld [vmem:[%s3 + $0x300] sm:$0xff]
    %v2853 = vld [vmem:[%s3 + $0x308] sm:$0xff]
    %2952 = vrot.lane.b32.xlu0 %v2756, 96
    %v2953 = vpop.permute.xlu0 %2952
    %2954 = vrot.lane.b32.xlu0 %v2757, 96
    %v2955 = vpop.permute.xlu0 %2954
    %2956 = vrot.lane.b32.xlu0 %v2758, 96
    %v2957 = vpop.permute.xlu0 %2956
    %2958 = vrot.lane.b32.xlu0 %v2759, 96
    %v2959 = vpop.permute.xlu0 %2958
    %2960 = vrot.lane.b32.xlu0 %v2760, 96
    %v2961 = vpop.permute.xlu0 %2960
    %2962 = vrot.lane.b32.xlu0 %v2761, 96
    %v2963 = vpop.permute.xlu0 %2962
    %2964 = vrot.lane.b32.xlu0 %v2762, 96
    %v2965 = vpop.permute.xlu0 %2964
    %2966 = vrot.lane.b32.xlu0 %v2763, 96
    %v2967 = vpop.permute.xlu0 %2966
    %2968 = vrot.lane.b32.xlu0 %v2764, 96
    %v2969 = vpop.permute.xlu0 %2968
    %2970 = vrot.lane.b32.xlu0 %v2765, 96
    %v2971 = vpop.permute.xlu0 %2970
    %2972 = vrot.lane.b32.xlu0 %v2766, 96
    %v2973 = vpop.permute.xlu0 %2972
    %2974 = vrot.lane.b32.xlu0 %v2767, 96
    %v2975 = vpop.permute.xlu0 %2974
    %2976 = vrot.lane.b32.xlu0 %v2768, 96
    %v2977 = vpop.permute.xlu0 %2976
    %2978 = vrot.lane.b32.xlu0 %v2769, 96
    %v2979 = vpop.permute.xlu0 %2978
    %2980 = vrot.lane.b32.xlu0 %v2770, 96
    %v2981 = vpop.permute.xlu0 %2980
    %2982 = vrot.lane.b32.xlu0 %v2771, 96
    %v2983 = vpop.permute.xlu0 %2982
    %2984 = vrot.lane.b32.xlu0 %v2772, 96
    %v2985 = vpop.permute.xlu0 %2984
    %2986 = vrot.lane.b32.xlu0 %v2773, 96
    %v2987 = vpop.permute.xlu0 %2986
    %2988 = vrot.lane.b32.xlu0 %v2774, 96
    %v2989 = vpop.permute.xlu0 %2988
    %2990 = vrot.lane.b32.xlu0 %v2775, 96
    %v2991 = vpop.permute.xlu0 %2990
    %2992 = vrot.lane.b32.xlu0 %v2776, 96
    %v2993 = vpop.permute.xlu0 %2992
    %2994 = vrot.lane.b32.xlu0 %v2777, 96
    %v2995 = vpop.permute.xlu0 %2994
    %2996 = vrot.lane.b32.xlu0 %v2778, 96
    %v2997 = vpop.permute.xlu0 %2996
    %2998 = vrot.lane.b32.xlu0 %v2779, 96
    %v2999 = vpop.permute.xlu0 %2998
    %3000 = vrot.lane.b32.xlu0 %v2780, 96
    %v3001 = vpop.permute.xlu0 %3000
    %3002 = vrot.lane.b32.xlu0 %v2781, 96
    %v3003 = vpop.permute.xlu0 %3002
    %3004 = vrot.lane.b32.xlu0 %v2782, 96
    %v3005 = vpop.permute.xlu0 %3004
    %3006 = vrot.lane.b32.xlu0 %v2783, 96
    %v3007 = vpop.permute.xlu0 %3006
    %3008 = vrot.lane.b32.xlu0 %v2784, 96
    %v3009 = vpop.permute.xlu0 %3008
    %3010 = vrot.lane.b32.xlu0 %v2785, 96
    %v3011 = vpop.permute.xlu0 %3010
    %3012 = vrot.lane.b32.xlu0 %v2786, 96
    %v3013 = vpop.permute.xlu0 %3012
    %3014 = vrot.lane.b32.xlu0 %v2787, 96
    %v3015 = vpop.permute.xlu0 %3014
    %3016 = vrot.lane.b32.xlu0 %v2788, 96
    %v3017 = vpop.permute.xlu0 %3016
    %3018 = vrot.lane.b32.xlu0 %v2789, 96
    %v3019 = vpop.permute.xlu0 %3018
    %3020 = vrot.lane.b32.xlu0 %v2790, 96
    %v3021 = vpop.permute.xlu0 %3020
    %3022 = vrot.lane.b32.xlu0 %v2791, 96
    %v3023 = vpop.permute.xlu0 %3022
    %3024 = vrot.lane.b32.xlu0 %v2792, 96
    %v3025 = vpop.permute.xlu0 %3024
    %3026 = vrot.lane.b32.xlu0 %v2793, 96
    %v3027 = vpop.permute.xlu0 %3026
    %3028 = vrot.lane.b32.xlu0 %v2794, 96
    %v3029 = vpop.permute.xlu0 %3028
    %3030 = vrot.lane.b32.xlu0 %v2795, 96
    %v3031 = vpop.permute.xlu0 %3030
    %3032 = vrot.lane.b32.xlu0 %v2796, 96
    %v3033 = vpop.permute.xlu0 %3032
    %3034 = vrot.lane.b32.xlu0 %v2797, 96
    %v3035 = vpop.permute.xlu0 %3034
    %3036 = vrot.lane.b32.xlu0 %v2798, 96
    %v3037 = vpop.permute.xlu0 %3036
    %3038 = vrot.lane.b32.xlu0 %v2799, 96
    %v3039 = vpop.permute.xlu0 %3038
    %3040 = vrot.lane.b32.xlu0 %v2800, 96
    %v3041 = vpop.permute.xlu0 %3040
    %3042 = vrot.lane.b32.xlu0 %v2801, 96
    %v3043 = vpop.permute.xlu0 %3042
    %3044 = vrot.lane.b32.xlu0 %v2802, 96
    %v3045 = vpop.permute.xlu0 %3044
    %3046 = vrot.lane.b32.xlu0 %v2803, 96
    %v3047 = vpop.permute.xlu0 %3046
    %3048 = vrot.lane.b32.xlu0 %v2804, 96
    %v3049 = vpop.permute.xlu0 %3048
    %3050 = vrot.lane.b32.xlu0 %v2805, 96
    %v3051 = vpop.permute.xlu0 %3050
    %3052 = vrot.lane.b32.xlu0 %v2806, 96
    %v3053 = vpop.permute.xlu0 %3052
    %3054 = vrot.lane.b32.xlu0 %v2807, 96
    %v3055 = vpop.permute.xlu0 %3054
    %3056 = vrot.lane.b32.xlu0 %v2808, 96
    %v3057 = vpop.permute.xlu0 %3056
    %3058 = vrot.lane.b32.xlu0 %v2809, 96
    %v3059 = vpop.permute.xlu0 %3058
    %3060 = vrot.lane.b32.xlu0 %v2810, 96
    %v3061 = vpop.permute.xlu0 %3060
    %3062 = vrot.lane.b32.xlu0 %v2811, 96
    %v3063 = vpop.permute.xlu0 %3062
    %3064 = vrot.lane.b32.xlu0 %v2812, 96
    %v3065 = vpop.permute.xlu0 %3064
    %3066 = vrot.lane.b32.xlu0 %v2813, 96
    %v3067 = vpop.permute.xlu0 %3066
    %3068 = vrot.lane.b32.xlu0 %v2814, 96
    %v3069 = vpop.permute.xlu0 %3068
    %3070 = vrot.lane.b32.xlu0 %v2815, 96
    %v3071 = vpop.permute.xlu0 %3070
    %3072 = vrot.lane.b32.xlu0 %v2816, 96
    %v3073 = vpop.permute.xlu0 %3072
    %3074 = vrot.lane.b32.xlu0 %v2817, 96
    %v3075 = vpop.permute.xlu0 %3074
    %3076 = vrot.lane.b32.xlu0 %v2818, 96
    %v3077 = vpop.permute.xlu0 %3076
    %3078 = vrot.lane.b32.xlu0 %v2819, 96
    %v3079 = vpop.permute.xlu0 %3078
    %3080 = vrot.lane.b32.xlu0 %v2820, 96
    %v3081 = vpop.permute.xlu0 %3080
    %3082 = vrot.lane.b32.xlu0 %v2821, 96
    %v3083 = vpop.permute.xlu0 %3082
    %3084 = vrot.lane.b32.xlu0 %v2822, 96
    %v3085 = vpop.permute.xlu0 %3084
    %3086 = vrot.lane.b32.xlu0 %v2823, 96
    %v3087 = vpop.permute.xlu0 %3086
    %3088 = vrot.lane.b32.xlu0 %v2824, 96
    %v3089 = vpop.permute.xlu0 %3088
    %3090 = vrot.lane.b32.xlu0 %v2825, 96
    %v3091 = vpop.permute.xlu0 %3090
    %3092 = vrot.lane.b32.xlu0 %v2826, 96
    %v3093 = vpop.permute.xlu0 %3092
    %3094 = vrot.lane.b32.xlu0 %v2827, 96
    %v3095 = vpop.permute.xlu0 %3094
    %3096 = vrot.lane.b32.xlu0 %v2828, 96
    %v3097 = vpop.permute.xlu0 %3096
    %3098 = vrot.lane.b32.xlu0 %v2829, 96
    %v3099 = vpop.permute.xlu0 %3098
    %3100 = vrot.lane.b32.xlu0 %v2830, 96
    %v3101 = vpop.permute.xlu0 %3100
    %3102 = vrot.lane.b32.xlu0 %v2831, 96
    %v3103 = vpop.permute.xlu0 %3102
    %3104 = vrot.lane.b32.xlu0 %v2832, 96
    %v3105 = vpop.permute.xlu0 %3104
    %3106 = vrot.lane.b32.xlu0 %v2833, 96
    %v3107 = vpop.permute.xlu0 %3106
    %3108 = vrot.lane.b32.xlu0 %v2834, 96
    %v3109 = vpop.permute.xlu0 %3108
    %3110 = vrot.lane.b32.xlu0 %v2835, 96
    %v3111 = vpop.permute.xlu0 %3110
    %3112 = vrot.lane.b32.xlu0 %v2836, 96
    %v3113 = vpop.permute.xlu0 %3112
    %3114 = vrot.lane.b32.xlu0 %v2837, 96
    %v3115 = vpop.permute.xlu0 %3114
    %3116 = vrot.lane.b32.xlu0 %v2838, 96
    %v3117 = vpop.permute.xlu0 %3116
    %3118 = vrot.lane.b32.xlu0 %v2839, 96
    %v3119 = vpop.permute.xlu0 %3118
    %3120 = vrot.lane.b32.xlu0 %v2840, 96
    %v3121 = vpop.permute.xlu0 %3120
    %3122 = vrot.lane.b32.xlu0 %v2841, 96
    %v3123 = vpop.permute.xlu0 %3122
    %3124 = vrot.lane.b32.xlu0 %v2842, 96
    %v3125 = vpop.permute.xlu0 %3124
    %3126 = vrot.lane.b32.xlu0 %v2843, 96
    %v3127 = vpop.permute.xlu0 %3126
    %3128 = vrot.lane.b32.xlu0 %v2844, 96
    %v3129 = vpop.permute.xlu0 %3128
    %3130 = vrot.lane.b32.xlu0 %v2845, 96
    %v3131 = vpop.permute.xlu0 %3130
    %3132 = vrot.lane.b32.xlu0 %v2846, 96
    %v3133 = vpop.permute.xlu0 %3132
    %3134 = vrot.lane.b32.xlu0 %v2847, 96
    %v3135 = vpop.permute.xlu0 %3134
    %3136 = vrot.lane.b32.xlu0 %v2848, 96
    %v3137 = vpop.permute.xlu0 %3136
    %3138 = vrot.lane.b32.xlu0 %v2849, 96
    %v3139 = vpop.permute.xlu0 %3138
    %3140 = vrot.lane.b32.xlu0 %v2850, 96
    %v3141 = vpop.permute.xlu0 %3140
    %3142 = vrot.lane.b32.xlu0 %v2851, 96
    %v3143 = vpop.permute.xlu0 %3142
    %3144 = vrot.lane.b32.xlu0 %v2852, 96
    %v3145 = vpop.permute.xlu0 %3144
    %3146 = vrot.lane.b32.xlu0 %v2853, 96
    %v3147 = vpop.permute.xlu0 %3146
    %v3247 = vsel %vm2265, %v2755, 0
    %3249 = vmatprep.subr.mxu0 0.0
    %3250 = vmatpush1.msra.mxu0 %v2983
    %3251 = vmatprep.subr.mxu0 0.0
    %3252 = vmatpush1.msra.mxu0 %v2981
    %3253 = vmatprep.subr.mxu0 0.0
    %3254 = vmatpush1.msra.mxu0 %v2979
    %3255 = vmatprep.subr.mxu0 0.0
    %3256 = vmatpush1.msra.mxu0 %v2977
    %3257 = vmatprep.subr.mxu0 0.0
    %3258 = vmatpush1.msra.mxu0 %v2975
    %3259 = vmatprep.subr.mxu0 0.0
    %3260 = vmatpush1.msra.mxu0 %v2973
    %3261 = vmatprep.subr.mxu0 0.0
    %3262 = vmatpush1.msra.mxu0 %v2971
    %3263 = vmatprep.subr.mxu0 0.0
    %3264 = vmatpush1.msra.mxu0 %v2969
    %3265 = vmatprep.subr.mxu0 0.0
    %3266 = vmatpush1.msra.mxu0 %v2967
    %3267 = vmatprep.subr.mxu0 0.0
    %3268 = vmatpush1.msra.mxu0 %v2965
    %3269 = vmatprep.subr.mxu0 0.0
    %3270 = vmatpush1.msra.mxu0 %v2963
    %3271 = vmatprep.subr.mxu0 0.0
    %3272 = vmatpush1.msra.mxu0 %v2961
    %3273 = vmatprep.subr.mxu0 0.0
    %3274 = vmatpush1.msra.mxu0 %v2959
    %3275 = vmatprep.subr.mxu0 0.0
    %3276 = vmatpush1.msra.mxu0 %v2957
    %3277 = vmatprep.subr.mxu0 0.0
    %3278 = vmatpush1.msra.mxu0 %v2955
    %3279 = vmatprep.subr.mxu0 0.0
    %3280 = vmatpush1.msra.mxu0 %v2953
    %3281 = vmatprep.subr.mxu0 0.0
    %3282 = vmatpush2.msra.mxu0 %v3015
    %3283 = vmatprep.subr.mxu0 0.0
    %3284 = vmatpush2.msra.mxu0 %v3013
    %3285 = vmatprep.subr.mxu0 0.0
    %3286 = vmatpush2.msra.mxu0 %v3011
    %3287 = vmatprep.subr.mxu0 0.0
    %3288 = vmatpush2.msra.mxu0 %v3009
    %3289 = vmatprep.subr.mxu0 0.0
    %3290 = vmatpush2.msra.mxu0 %v3007
    %3291 = vmatprep.subr.mxu0 0.0
    %3292 = vmatpush2.msra.mxu0 %v3005
    %3293 = vmatprep.subr.mxu0 0.0
    %3294 = vmatpush2.msra.mxu0 %v3003
    %3295 = vmatprep.subr.mxu0 0.0
    %3296 = vmatpush2.msra.mxu0 %v3001
    %3297 = vmatprep.subr.mxu0 0.0
    %3298 = vmatpush2.msra.mxu0 %v2999
    %3299 = vmatprep.subr.mxu0 0.0
    %3300 = vmatpush2.msra.mxu0 %v2997
    %3301 = vmatprep.subr.mxu0 0.0
    %3302 = vmatpush2.msra.mxu0 %v2995
    %3303 = vmatprep.subr.mxu0 0.0
    %3304 = vmatpush2.msra.mxu0 %v2993
    %3305 = vmatprep.subr.mxu0 0.0
    %3306 = vmatpush2.msra.mxu0 %v2991
    %3307 = vmatprep.subr.mxu0 0.0
    %3308 = vmatpush2.msra.mxu0 %v2989
    %3309 = vmatprep.subr.mxu0 0.0
    %3310 = vmatpush2.msra.mxu0 %v2987
    %3311 = vmatprep.subr.mxu0 0.0
    %3312 = vmatpush2.msra.mxu0 %v2985
    %3313 = vmatprep.mubr.f32.mxu0 %v2750
    %3314 = vmatmul.mubr.f32.gmra.mxu0 %v2749
    %v3315 = vpop.f32.mrf.mxu0
    %v3316 = vadd.f32 0.0, %v3315
    %v3317 = vpop.f32.mrf.mxu0
    %3318 = vdwg.mxu0
    %3319 = vmatprep.subr.mxu0 0.0
    %3320 = vmatpush1.msra.mxu0 %v3047
    %3321 = vmatprep.subr.mxu0 0.0
    %3322 = vmatpush1.msra.mxu0 %v3045
    %3323 = vmatprep.subr.mxu0 0.0
    %3324 = vmatpush1.msra.mxu0 %v3043
    %3325 = vmatprep.subr.mxu0 0.0
    %3326 = vmatpush1.msra.mxu0 %v3041
    %3327 = vmatprep.subr.mxu0 0.0
    %3328 = vmatpush1.msra.mxu0 %v3039
    %3329 = vmatprep.subr.mxu0 0.0
    %3330 = vmatpush1.msra.mxu0 %v3037
    %3331 = vmatprep.subr.mxu0 0.0
    %3332 = vmatpush1.msra.mxu0 %v3035
    %3333 = vmatprep.subr.mxu0 0.0
    %3334 = vmatpush1.msra.mxu0 %v3033
    %3335 = vmatprep.subr.mxu0 0.0
    %3336 = vmatpush1.msra.mxu0 %v3031
    %3337 = vmatprep.subr.mxu0 0.0
    %3338 = vmatpush1.msra.mxu0 %v3029
    %3339 = vmatprep.subr.mxu0 0.0
    %3340 = vmatpush1.msra.mxu0 %v3027
    %3341 = vmatprep.subr.mxu0 0.0
    %3342 = vmatpush1.msra.mxu0 %v3025
    %3343 = vmatprep.subr.mxu0 0.0
    %3344 = vmatpush1.msra.mxu0 %v3023
    %3345 = vmatprep.subr.mxu0 0.0
    %3346 = vmatpush1.msra.mxu0 %v3021
    %3347 = vmatprep.subr.mxu0 0.0
    %3348 = vmatpush1.msra.mxu0 %v3019
    %3349 = vmatprep.subr.mxu0 0.0
    %3350 = vmatpush1.msra.mxu0 %v3017
    %3351 = vmatprep.subr.mxu0 0.0
    %3352 = vmatpush2.msra.mxu0 %v3079
    %3353 = vmatprep.subr.mxu0 0.0
    %3354 = vmatpush2.msra.mxu0 %v3077
    %3355 = vmatprep.subr.mxu0 0.0
    %3356 = vmatpush2.msra.mxu0 %v3075
    %3357 = vmatprep.subr.mxu0 0.0
    %3358 = vmatpush2.msra.mxu0 %v3073
    %3359 = vmatprep.subr.mxu0 0.0
    %3360 = vmatpush2.msra.mxu0 %v3071
    %3361 = vmatprep.subr.mxu0 0.0
    %3362 = vmatpush2.msra.mxu0 %v3069
    %3363 = vmatprep.subr.mxu0 0.0
    %3364 = vmatpush2.msra.mxu0 %v3067
    %3365 = vmatprep.subr.mxu0 0.0
    %3366 = vmatpush2.msra.mxu0 %v3065
    %3367 = vmatprep.subr.mxu0 0.0
    %3368 = vmatpush2.msra.mxu0 %v3063
    %3369 = vmatprep.subr.mxu0 0.0
    %3370 = vmatpush2.msra.mxu0 %v3061
    %3371 = vmatprep.subr.mxu0 0.0
    %3372 = vmatpush2.msra.mxu0 %v3059
    %3373 = vmatprep.subr.mxu0 0.0
    %3374 = vmatpush2.msra.mxu0 %v3057
    %3375 = vmatprep.subr.mxu0 0.0
    %3376 = vmatpush2.msra.mxu0 %v3055
    %3377 = vmatprep.subr.mxu0 0.0
    %3378 = vmatpush2.msra.mxu0 %v3053
    %3379 = vmatprep.subr.mxu0 0.0
    %3380 = vmatpush2.msra.mxu0 %v3051
    %3381 = vmatprep.subr.mxu0 0.0
    %3382 = vmatpush2.msra.mxu0 %v3049
    %3383 = vmatprep.mubr.f32.mxu0 %v2752
    %3384 = vmatmul.mubr.f32.gmra.mxu0 %v2751
    %v3385 = vpop.f32.mrf.mxu0
    %v3386 = vadd.f32 %v3316, %v3385
    %v3387 = vpop.f32.mrf.mxu0
    %3388 = vdwg.mxu0
    %3389 = vmatprep.subr.mxu0 0.0
    %3390 = vmatpush1.msra.mxu0 %v3111
    %3391 = vmatprep.subr.mxu0 0.0
    %3392 = vmatpush1.msra.mxu0 %v3109
    %3393 = vmatprep.subr.mxu0 0.0
    %3394 = vmatpush1.msra.mxu0 %v3107
    %3395 = vmatprep.subr.mxu0 0.0
    %3396 = vmatpush1.msra.mxu0 %v3105
    %3397 = vmatprep.subr.mxu0 0.0
    %3398 = vmatpush1.msra.mxu0 %v3103
    %3399 = vmatprep.subr.mxu0 0.0
    %3400 = vmatpush1.msra.mxu0 %v3101
    %3401 = vmatprep.subr.mxu0 0.0
    %3402 = vmatpush1.msra.mxu0 %v3099
    %3403 = vmatprep.subr.mxu0 0.0
    %3404 = vmatpush1.msra.mxu0 %v3097
    %3405 = vmatprep.subr.mxu0 0.0
    %3406 = vmatpush1.msra.mxu0 %v3095
    %3407 = vmatprep.subr.mxu0 0.0
    %3408 = vmatpush1.msra.mxu0 %v3093
    %3409 = vmatprep.subr.mxu0 0.0
    %3410 = vmatpush1.msra.mxu0 %v3091
    %3411 = vmatprep.subr.mxu0 0.0
    %3412 = vmatpush1.msra.mxu0 %v3089
    %3413 = vmatprep.subr.mxu0 0.0
    %3414 = vmatpush1.msra.mxu0 %v3087
    %3415 = vmatprep.subr.mxu0 0.0
    %3416 = vmatpush1.msra.mxu0 %v3085
    %3417 = vmatprep.subr.mxu0 0.0
    %3418 = vmatpush1.msra.mxu0 %v3083
    %3419 = vmatprep.subr.mxu0 0.0
    %3420 = vmatpush1.msra.mxu0 %v3081
    %3421 = vmatprep.subr.mxu0 0.0
    %3422 = vmatpush2.msra.mxu0 %v3143
    %3423 = vmatprep.subr.mxu0 0.0
    %3424 = vmatpush2.msra.mxu0 %v3141
    %3425 = vmatprep.subr.mxu0 0.0
    %3426 = vmatpush2.msra.mxu0 %v3139
    %3427 = vmatprep.subr.mxu0 0.0
    %3428 = vmatpush2.msra.mxu0 %v3137
    %3429 = vmatprep.subr.mxu0 0.0
    %3430 = vmatpush2.msra.mxu0 %v3135
    %3431 = vmatprep.subr.mxu0 0.0
    %3432 = vmatpush2.msra.mxu0 %v3133
    %3433 = vmatprep.subr.mxu0 0.0
    %3434 = vmatpush2.msra.mxu0 %v3131
    %3435 = vmatprep.subr.mxu0 0.0
    %3436 = vmatpush2.msra.mxu0 %v3129
    %3437 = vmatprep.subr.mxu0 0.0
    %3438 = vmatpush2.msra.mxu0 %v3127
    %3439 = vmatprep.subr.mxu0 0.0
    %3440 = vmatpush2.msra.mxu0 %v3125
    %3441 = vmatprep.subr.mxu0 0.0
    %3442 = vmatpush2.msra.mxu0 %v3123
    %3443 = vmatprep.subr.mxu0 0.0
    %3444 = vmatpush2.msra.mxu0 %v3121
    %3445 = vmatprep.subr.mxu0 0.0
    %3446 = vmatpush2.msra.mxu0 %v3119
    %3447 = vmatprep.subr.mxu0 0.0
    %3448 = vmatpush2.msra.mxu0 %v3117
    %3449 = vmatprep.subr.mxu0 0.0
    %3450 = vmatpush2.msra.mxu0 %v3115
    %3451 = vmatprep.subr.mxu0 0.0
    %3452 = vmatpush2.msra.mxu0 %v3113
    %3453 = vmatprep.mubr.f32.mxu0 %v2754
    %3454 = vmatmul.mubr.f32.gmra.mxu0 %v2753
    %v3455 = vpop.f32.mrf.mxu0
    %v3456 = vadd.f32 %v3386, %v3455
    %v3457 = vpop.f32.mrf.mxu0
    %3458 = vdwg.mxu0
    %3459 = vmatprep.subr.mxu0 0.0
    %3460 = vmatpush1.msra.mxu0 0.0
    %3461 = vmatprep.subr.mxu0 0.0
    %3462 = vmatpush1.msra.mxu0 0.0
    %3463 = vmatprep.subr.mxu0 0.0
    %3464 = vmatpush1.msra.mxu0 0.0
    %3465 = vmatprep.subr.mxu0 0.0
    %3466 = vmatpush1.msra.mxu0 0.0
    %3467 = vmatprep.subr.mxu0 0.0
    %3468 = vmatpush1.msra.mxu0 0.0
    %3469 = vmatprep.subr.mxu0 0.0
    %3470 = vmatpush1.msra.mxu0 0.0
    %3471 = vmatprep.subr.mxu0 0.0
    %3472 = vmatpush1.msra.mxu0 0.0
    %3473 = vmatprep.subr.mxu0 0.0
    %3474 = vmatpush1.msra.mxu0 0.0
    %3475 = vmatprep.subr.mxu0 0.0
    %3476 = vmatpush1.msra.mxu0 0.0
    %3477 = vmatprep.subr.mxu0 0.0
    %3478 = vmatpush1.msra.mxu0 0.0
    %3479 = vmatprep.subr.mxu0 0.0
    %3480 = vmatpush1.msra.mxu0 0.0
    %3481 = vmatprep.subr.mxu0 0.0
    %3482 = vmatpush1.msra.mxu0 0.0
    %3483 = vmatprep.subr.mxu0 0.0
    %3484 = vmatpush1.msra.mxu0 0.0
    %3485 = vmatprep.subr.mxu0 0.0
    %3486 = vmatpush1.msra.mxu0 0.0
    %3487 = vmatprep.subr.mxu0 0.0
    %3488 = vmatpush1.msra.mxu0 %v3147
    %3489 = vmatprep.subr.mxu0 0.0
    %3490 = vmatpush1.msra.mxu0 %v3145
    %3491 = vmatprep.subr.mxu0 0.0
    %3492 = vmatpush2.msra.mxu0 0.0
    %3493 = vmatprep.subr.mxu0 0.0
    %3494 = vmatpush2.msra.mxu0 0.0
    %3495 = vmatprep.subr.mxu0 0.0
    %3496 = vmatpush2.msra.mxu0 0.0
    %3497 = vmatprep.subr.mxu0 0.0
    %3498 = vmatpush2.msra.mxu0 0.0
    %3499 = vmatprep.subr.mxu0 0.0
    %3500 = vmatpush2.msra.mxu0 0.0
    %3501 = vmatprep.subr.mxu0 0.0
    %3502 = vmatpush2.msra.mxu0 0.0
    %3503 = vmatprep.subr.mxu0 0.0
    %3504 = vmatpush2.msra.mxu0 0.0
    %3505 = vmatprep.subr.mxu0 0.0
    %3506 = vmatpush2.msra.mxu0 0.0
    %3507 = vmatprep.subr.mxu0 0.0
    %3508 = vmatpush2.msra.mxu0 0.0
    %3509 = vmatprep.subr.mxu0 0.0
    %3510 = vmatpush2.msra.mxu0 0.0
    %3511 = vmatprep.subr.mxu0 0.0
    %3512 = vmatpush2.msra.mxu0 0.0
    %3513 = vmatprep.subr.mxu0 0.0
    %3514 = vmatpush2.msra.mxu0 0.0
    %3515 = vmatprep.subr.mxu0 0.0
    %3516 = vmatpush2.msra.mxu0 0.0
    %3517 = vmatprep.subr.mxu0 0.0
    %3518 = vmatpush2.msra.mxu0 0.0
    %3519 = vmatprep.subr.mxu0 0.0
    %3520 = vmatpush2.msra.mxu0 0.0
    %3521 = vmatprep.subr.mxu0 0.0
    %3522 = vmatpush2.msra.mxu0 0.0
    %3523 = vmatprep.mubr.f32.mxu0 0.0
    %3524 = vmatmul.mubr.f32.gmra.mxu0 %v3247
    %v3525 = vpop.f32.mrf.mxu0
    %v3526 = vadd.f32 %v3456, %v3525
    %v3527 = vpop.f32.mrf.mxu0
    %3528 = vdwg.mxu0
    %v3529 = vadd.f32 %v2549, %v3526
    %s3530 = sld [smem:[#allocation7 + $0x2]]
    %v3531 = vstv %s3530
    %v3532 = vadd.f32 %v1927, %v3531
    %v3533 = vadd.f32 %v1928, %v3531
    %v3534 = vadd.f32 %v1929, %v3531
    %v3535 = vadd.f32 %v1930, %v3531
    %v3536 = vadd.f32 %v1931, %v3531
    %v3537 = vadd.f32 %v1932, %v3531
    %v3538 = vadd.f32 %v1933, %v3531
    %v3546 = vcombine.low %v3532, %v3533
    %v3547 = vcombine.low %v3534, %v3535
    %v3549 = vunpack.c.l.s4 1983009808
    %v3550 = vunpack.c.0.s8 %v3549
    %v3551 = vlaneseq
    %v3552 = vshrl.u32 %v3551, 7
    %v3553 = vsub.s32 %v3550, %v3552
    %v3554 = vrot.slane %v3546, %v3553
    %v3556 = vunpack.c.l.s4 1983009808
    %v3557 = vunpack.c.0.s8 %v3556
    %v3558 = vlaneseq
    %v3559 = vshrl.u32 %v3558, 7
    %v3560 = vsub.s32 %v3557, %v3559
    %v3561 = vrot.slane %v3547, %v3560
    %v3562 = vcombine.low %v3554, %v3561
    %v3563 = vcombine.low %v3536, %v3537
    %v3565 = vunpack.c.l.s4 1983009808
    %v3566 = vunpack.c.0.s8 %v3565
    %v3567 = vlaneseq
    %v3568 = vshrl.u32 %v3567, 7
    %v3569 = vsub.s32 %v3566, %v3568
    %v3570 = vrot.slane %v3563, %v3569
    %v3572 = vunpack.c.l.s4 1983009808
    %v3573 = vunpack.c.0.s8 %v3572
    %v3574 = vlaneseq
    %v3575 = vshrl.u32 %v3574, 7
    %v3576 = vsub.s32 %v3573, %v3575
    %v3577 = vrot.slane %v3538, %v3576
    %v3578 = vcombine.low %v3570, %v3577
    %3581 = vst [vmem:[#allocation3] sm:$0xff] %v3562
    %3582 = vst.msk [vmem:[#allocation3 + $0x8] sm:$0x3f] %vm2011, %v3578
    %v3583 = vld [vmem:[#allocation3] sm:$0xff]
    %v3584 = vld [vmem:[#allocation3 + $0x8] sm:$0x3f]
    %v3587 = vcombine.high %v3583, %v3583
    %v3589 = vunpack.c.l.s4 1983009808
    %v3590 = vunpack.c.0.s8 %v3589
    %v3591 = vlaneseq
    %v3592 = vshrl.u32 %v3591, 7
    %v3593 = vsub.s32 %v3590, %v3592
    %v3594 = vrot.slane %v3583, %v3593
    %v3596 = vunpack.c.l.s4 1983009808
    %v3597 = vunpack.c.0.s8 %v3596
    %v3598 = vlaneseq
    %v3599 = vshrl.u32 %v3598, 7
    %v3600 = vsub.s32 %v3597, %v3599
    %v3601 = vrot.slane %v3587, %v3600
    %v3602 = vcombine.high %v3594, %v3594
    %v3603 = vcombine.high %v3601, %v3601
    %v3604 = vcombine.high %v3584, %v3584
    %v3606 = vunpack.c.l.s4 1983009808
    %v3607 = vunpack.c.0.s8 %v3606
    %v3608 = vlaneseq
    %v3609 = vshrl.u32 %v3608, 7
    %v3610 = vsub.s32 %v3607, %v3609
    %v3611 = vrot.slane %v3584, %v3610
    %v3613 = vunpack.c.l.s4 1983009808
    %v3614 = vunpack.c.0.s8 %v3613
    %v3615 = vlaneseq
    %v3616 = vshrl.u32 %v3615, 7
    %v3617 = vsub.s32 %v3614, %v3616
    %v3618 = vrot.slane %v3604, %v3617
    %v3619 = vcombine.high %v3611, %v3611
    %3620 = vrot.lane.b32.xlu0 %v3594, 127
    %v3621 = vpop.permute.xlu0 %3620
    %3622 = vrot.lane.b32.xlu0 %v3602, 127
    %v3623 = vpop.permute.xlu0 %3622
    %3624 = vrot.lane.b32.xlu0 %v3601, 127
    %v3625 = vpop.permute.xlu0 %3624
    %3626 = vrot.lane.b32.xlu0 %v3603, 127
    %v3627 = vpop.permute.xlu0 %3626
    %3628 = vrot.lane.b32.xlu0 %v3611, 127
    %v3629 = vpop.permute.xlu0 %3628
    %3630 = vrot.lane.b32.xlu0 %v3619, 127
    %v3631 = vpop.permute.xlu0 %3630
    %3632 = vrot.lane.b32.xlu0 %v3618, 127
    %v3633 = vpop.permute.xlu0 %3632
    %v3634 = vsel %vm426, %v3621, %v3623
    %v3635 = vsel %vm426, %v3623, %v3625
    %v3636 = vsel %vm426, %v3625, %v3627
    %v3637 = vsel %vm426, %v3627, %v3629
    %v3638 = vsel %vm426, %v3629, %v3631
    %v3639 = vsel %vm426, %v3631, %v3633
    %v3647 = vmax.f32 %v3532, %v3634
    %v3648 = vmax.f32 %v3533, %v3635
    %v3649 = vmax.f32 %v3534, %v3636
    %v3650 = vmax.f32 %v3535, %v3637
    %v3651 = vmax.f32 %v3536, %v3638
    %v3652 = vmax.f32 %v3537, %v3639
    %v3653 = vmax.f32 %v3538, %v3633
    %3654 = vrot.lane.b32.xlu0 %v3583, 127
    %v3655 = vpop.permute.xlu0 %3654
    %3656 = vrot.lane.b32.xlu0 %v3584, 127
    %v3657 = vpop.permute.xlu0 %3656
    %v3658 = vrot.slane %v3655, 2
    %v3659 = vrot.slane %v3657, 2
    %v3660 = vsel %vm2090, %v3658, %v3659
    %v3661 = vsel %vm426, %v3655, %v3660
    %v3662 = vsel %vm426, %v3657, %v3659
    %v3665 = vmax.f32 %v3583, %v3661
    %v3666 = vmax.f32 %v3584, %v3662
    %v3669 = vcombine.high %v3665, %v3665
    %v3671 = vunpack.c.l.s4 1983009808
    %v3672 = vunpack.c.0.s8 %v3671
    %v3673 = vlaneseq
    %v3674 = vshrl.u32 %v3673, 7
    %v3675 = vsub.s32 %v3672, %v3674
    %v3676 = vrot.slane %v3665, %v3675
    %v3678 = vunpack.c.l.s4 1983009808
    %v3679 = vunpack.c.0.s8 %v3678
    %v3680 = vlaneseq
    %v3681 = vshrl.u32 %v3680, 7
    %v3682 = vsub.s32 %v3679, %v3681
    %v3683 = vrot.slane %v3669, %v3682
    %v3684 = vcombine.high %v3676, %v3676
    %v3685 = vcombine.high %v3683, %v3683
    %v3686 = vcombine.high %v3666, %v3666
    %v3688 = vunpack.c.l.s4 1983009808
    %v3689 = vunpack.c.0.s8 %v3688
    %v3690 = vlaneseq
    %v3691 = vshrl.u32 %v3690, 7
    %v3692 = vsub.s32 %v3689, %v3691
    %v3693 = vrot.slane %v3666, %v3692
    %v3695 = vunpack.c.l.s4 1983009808
    %v3696 = vunpack.c.0.s8 %v3695
    %v3697 = vlaneseq
    %v3698 = vshrl.u32 %v3697, 7
    %v3699 = vsub.s32 %v3696, %v3698
    %v3700 = vrot.slane %v3686, %v3699
    %v3701 = vcombine.high %v3693, %v3693
    %3702 = vrot.lane.b32.xlu0 %v3676, 100
    %v3703 = vpop.permute.xlu0 %3702
    %3704 = vrot.lane.b32.xlu0 %v3684, 100
    %v3705 = vpop.permute.xlu0 %3704
    %3706 = vrot.lane.b32.xlu0 %v3683, 100
    %v3707 = vpop.permute.xlu0 %3706
    %3708 = vrot.lane.b32.xlu0 %v3685, 100
    %v3709 = vpop.permute.xlu0 %3708
    %3710 = vrot.lane.b32.xlu0 %v3693, 100
    %v3711 = vpop.permute.xlu0 %3710
    %3712 = vrot.lane.b32.xlu0 %v3701, 100
    %v3713 = vpop.permute.xlu0 %3712
    %3714 = vrot.lane.b32.xlu0 %v3700, 100
    %v3715 = vpop.permute.xlu0 %3714
    %v3716 = vsel %vm867, %v3703, %v3705
    %v3717 = vsel %vm867, %v3705, %v3707
    %v3718 = vsel %vm867, %v3707, %v3709
    %v3719 = vsel %vm867, %v3709, %v3711
    %v3720 = vsel %vm867, %v3711, %v3713
    %v3721 = vsel %vm867, %v3713, %v3715
    %v3729 = vmax.f32 %v3647, %v3716
    %v3730 = vmax.f32 %v3648, %v3717
    %v3731 = vmax.f32 %v3649, %v3718
    %v3732 = vmax.f32 %v3650, %v3719
    %v3733 = vmax.f32 %v3651, %v3720
    %v3734 = vmax.f32 %v3652, %v3721
    %v3735 = vmax.f32 %v3653, %v3715
    %v3736 = vld [vmem:[%s3] sm:$0xff]
    %v3737 = vld [vmem:[%s3 + $0x8] sm:$0xff]
    %v3738 = vld [vmem:[%s3 + $0x10] sm:$0xff]
    %v3739 = vld [vmem:[%s3 + $0x18] sm:$0xff]
    %v3740 = vld [vmem:[%s3 + $0x20] sm:$0xff]
    %v3741 = vld [vmem:[%s3 + $0x28] sm:$0xff]
    %v3742 = vld [vmem:[%s3 + $0x30] sm:$0xff]
    %v3743 = vld [vmem:[%s3 + $0x38] sm:$0xff]
    %v3744 = vld [vmem:[%s3 + $0x40] sm:$0xff]
    %v3745 = vld [vmem:[%s3 + $0x48] sm:$0xff]
    %v3746 = vld [vmem:[%s3 + $0x50] sm:$0xff]
    %v3747 = vld [vmem:[%s3 + $0x58] sm:$0xff]
    %v3748 = vld [vmem:[%s3 + $0x60] sm:$0xff]
    %v3749 = vld [vmem:[%s3 + $0x68] sm:$0xff]
    %v3750 = vld [vmem:[%s3 + $0x70] sm:$0xff]
    %v3751 = vld [vmem:[%s3 + $0x78] sm:$0xff]
    %v3752 = vld [vmem:[%s3 + $0x80] sm:$0xff]
    %v3753 = vld [vmem:[%s3 + $0x88] sm:$0xff]
    %v3754 = vld [vmem:[%s3 + $0x90] sm:$0xff]
    %v3755 = vld [vmem:[%s3 + $0x98] sm:$0xff]
    %v3756 = vld [vmem:[%s3 + $0xa0] sm:$0xff]
    %v3757 = vld [vmem:[%s3 + $0xa8] sm:$0xff]
    %v3758 = vld [vmem:[%s3 + $0xb0] sm:$0xff]
    %v3759 = vld [vmem:[%s3 + $0xb8] sm:$0xff]
    %v3760 = vld [vmem:[%s3 + $0xc0] sm:$0xff]
    %v3761 = vld [vmem:[%s3 + $0xc8] sm:$0xff]
    %v3762 = vld [vmem:[%s3 + $0xd0] sm:$0xff]
    %v3763 = vld [vmem:[%s3 + $0xd8] sm:$0xff]
    %v3764 = vld [vmem:[%s3 + $0xe0] sm:$0xff]
    %v3765 = vld [vmem:[%s3 + $0xe8] sm:$0xff]
    %v3766 = vld [vmem:[%s3 + $0xf0] sm:$0xff]
    %v3767 = vld [vmem:[%s3 + $0xf8] sm:$0xff]
    %v3768 = vld [vmem:[%s3 + $0x100] sm:$0xff]
    %v3769 = vld [vmem:[%s3 + $0x108] sm:$0xff]
    %v3770 = vld [vmem:[%s3 + $0x110] sm:$0xff]
    %v3771 = vld [vmem:[%s3 + $0x118] sm:$0xff]
    %v3772 = vld [vmem:[%s3 + $0x120] sm:$0xff]
    %v3773 = vld [vmem:[%s3 + $0x128] sm:$0xff]
    %v3774 = vld [vmem:[%s3 + $0x130] sm:$0xff]
    %v3775 = vld [vmem:[%s3 + $0x138] sm:$0xff]
    %v3776 = vld [vmem:[%s3 + $0x140] sm:$0xff]
    %v3777 = vld [vmem:[%s3 + $0x148] sm:$0xff]
    %v3778 = vld [vmem:[%s3 + $0x150] sm:$0xff]
    %v3779 = vld [vmem:[%s3 + $0x158] sm:$0xff]
    %v3780 = vld [vmem:[%s3 + $0x160] sm:$0xff]
    %v3781 = vld [vmem:[%s3 + $0x168] sm:$0xff]
    %v3782 = vld [vmem:[%s3 + $0x170] sm:$0xff]
    %v3783 = vld [vmem:[%s3 + $0x178] sm:$0xff]
    %v3784 = vld [vmem:[%s3 + $0x180] sm:$0xff]
    %v3785 = vld [vmem:[%s3 + $0x188] sm:$0xff]
    %v3786 = vld [vmem:[%s3 + $0x190] sm:$0xff]
    %v3787 = vld [vmem:[%s3 + $0x198] sm:$0xff]
    %v3788 = vld [vmem:[%s3 + $0x1a0] sm:$0xff]
    %v3789 = vld [vmem:[%s3 + $0x1a8] sm:$0xff]
    %v3790 = vld [vmem:[%s3 + $0x1b0] sm:$0xff]
    %v3791 = vld [vmem:[%s3 + $0x1b8] sm:$0xff]
    %v3792 = vld [vmem:[%s3 + $0x1c0] sm:$0xff]
    %v3793 = vld [vmem:[%s3 + $0x1c8] sm:$0xff]
    %v3794 = vld [vmem:[%s3 + $0x1d0] sm:$0xff]
    %v3795 = vld [vmem:[%s3 + $0x1d8] sm:$0xff]
    %v3796 = vld [vmem:[%s3 + $0x1e0] sm:$0xff]
    %v3797 = vld [vmem:[%s3 + $0x1e8] sm:$0xff]
    %v3798 = vld [vmem:[%s3 + $0x1f0] sm:$0xff]
    %v3799 = vld [vmem:[%s3 + $0x1f8] sm:$0xff]
    %v3800 = vld [vmem:[%s3 + $0x200] sm:$0xff]
    %v3801 = vld [vmem:[%s3 + $0x208] sm:$0xff]
    %v3802 = vld [vmem:[%s3 + $0x210] sm:$0xff]
    %v3803 = vld [vmem:[%s3 + $0x218] sm:$0xff]
    %v3804 = vld [vmem:[%s3 + $0x220] sm:$0xff]
    %v3805 = vld [vmem:[%s3 + $0x228] sm:$0xff]
    %v3806 = vld [vmem:[%s3 + $0x230] sm:$0xff]
    %v3807 = vld [vmem:[%s3 + $0x238] sm:$0xff]
    %v3808 = vld [vmem:[%s3 + $0x240] sm:$0xff]
    %v3809 = vld [vmem:[%s3 + $0x248] sm:$0xff]
    %v3810 = vld [vmem:[%s3 + $0x250] sm:$0xff]
    %v3811 = vld [vmem:[%s3 + $0x258] sm:$0xff]
    %v3812 = vld [vmem:[%s3 + $0x260] sm:$0xff]
    %v3813 = vld [vmem:[%s3 + $0x268] sm:$0xff]
    %v3814 = vld [vmem:[%s3 + $0x270] sm:$0xff]
    %v3815 = vld [vmem:[%s3 + $0x278] sm:$0xff]
    %v3816 = vld [vmem:[%s3 + $0x280] sm:$0xff]
    %v3817 = vld [vmem:[%s3 + $0x288] sm:$0xff]
    %v3818 = vld [vmem:[%s3 + $0x290] sm:$0xff]
    %v3819 = vld [vmem:[%s3 + $0x298] sm:$0xff]
    %v3820 = vld [vmem:[%s3 + $0x2a0] sm:$0xff]
    %v3821 = vld [vmem:[%s3 + $0x2a8] sm:$0xff]
    %v3822 = vld [vmem:[%s3 + $0x2b0] sm:$0xff]
    %v3823 = vld [vmem:[%s3 + $0x2b8] sm:$0xff]
    %v3824 = vld [vmem:[%s3 + $0x2c0] sm:$0xff]
    %v3825 = vld [vmem:[%s3 + $0x2c8] sm:$0xff]
    %v3826 = vld [vmem:[%s3 + $0x2d0] sm:$0xff]
    %v3827 = vld [vmem:[%s3 + $0x2d8] sm:$0xff]
    %v3828 = vld [vmem:[%s3 + $0x2e0] sm:$0xff]
    %v3829 = vld [vmem:[%s3 + $0x2e8] sm:$0xff]
    %v3830 = vld [vmem:[%s3 + $0x2f0] sm:$0xff]
    %v3831 = vld [vmem:[%s3 + $0x2f8] sm:$0xff]
    %v3832 = vld [vmem:[%s3 + $0x300] sm:$0xff]
    %v3833 = vld [vmem:[%s3 + $0x308] sm:$0xff]
    %3932 = vrot.lane.b32.xlu0 %v3736, 64
    %v3933 = vpop.permute.xlu0 %3932
    %3934 = vrot.lane.b32.xlu0 %v3737, 64
    %v3935 = vpop.permute.xlu0 %3934
    %3936 = vrot.lane.b32.xlu0 %v3738, 64
    %v3937 = vpop.permute.xlu0 %3936
    %3938 = vrot.lane.b32.xlu0 %v3739, 64
    %v3939 = vpop.permute.xlu0 %3938
    %3940 = vrot.lane.b32.xlu0 %v3740, 64
    %v3941 = vpop.permute.xlu0 %3940
    %3942 = vrot.lane.b32.xlu0 %v3741, 64
    %v3943 = vpop.permute.xlu0 %3942
    %3944 = vrot.lane.b32.xlu0 %v3742, 64
    %v3945 = vpop.permute.xlu0 %3944
    %3946 = vrot.lane.b32.xlu0 %v3743, 64
    %v3947 = vpop.permute.xlu0 %3946
    %3948 = vrot.lane.b32.xlu0 %v3744, 64
    %v3949 = vpop.permute.xlu0 %3948
    %3950 = vrot.lane.b32.xlu0 %v3745, 64
    %v3951 = vpop.permute.xlu0 %3950
    %3952 = vrot.lane.b32.xlu0 %v3746, 64
    %v3953 = vpop.permute.xlu0 %3952
    %3954 = vrot.lane.b32.xlu0 %v3747, 64
    %v3955 = vpop.permute.xlu0 %3954
    %3956 = vrot.lane.b32.xlu0 %v3748, 64
    %v3957 = vpop.permute.xlu0 %3956
    %3958 = vrot.lane.b32.xlu0 %v3749, 64
    %v3959 = vpop.permute.xlu0 %3958
    %3960 = vrot.lane.b32.xlu0 %v3750, 64
    %v3961 = vpop.permute.xlu0 %3960
    %3962 = vrot.lane.b32.xlu0 %v3751, 64
    %v3963 = vpop.permute.xlu0 %3962
    %3964 = vrot.lane.b32.xlu0 %v3752, 64
    %v3965 = vpop.permute.xlu0 %3964
    %3966 = vrot.lane.b32.xlu0 %v3753, 64
    %v3967 = vpop.permute.xlu0 %3966
    %3968 = vrot.lane.b32.xlu0 %v3754, 64
    %v3969 = vpop.permute.xlu0 %3968
    %3970 = vrot.lane.b32.xlu0 %v3755, 64
    %v3971 = vpop.permute.xlu0 %3970
    %3972 = vrot.lane.b32.xlu0 %v3756, 64
    %v3973 = vpop.permute.xlu0 %3972
    %3974 = vrot.lane.b32.xlu0 %v3757, 64
    %v3975 = vpop.permute.xlu0 %3974
    %3976 = vrot.lane.b32.xlu0 %v3758, 64
    %v3977 = vpop.permute.xlu0 %3976
    %3978 = vrot.lane.b32.xlu0 %v3759, 64
    %v3979 = vpop.permute.xlu0 %3978
    %3980 = vrot.lane.b32.xlu0 %v3760, 64
    %v3981 = vpop.permute.xlu0 %3980
    %3982 = vrot.lane.b32.xlu0 %v3761, 64
    %v3983 = vpop.permute.xlu0 %3982
    %3984 = vrot.lane.b32.xlu0 %v3762, 64
    %v3985 = vpop.permute.xlu0 %3984
    %3986 = vrot.lane.b32.xlu0 %v3763, 64
    %v3987 = vpop.permute.xlu0 %3986
    %3988 = vrot.lane.b32.xlu0 %v3764, 64
    %v3989 = vpop.permute.xlu0 %3988
    %3990 = vrot.lane.b32.xlu0 %v3765, 64
    %v3991 = vpop.permute.xlu0 %3990
    %3992 = vrot.lane.b32.xlu0 %v3766, 64
    %v3993 = vpop.permute.xlu0 %3992
    %3994 = vrot.lane.b32.xlu0 %v3767, 64
    %v3995 = vpop.permute.xlu0 %3994
    %3996 = vrot.lane.b32.xlu0 %v3768, 64
    %v3997 = vpop.permute.xlu0 %3996
    %3998 = vrot.lane.b32.xlu0 %v3769, 64
    %v3999 = vpop.permute.xlu0 %3998
    %4000 = vrot.lane.b32.xlu0 %v3770, 64
    %v4001 = vpop.permute.xlu0 %4000
    %4002 = vrot.lane.b32.xlu0 %v3771, 64
    %v4003 = vpop.permute.xlu0 %4002
    %4004 = vrot.lane.b32.xlu0 %v3772, 64
    %v4005 = vpop.permute.xlu0 %4004
    %4006 = vrot.lane.b32.xlu0 %v3773, 64
    %v4007 = vpop.permute.xlu0 %4006
    %4008 = vrot.lane.b32.xlu0 %v3774, 64
    %v4009 = vpop.permute.xlu0 %4008
    %4010 = vrot.lane.b32.xlu0 %v3775, 64
    %v4011 = vpop.permute.xlu0 %4010
    %4012 = vrot.lane.b32.xlu0 %v3776, 64
    %v4013 = vpop.permute.xlu0 %4012
    %4014 = vrot.lane.b32.xlu0 %v3777, 64
    %v4015 = vpop.permute.xlu0 %4014
    %4016 = vrot.lane.b32.xlu0 %v3778, 64
    %v4017 = vpop.permute.xlu0 %4016
    %4018 = vrot.lane.b32.xlu0 %v3779, 64
    %v4019 = vpop.permute.xlu0 %4018
    %4020 = vrot.lane.b32.xlu0 %v3780, 64
    %v4021 = vpop.permute.xlu0 %4020
    %4022 = vrot.lane.b32.xlu0 %v3781, 64
    %v4023 = vpop.permute.xlu0 %4022
    %4024 = vrot.lane.b32.xlu0 %v3782, 64
    %v4025 = vpop.permute.xlu0 %4024
    %4026 = vrot.lane.b32.xlu0 %v3783, 64
    %v4027 = vpop.permute.xlu0 %4026
    %4028 = vrot.lane.b32.xlu0 %v3784, 64
    %v4029 = vpop.permute.xlu0 %4028
    %4030 = vrot.lane.b32.xlu0 %v3785, 64
    %v4031 = vpop.permute.xlu0 %4030
    %4032 = vrot.lane.b32.xlu0 %v3786, 64
    %v4033 = vpop.permute.xlu0 %4032
    %4034 = vrot.lane.b32.xlu0 %v3787, 64
    %v4035 = vpop.permute.xlu0 %4034
    %4036 = vrot.lane.b32.xlu0 %v3788, 64
    %v4037 = vpop.permute.xlu0 %4036
    %4038 = vrot.lane.b32.xlu0 %v3789, 64
    %v4039 = vpop.permute.xlu0 %4038
    %4040 = vrot.lane.b32.xlu0 %v3790, 64
    %v4041 = vpop.permute.xlu0 %4040
    %4042 = vrot.lane.b32.xlu0 %v3791, 64
    %v4043 = vpop.permute.xlu0 %4042
    %4044 = vrot.lane.b32.xlu0 %v3792, 64
    %v4045 = vpop.permute.xlu0 %4044
    %4046 = vrot.lane.b32.xlu0 %v3793, 64
    %v4047 = vpop.permute.xlu0 %4046
    %4048 = vrot.lane.b32.xlu0 %v3794, 64
    %v4049 = vpop.permute.xlu0 %4048
    %4050 = vrot.lane.b32.xlu0 %v3795, 64
    %v4051 = vpop.permute.xlu0 %4050
    %4052 = vrot.lane.b32.xlu0 %v3796, 64
    %v4053 = vpop.permute.xlu0 %4052
    %4054 = vrot.lane.b32.xlu0 %v3797, 64
    %v4055 = vpop.permute.xlu0 %4054
    %4056 = vrot.lane.b32.xlu0 %v3798, 64
    %v4057 = vpop.permute.xlu0 %4056
    %4058 = vrot.lane.b32.xlu0 %v3799, 64
    %v4059 = vpop.permute.xlu0 %4058
    %4060 = vrot.lane.b32.xlu0 %v3800, 64
    %v4061 = vpop.permute.xlu0 %4060
    %4062 = vrot.lane.b32.xlu0 %v3801, 64
    %v4063 = vpop.permute.xlu0 %4062
    %4064 = vrot.lane.b32.xlu0 %v3802, 64
    %v4065 = vpop.permute.xlu0 %4064
    %4066 = vrot.lane.b32.xlu0 %v3803, 64
    %v4067 = vpop.permute.xlu0 %4066
    %4068 = vrot.lane.b32.xlu0 %v3804, 64
    %v4069 = vpop.permute.xlu0 %4068
    %4070 = vrot.lane.b32.xlu0 %v3805, 64
    %v4071 = vpop.permute.xlu0 %4070
    %4072 = vrot.lane.b32.xlu0 %v3806, 64
    %v4073 = vpop.permute.xlu0 %4072
    %4074 = vrot.lane.b32.xlu0 %v3807, 64
    %v4075 = vpop.permute.xlu0 %4074
    %4076 = vrot.lane.b32.xlu0 %v3808, 64
    %v4077 = vpop.permute.xlu0 %4076
    %4078 = vrot.lane.b32.xlu0 %v3809, 64
    %v4079 = vpop.permute.xlu0 %4078
    %4080 = vrot.lane.b32.xlu0 %v3810, 64
    %v4081 = vpop.permute.xlu0 %4080
    %4082 = vrot.lane.b32.xlu0 %v3811, 64
    %v4083 = vpop.permute.xlu0 %4082
    %4084 = vrot.lane.b32.xlu0 %v3812, 64
    %v4085 = vpop.permute.xlu0 %4084
    %4086 = vrot.lane.b32.xlu0 %v3813, 64
    %v4087 = vpop.permute.xlu0 %4086
    %4088 = vrot.lane.b32.xlu0 %v3814, 64
    %v4089 = vpop.permute.xlu0 %4088
    %4090 = vrot.lane.b32.xlu0 %v3815, 64
    %v4091 = vpop.permute.xlu0 %4090
    %4092 = vrot.lane.b32.xlu0 %v3816, 64
    %v4093 = vpop.permute.xlu0 %4092
    %4094 = vrot.lane.b32.xlu0 %v3817, 64
    %v4095 = vpop.permute.xlu0 %4094
    %4096 = vrot.lane.b32.xlu0 %v3818, 64
    %v4097 = vpop.permute.xlu0 %4096
    %4098 = vrot.lane.b32.xlu0 %v3819, 64
    %v4099 = vpop.permute.xlu0 %4098
    %4100 = vrot.lane.b32.xlu0 %v3820, 64
    %v4101 = vpop.permute.xlu0 %4100
    %4102 = vrot.lane.b32.xlu0 %v3821, 64
    %v4103 = vpop.permute.xlu0 %4102
    %4104 = vrot.lane.b32.xlu0 %v3822, 64
    %v4105 = vpop.permute.xlu0 %4104
    %4106 = vrot.lane.b32.xlu0 %v3823, 64
    %v4107 = vpop.permute.xlu0 %4106
    %4108 = vrot.lane.b32.xlu0 %v3824, 64
    %v4109 = vpop.permute.xlu0 %4108
    %4110 = vrot.lane.b32.xlu0 %v3825, 64
    %v4111 = vpop.permute.xlu0 %4110
    %4112 = vrot.lane.b32.xlu0 %v3826, 64
    %v4113 = vpop.permute.xlu0 %4112
    %4114 = vrot.lane.b32.xlu0 %v3827, 64
    %v4115 = vpop.permute.xlu0 %4114
    %4116 = vrot.lane.b32.xlu0 %v3828, 64
    %v4117 = vpop.permute.xlu0 %4116
    %4118 = vrot.lane.b32.xlu0 %v3829, 64
    %v4119 = vpop.permute.xlu0 %4118
    %4120 = vrot.lane.b32.xlu0 %v3830, 64
    %v4121 = vpop.permute.xlu0 %4120
    %4122 = vrot.lane.b32.xlu0 %v3831, 64
    %v4123 = vpop.permute.xlu0 %4122
    %4124 = vrot.lane.b32.xlu0 %v3832, 64
    %v4125 = vpop.permute.xlu0 %4124
    %4126 = vrot.lane.b32.xlu0 %v3833, 64
    %v4127 = vpop.permute.xlu0 %4126
    %v4227 = vsel %vm2265, %v3735, 0
    %4229 = vmatprep.subr.mxu0 0.0
    %4230 = vmatpush1.msra.mxu0 %v3963
    %4231 = vmatprep.subr.mxu0 0.0
    %4232 = vmatpush1.msra.mxu0 %v3961
    %4233 = vmatprep.subr.mxu0 0.0
    %4234 = vmatpush1.msra.mxu0 %v3959
    %4235 = vmatprep.subr.mxu0 0.0
    %4236 = vmatpush1.msra.mxu0 %v3957
    %4237 = vmatprep.subr.mxu0 0.0
    %4238 = vmatpush1.msra.mxu0 %v3955
    %4239 = vmatprep.subr.mxu0 0.0
    %4240 = vmatpush1.msra.mxu0 %v3953
    %4241 = vmatprep.subr.mxu0 0.0
    %4242 = vmatpush1.msra.mxu0 %v3951
    %4243 = vmatprep.subr.mxu0 0.0
    %4244 = vmatpush1.msra.mxu0 %v3949
    %4245 = vmatprep.subr.mxu0 0.0
    %4246 = vmatpush1.msra.mxu0 %v3947
    %4247 = vmatprep.subr.mxu0 0.0
    %4248 = vmatpush1.msra.mxu0 %v3945
    %4249 = vmatprep.subr.mxu0 0.0
    %4250 = vmatpush1.msra.mxu0 %v3943
    %4251 = vmatprep.subr.mxu0 0.0
    %4252 = vmatpush1.msra.mxu0 %v3941
    %4253 = vmatprep.subr.mxu0 0.0
    %4254 = vmatpush1.msra.mxu0 %v3939
    %4255 = vmatprep.subr.mxu0 0.0
    %4256 = vmatpush1.msra.mxu0 %v3937
    %4257 = vmatprep.subr.mxu0 0.0
    %4258 = vmatpush1.msra.mxu0 %v3935
    %4259 = vmatprep.subr.mxu0 0.0
    %4260 = vmatpush1.msra.mxu0 %v3933
    %4261 = vmatprep.subr.mxu0 0.0
    %4262 = vmatpush2.msra.mxu0 %v3995
    %4263 = vmatprep.subr.mxu0 0.0
    %4264 = vmatpush2.msra.mxu0 %v3993
    %4265 = vmatprep.subr.mxu0 0.0
    %4266 = vmatpush2.msra.mxu0 %v3991
    %4267 = vmatprep.subr.mxu0 0.0
    %4268 = vmatpush2.msra.mxu0 %v3989
    %4269 = vmatprep.subr.mxu0 0.0
    %4270 = vmatpush2.msra.mxu0 %v3987
    %4271 = vmatprep.subr.mxu0 0.0
    %4272 = vmatpush2.msra.mxu0 %v3985
    %4273 = vmatprep.subr.mxu0 0.0
    %4274 = vmatpush2.msra.mxu0 %v3983
    %4275 = vmatprep.subr.mxu0 0.0
    %4276 = vmatpush2.msra.mxu0 %v3981
    %4277 = vmatprep.subr.mxu0 0.0
    %4278 = vmatpush2.msra.mxu0 %v3979
    %4279 = vmatprep.subr.mxu0 0.0
    %4280 = vmatpush2.msra.mxu0 %v3977
    %4281 = vmatprep.subr.mxu0 0.0
    %4282 = vmatpush2.msra.mxu0 %v3975
    %4283 = vmatprep.subr.mxu0 0.0
    %4284 = vmatpush2.msra.mxu0 %v3973
    %4285 = vmatprep.subr.mxu0 0.0
    %4286 = vmatpush2.msra.mxu0 %v3971
    %4287 = vmatprep.subr.mxu0 0.0
    %4288 = vmatpush2.msra.mxu0 %v3969
    %4289 = vmatprep.subr.mxu0 0.0
    %4290 = vmatpush2.msra.mxu0 %v3967
    %4291 = vmatprep.subr.mxu0 0.0
    %4292 = vmatpush2.msra.mxu0 %v3965
    %4293 = vmatprep.mubr.f32.mxu0 %v3730
    %4294 = vmatmul.mubr.f32.gmra.mxu0 %v3729
    %v4295 = vpop.f32.mrf.mxu0
    %v4296 = vadd.f32 0.0, %v4295
    %v4297 = vpop.f32.mrf.mxu0
    %4298 = vdwg.mxu0
    %4299 = vmatprep.subr.mxu0 0.0
    %4300 = vmatpush1.msra.mxu0 %v4027
    %4301 = vmatprep.subr.mxu0 0.0
    %4302 = vmatpush1.msra.mxu0 %v4025
    %4303 = vmatprep.subr.mxu0 0.0
    %4304 = vmatpush1.msra.mxu0 %v4023
    %4305 = vmatprep.subr.mxu0 0.0
    %4306 = vmatpush1.msra.mxu0 %v4021
    %4307 = vmatprep.subr.mxu0 0.0
    %4308 = vmatpush1.msra.mxu0 %v4019
    %4309 = vmatprep.subr.mxu0 0.0
    %4310 = vmatpush1.msra.mxu0 %v4017
    %4311 = vmatprep.subr.mxu0 0.0
    %4312 = vmatpush1.msra.mxu0 %v4015
    %4313 = vmatprep.subr.mxu0 0.0
    %4314 = vmatpush1.msra.mxu0 %v4013
    %4315 = vmatprep.subr.mxu0 0.0
    %4316 = vmatpush1.msra.mxu0 %v4011
    %4317 = vmatprep.subr.mxu0 0.0
    %4318 = vmatpush1.msra.mxu0 %v4009
    %4319 = vmatprep.subr.mxu0 0.0
    %4320 = vmatpush1.msra.mxu0 %v4007
    %4321 = vmatprep.subr.mxu0 0.0
    %4322 = vmatpush1.msra.mxu0 %v4005
    %4323 = vmatprep.subr.mxu0 0.0
    %4324 = vmatpush1.msra.mxu0 %v4003
    %4325 = vmatprep.subr.mxu0 0.0
    %4326 = vmatpush1.msra.mxu0 %v4001
    %4327 = vmatprep.subr.mxu0 0.0
    %4328 = vmatpush1.msra.mxu0 %v3999
    %4329 = vmatprep.subr.mxu0 0.0
    %4330 = vmatpush1.msra.mxu0 %v3997
    %4331 = vmatprep.subr.mxu0 0.0
    %4332 = vmatpush2.msra.mxu0 %v4059
    %4333 = vmatprep.subr.mxu0 0.0
    %4334 = vmatpush2.msra.mxu0 %v4057
    %4335 = vmatprep.subr.mxu0 0.0
    %4336 = vmatpush2.msra.mxu0 %v4055
    %4337 = vmatprep.subr.mxu0 0.0
    %4338 = vmatpush2.msra.mxu0 %v4053
    %4339 = vmatprep.subr.mxu0 0.0
    %4340 = vmatpush2.msra.mxu0 %v4051
    %4341 = vmatprep.subr.mxu0 0.0
    %4342 = vmatpush2.msra.mxu0 %v4049
    %4343 = vmatprep.subr.mxu0 0.0
    %4344 = vmatpush2.msra.mxu0 %v4047
    %4345 = vmatprep.subr.mxu0 0.0
    %4346 = vmatpush2.msra.mxu0 %v4045
    %4347 = vmatprep.subr.mxu0 0.0
    %4348 = vmatpush2.msra.mxu0 %v4043
    %4349 = vmatprep.subr.mxu0 0.0
    %4350 = vmatpush2.msra.mxu0 %v4041
    %4351 = vmatprep.subr.mxu0 0.0
    %4352 = vmatpush2.msra.mxu0 %v4039
    %4353 = vmatprep.subr.mxu0 0.0
    %4354 = vmatpush2.msra.mxu0 %v4037
    %4355 = vmatprep.subr.mxu0 0.0
    %4356 = vmatpush2.msra.mxu0 %v4035
    %4357 = vmatprep.subr.mxu0 0.0
    %4358 = vmatpush2.msra.mxu0 %v4033
    %4359 = vmatprep.subr.mxu0 0.0
    %4360 = vmatpush2.msra.mxu0 %v4031
    %4361 = vmatprep.subr.mxu0 0.0
    %4362 = vmatpush2.msra.mxu0 %v4029
    %4363 = vmatprep.mubr.f32.mxu0 %v3732
    %4364 = vmatmul.mubr.f32.gmra.mxu0 %v3731
    %v4365 = vpop.f32.mrf.mxu0
    %v4366 = vadd.f32 %v4296, %v4365
    %v4367 = vpop.f32.mrf.mxu0
    %4368 = vdwg.mxu0
    %4369 = vmatprep.subr.mxu0 0.0
    %4370 = vmatpush1.msra.mxu0 %v4091
    %4371 = vmatprep.subr.mxu0 0.0
    %4372 = vmatpush1.msra.mxu0 %v4089
    %4373 = vmatprep.subr.mxu0 0.0
    %4374 = vmatpush1.msra.mxu0 %v4087
    %4375 = vmatprep.subr.mxu0 0.0
    %4376 = vmatpush1.msra.mxu0 %v4085
    %4377 = vmatprep.subr.mxu0 0.0
    %4378 = vmatpush1.msra.mxu0 %v4083
    %4379 = vmatprep.subr.mxu0 0.0
    %4380 = vmatpush1.msra.mxu0 %v4081
    %4381 = vmatprep.subr.mxu0 0.0
    %4382 = vmatpush1.msra.mxu0 %v4079
    %4383 = vmatprep.subr.mxu0 0.0
    %4384 = vmatpush1.msra.mxu0 %v4077
    %4385 = vmatprep.subr.mxu0 0.0
    %4386 = vmatpush1.msra.mxu0 %v4075
    %4387 = vmatprep.subr.mxu0 0.0
    %4388 = vmatpush1.msra.mxu0 %v4073
    %4389 = vmatprep.subr.mxu0 0.0
    %4390 = vmatpush1.msra.mxu0 %v4071
    %4391 = vmatprep.subr.mxu0 0.0
    %4392 = vmatpush1.msra.mxu0 %v4069
    %4393 = vmatprep.subr.mxu0 0.0
    %4394 = vmatpush1.msra.mxu0 %v4067
    %4395 = vmatprep.subr.mxu0 0.0
    %4396 = vmatpush1.msra.mxu0 %v4065
    %4397 = vmatprep.subr.mxu0 0.0
    %4398 = vmatpush1.msra.mxu0 %v4063
    %4399 = vmatprep.subr.mxu0 0.0
    %4400 = vmatpush1.msra.mxu0 %v4061
    %4401 = vmatprep.subr.mxu0 0.0
    %4402 = vmatpush2.msra.mxu0 %v4123
    %4403 = vmatprep.subr.mxu0 0.0
    %4404 = vmatpush2.msra.mxu0 %v4121
    %4405 = vmatprep.subr.mxu0 0.0
    %4406 = vmatpush2.msra.mxu0 %v4119
    %4407 = vmatprep.subr.mxu0 0.0
    %4408 = vmatpush2.msra.mxu0 %v4117
    %4409 = vmatprep.subr.mxu0 0.0
    %4410 = vmatpush2.msra.mxu0 %v4115
    %4411 = vmatprep.subr.mxu0 0.0
    %4412 = vmatpush2.msra.mxu0 %v4113
    %4413 = vmatprep.subr.mxu0 0.0
    %4414 = vmatpush2.msra.mxu0 %v4111
    %4415 = vmatprep.subr.mxu0 0.0
    %4416 = vmatpush2.msra.mxu0 %v4109
    %4417 = vmatprep.subr.mxu0 0.0
    %4418 = vmatpush2.msra.mxu0 %v4107
    %4419 = vmatprep.subr.mxu0 0.0
    %4420 = vmatpush2.msra.mxu0 %v4105
    %4421 = vmatprep.subr.mxu0 0.0
    %4422 = vmatpush2.msra.mxu0 %v4103
    %4423 = vmatprep.subr.mxu0 0.0
    %4424 = vmatpush2.msra.mxu0 %v4101
    %4425 = vmatprep.subr.mxu0 0.0
    %4426 = vmatpush2.msra.mxu0 %v4099
    %4427 = vmatprep.subr.mxu0 0.0
    %4428 = vmatpush2.msra.mxu0 %v4097
    %4429 = vmatprep.subr.mxu0 0.0
    %4430 = vmatpush2.msra.mxu0 %v4095
    %4431 = vmatprep.subr.mxu0 0.0
    %4432 = vmatpush2.msra.mxu0 %v4093
    %4433 = vmatprep.mubr.f32.mxu0 %v3734
    %4434 = vmatmul.mubr.f32.gmra.mxu0 %v3733
    %v4435 = vpop.f32.mrf.mxu0
    %v4436 = vadd.f32 %v4366, %v4435
    %v4437 = vpop.f32.mrf.mxu0
    %4438 = vdwg.mxu0
    %4439 = vmatprep.subr.mxu0 0.0
    %4440 = vmatpush1.msra.mxu0 0.0
    %4441 = vmatprep.subr.mxu0 0.0
    %4442 = vmatpush1.msra.mxu0 0.0
    %4443 = vmatprep.subr.mxu0 0.0
    %4444 = vmatpush1.msra.mxu0 0.0
    %4445 = vmatprep.subr.mxu0 0.0
    %4446 = vmatpush1.msra.mxu0 0.0
    %4447 = vmatprep.subr.mxu0 0.0
    %4448 = vmatpush1.msra.mxu0 0.0
    %4449 = vmatprep.subr.mxu0 0.0
    %4450 = vmatpush1.msra.mxu0 0.0
    %4451 = vmatprep.subr.mxu0 0.0
    %4452 = vmatpush1.msra.mxu0 0.0
    %4453 = vmatprep.subr.mxu0 0.0
    %4454 = vmatpush1.msra.mxu0 0.0
    %4455 = vmatprep.subr.mxu0 0.0
    %4456 = vmatpush1.msra.mxu0 0.0
    %4457 = vmatprep.subr.mxu0 0.0
    %4458 = vmatpush1.msra.mxu0 0.0
    %4459 = vmatprep.subr.mxu0 0.0
    %4460 = vmatpush1.msra.mxu0 0.0
    %4461 = vmatprep.subr.mxu0 0.0
    %4462 = vmatpush1.msra.mxu0 0.0
    %4463 = vmatprep.subr.mxu0 0.0
    %4464 = vmatpush1.msra.mxu0 0.0
    %4465 = vmatprep.subr.mxu0 0.0
    %4466 = vmatpush1.msra.mxu0 0.0
    %4467 = vmatprep.subr.mxu0 0.0
    %4468 = vmatpush1.msra.mxu0 %v4127
    %4469 = vmatprep.subr.mxu0 0.0
    %4470 = vmatpush1.msra.mxu0 %v4125
    %4471 = vmatprep.subr.mxu0 0.0
    %4472 = vmatpush2.msra.mxu0 0.0
    %4473 = vmatprep.subr.mxu0 0.0
    %4474 = vmatpush2.msra.mxu0 0.0
    %4475 = vmatprep.subr.mxu0 0.0
    %4476 = vmatpush2.msra.mxu0 0.0
    %4477 = vmatprep.subr.mxu0 0.0
    %4478 = vmatpush2.msra.mxu0 0.0
    %4479 = vmatprep.subr.mxu0 0.0
    %4480 = vmatpush2.msra.mxu0 0.0
    %4481 = vmatprep.subr.mxu0 0.0
    %4482 = vmatpush2.msra.mxu0 0.0
    %4483 = vmatprep.subr.mxu0 0.0
    %4484 = vmatpush2.msra.mxu0 0.0
    %4485 = vmatprep.subr.mxu0 0.0
    %4486 = vmatpush2.msra.mxu0 0.0
    %4487 = vmatprep.subr.mxu0 0.0
    %4488 = vmatpush2.msra.mxu0 0.0
    %4489 = vmatprep.subr.mxu0 0.0
    %4490 = vmatpush2.msra.mxu0 0.0
    %4491 = vmatprep.subr.mxu0 0.0
    %4492 = vmatpush2.msra.mxu0 0.0
    %4493 = vmatprep.subr.mxu0 0.0
    %4494 = vmatpush2.msra.mxu0 0.0
    %4495 = vmatprep.subr.mxu0 0.0
    %4496 = vmatpush2.msra.mxu0 0.0
    %4497 = vmatprep.subr.mxu0 0.0
    %4498 = vmatpush2.msra.mxu0 0.0
    %4499 = vmatprep.subr.mxu0 0.0
    %4500 = vmatpush2.msra.mxu0 0.0
    %4501 = vmatprep.subr.mxu0 0.0
    %4502 = vmatpush2.msra.mxu0 0.0
    %4503 = vmatprep.mubr.f32.mxu0 0.0
    %4504 = vmatmul.mubr.f32.gmra.mxu0 %v4227
    %v4505 = vpop.f32.mrf.mxu0
    %v4506 = vadd.f32 %v4436, %v4505
    %v4507 = vpop.f32.mrf.mxu0
    %4508 = vdwg.mxu0
    %v4509 = vadd.f32 %v3529, %v4506
    %s4510 = sld [smem:[#allocation7 + $0x3]]
    %v4511 = vstv %s4510
    %v4512 = vadd.f32 %v1943, %v4511
    %v4513 = vadd.f32 %v1944, %v4511
    %v4514 = vadd.f32 %v1945, %v4511
    %v4515 = vadd.f32 %v1946, %v4511
    %v4516 = vadd.f32 %v1947, %v4511
    %v4517 = vadd.f32 %v1948, %v4511
    %v4518 = vadd.f32 %v1949, %v4511
    %v4526 = vcombine.low %v4512, %v4513
    %v4527 = vcombine.low %v4514, %v4515
    %v4529 = vunpack.c.l.s4 1983009808
    %v4530 = vunpack.c.0.s8 %v4529
    %v4531 = vlaneseq
    %v4532 = vshrl.u32 %v4531, 7
    %v4533 = vsub.s32 %v4530, %v4532
    %v4534 = vrot.slane %v4526, %v4533
    %v4536 = vunpack.c.l.s4 1983009808
    %v4537 = vunpack.c.0.s8 %v4536
    %v4538 = vlaneseq
    %v4539 = vshrl.u32 %v4538, 7
    %v4540 = vsub.s32 %v4537, %v4539
    %v4541 = vrot.slane %v4527, %v4540
    %v4542 = vcombine.low %v4534, %v4541
    %v4543 = vcombine.low %v4516, %v4517
    %v4545 = vunpack.c.l.s4 1983009808
    %v4546 = vunpack.c.0.s8 %v4545
    %v4547 = vlaneseq
    %v4548 = vshrl.u32 %v4547, 7
    %v4549 = vsub.s32 %v4546, %v4548
    %v4550 = vrot.slane %v4543, %v4549
    %v4552 = vunpack.c.l.s4 1983009808
    %v4553 = vunpack.c.0.s8 %v4552
    %v4554 = vlaneseq
    %v4555 = vshrl.u32 %v4554, 7
    %v4556 = vsub.s32 %v4553, %v4555
    %v4557 = vrot.slane %v4518, %v4556
    %v4558 = vcombine.low %v4550, %v4557
    %4561 = vst [vmem:[#allocation3] sm:$0xff] %v4542
    %4562 = vst.msk [vmem:[#allocation3 + $0x8] sm:$0x3f] %vm2011, %v4558
    %v4563 = vld [vmem:[#allocation3] sm:$0xff]
    %v4564 = vld [vmem:[#allocation3 + $0x8] sm:$0x3f]
    %v4567 = vcombine.high %v4563, %v4563
    %v4569 = vunpack.c.l.s4 1983009808
    %v4570 = vunpack.c.0.s8 %v4569
    %v4571 = vlaneseq
    %v4572 = vshrl.u32 %v4571, 7
    %v4573 = vsub.s32 %v4570, %v4572
    %v4574 = vrot.slane %v4563, %v4573
    %v4576 = vunpack.c.l.s4 1983009808
    %v4577 = vunpack.c.0.s8 %v4576
    %v4578 = vlaneseq
    %v4579 = vshrl.u32 %v4578, 7
    %v4580 = vsub.s32 %v4577, %v4579
    %v4581 = vrot.slane %v4567, %v4580
    %v4582 = vcombine.high %v4574, %v4574
    %v4583 = vcombine.high %v4581, %v4581
    %v4584 = vcombine.high %v4564, %v4564
    %v4586 = vunpack.c.l.s4 1983009808
    %v4587 = vunpack.c.0.s8 %v4586
    %v4588 = vlaneseq
    %v4589 = vshrl.u32 %v4588, 7
    %v4590 = vsub.s32 %v4587, %v4589
    %v4591 = vrot.slane %v4564, %v4590
    %v4593 = vunpack.c.l.s4 1983009808
    %v4594 = vunpack.c.0.s8 %v4593
    %v4595 = vlaneseq
    %v4596 = vshrl.u32 %v4595, 7
    %v4597 = vsub.s32 %v4594, %v4596
    %v4598 = vrot.slane %v4584, %v4597
    %v4599 = vcombine.high %v4591, %v4591
    %4600 = vrot.lane.b32.xlu0 %v4574, 127
    %v4601 = vpop.permute.xlu0 %4600
    %4602 = vrot.lane.b32.xlu0 %v4582, 127
    %v4603 = vpop.permute.xlu0 %4602
    %4604 = vrot.lane.b32.xlu0 %v4581, 127
    %v4605 = vpop.permute.xlu0 %4604
    %4606 = vrot.lane.b32.xlu0 %v4583, 127
    %v4607 = vpop.permute.xlu0 %4606
    %4608 = vrot.lane.b32.xlu0 %v4591, 127
    %v4609 = vpop.permute.xlu0 %4608
    %4610 = vrot.lane.b32.xlu0 %v4599, 127
    %v4611 = vpop.permute.xlu0 %4610
    %4612 = vrot.lane.b32.xlu0 %v4598, 127
    %v4613 = vpop.permute.xlu0 %4612
    %v4614 = vsel %vm426, %v4601, %v4603
    %v4615 = vsel %vm426, %v4603, %v4605
    %v4616 = vsel %vm426, %v4605, %v4607
    %v4617 = vsel %vm426, %v4607, %v4609
    %v4618 = vsel %vm426, %v4609, %v4611
    %v4619 = vsel %vm426, %v4611, %v4613
    %v4627 = vmax.f32 %v4512, %v4614
    %v4628 = vmax.f32 %v4513, %v4615
    %v4629 = vmax.f32 %v4514, %v4616
    %v4630 = vmax.f32 %v4515, %v4617
    %v4631 = vmax.f32 %v4516, %v4618
    %v4632 = vmax.f32 %v4517, %v4619
    %v4633 = vmax.f32 %v4518, %v4613
    %4634 = vrot.lane.b32.xlu0 %v4563, 127
    %v4635 = vpop.permute.xlu0 %4634
    %4636 = vrot.lane.b32.xlu0 %v4564, 127
    %v4637 = vpop.permute.xlu0 %4636
    %v4638 = vrot.slane %v4635, 2
    %v4639 = vrot.slane %v4637, 2
    %v4640 = vsel %vm2090, %v4638, %v4639
    %v4641 = vsel %vm426, %v4635, %v4640
    %v4642 = vsel %vm426, %v4637, %v4639
    %v4645 = vmax.f32 %v4563, %v4641
    %v4646 = vmax.f32 %v4564, %v4642
    %v4649 = vcombine.high %v4645, %v4645
    %v4651 = vunpack.c.l.s4 1983009808
    %v4652 = vunpack.c.0.s8 %v4651
    %v4653 = vlaneseq
    %v4654 = vshrl.u32 %v4653, 7
    %v4655 = vsub.s32 %v4652, %v4654
    %v4656 = vrot.slane %v4645, %v4655
    %v4658 = vunpack.c.l.s4 1983009808
    %v4659 = vunpack.c.0.s8 %v4658
    %v4660 = vlaneseq
    %v4661 = vshrl.u32 %v4660, 7
    %v4662 = vsub.s32 %v4659, %v4661
    %v4663 = vrot.slane %v4649, %v4662
    %v4664 = vcombine.high %v4656, %v4656
    %v4665 = vcombine.high %v4663, %v4663
    %v4666 = vcombine.high %v4646, %v4646
    %v4668 = vunpack.c.l.s4 1983009808
    %v4669 = vunpack.c.0.s8 %v4668
    %v4670 = vlaneseq
    %v4671 = vshrl.u32 %v4670, 7
    %v4672 = vsub.s32 %v4669, %v4671
    %v4673 = vrot.slane %v4646, %v4672
    %v4675 = vunpack.c.l.s4 1983009808
    %v4676 = vunpack.c.0.s8 %v4675
    %v4677 = vlaneseq
    %v4678 = vshrl.u32 %v4677, 7
    %v4679 = vsub.s32 %v4676, %v4678
    %v4680 = vrot.slane %v4666, %v4679
    %v4681 = vcombine.high %v4673, %v4673
    %4682 = vrot.lane.b32.xlu0 %v4656, 100
    %v4683 = vpop.permute.xlu0 %4682
    %4684 = vrot.lane.b32.xlu0 %v4664, 100
    %v4685 = vpop.permute.xlu0 %4684
    %4686 = vrot.lane.b32.xlu0 %v4663, 100
    %v4687 = vpop.permute.xlu0 %4686
    %4688 = vrot.lane.b32.xlu0 %v4665, 100
    %v4689 = vpop.permute.xlu0 %4688
    %4690 = vrot.lane.b32.xlu0 %v4673, 100
    %v4691 = vpop.permute.xlu0 %4690
    %4692 = vrot.lane.b32.xlu0 %v4681, 100
    %v4693 = vpop.permute.xlu0 %4692
    %4694 = vrot.lane.b32.xlu0 %v4680, 100
    %v4695 = vpop.permute.xlu0 %4694
    %v4696 = vsel %vm867, %v4683, %v4685
    %v4697 = vsel %vm867, %v4685, %v4687
    %v4698 = vsel %vm867, %v4687, %v4689
    %v4699 = vsel %vm867, %v4689, %v4691
    %v4700 = vsel %vm867, %v4691, %v4693
    %v4701 = vsel %vm867, %v4693, %v4695
    %v4709 = vmax.f32 %v4627, %v4696
    %v4710 = vmax.f32 %v4628, %v4697
    %v4711 = vmax.f32 %v4629, %v4698
    %v4712 = vmax.f32 %v4630, %v4699
    %v4713 = vmax.f32 %v4631, %v4700
    %v4714 = vmax.f32 %v4632, %v4701
    %v4715 = vmax.f32 %v4633, %v4695
    %v4716 = vld [vmem:[%s3] sm:$0xff]
    %v4717 = vld [vmem:[%s3 + $0x8] sm:$0xff]
    %v4718 = vld [vmem:[%s3 + $0x10] sm:$0xff]
    %v4719 = vld [vmem:[%s3 + $0x18] sm:$0xff]
    %v4720 = vld [vmem:[%s3 + $0x20] sm:$0xff]
    %v4721 = vld [vmem:[%s3 + $0x28] sm:$0xff]
    %v4722 = vld [vmem:[%s3 + $0x30] sm:$0xff]
    %v4723 = vld [vmem:[%s3 + $0x38] sm:$0xff]
    %v4724 = vld [vmem:[%s3 + $0x40] sm:$0xff]
    %v4725 = vld [vmem:[%s3 + $0x48] sm:$0xff]
    %v4726 = vld [vmem:[%s3 + $0x50] sm:$0xff]
    %v4727 = vld [vmem:[%s3 + $0x58] sm:$0xff]
    %v4728 = vld [vmem:[%s3 + $0x60] sm:$0xff]
    %v4729 = vld [vmem:[%s3 + $0x68] sm:$0xff]
    %v4730 = vld [vmem:[%s3 + $0x70] sm:$0xff]
    %v4731 = vld [vmem:[%s3 + $0x78] sm:$0xff]
    %v4732 = vld [vmem:[%s3 + $0x80] sm:$0xff]
    %v4733 = vld [vmem:[%s3 + $0x88] sm:$0xff]
    %v4734 = vld [vmem:[%s3 + $0x90] sm:$0xff]
    %v4735 = vld [vmem:[%s3 + $0x98] sm:$0xff]
    %v4736 = vld [vmem:[%s3 + $0xa0] sm:$0xff]
    %v4737 = vld [vmem:[%s3 + $0xa8] sm:$0xff]
    %v4738 = vld [vmem:[%s3 + $0xb0] sm:$0xff]
    %v4739 = vld [vmem:[%s3 + $0xb8] sm:$0xff]
    %v4740 = vld [vmem:[%s3 + $0xc0] sm:$0xff]
    %v4741 = vld [vmem:[%s3 + $0xc8] sm:$0xff]
    %v4742 = vld [vmem:[%s3 + $0xd0] sm:$0xff]
    %v4743 = vld [vmem:[%s3 + $0xd8] sm:$0xff]
    %v4744 = vld [vmem:[%s3 + $0xe0] sm:$0xff]
    %v4745 = vld [vmem:[%s3 + $0xe8] sm:$0xff]
    %v4746 = vld [vmem:[%s3 + $0xf0] sm:$0xff]
    %v4747 = vld [vmem:[%s3 + $0xf8] sm:$0xff]
    %v4748 = vld [vmem:[%s3 + $0x100] sm:$0xff]
    %v4749 = vld [vmem:[%s3 + $0x108] sm:$0xff]
    %v4750 = vld [vmem:[%s3 + $0x110] sm:$0xff]
    %v4751 = vld [vmem:[%s3 + $0x118] sm:$0xff]
    %v4752 = vld [vmem:[%s3 + $0x120] sm:$0xff]
    %v4753 = vld [vmem:[%s3 + $0x128] sm:$0xff]
    %v4754 = vld [vmem:[%s3 + $0x130] sm:$0xff]
    %v4755 = vld [vmem:[%s3 + $0x138] sm:$0xff]
    %v4756 = vld [vmem:[%s3 + $0x140] sm:$0xff]
    %v4757 = vld [vmem:[%s3 + $0x148] sm:$0xff]
    %v4758 = vld [vmem:[%s3 + $0x150] sm:$0xff]
    %v4759 = vld [vmem:[%s3 + $0x158] sm:$0xff]
    %v4760 = vld [vmem:[%s3 + $0x160] sm:$0xff]
    %v4761 = vld [vmem:[%s3 + $0x168] sm:$0xff]
    %v4762 = vld [vmem:[%s3 + $0x170] sm:$0xff]
    %v4763 = vld [vmem:[%s3 + $0x178] sm:$0xff]
    %v4764 = vld [vmem:[%s3 + $0x180] sm:$0xff]
    %v4765 = vld [vmem:[%s3 + $0x188] sm:$0xff]
    %v4766 = vld [vmem:[%s3 + $0x190] sm:$0xff]
    %v4767 = vld [vmem:[%s3 + $0x198] sm:$0xff]
    %v4768 = vld [vmem:[%s3 + $0x1a0] sm:$0xff]
    %v4769 = vld [vmem:[%s3 + $0x1a8] sm:$0xff]
    %v4770 = vld [vmem:[%s3 + $0x1b0] sm:$0xff]
    %v4771 = vld [vmem:[%s3 + $0x1b8] sm:$0xff]
    %v4772 = vld [vmem:[%s3 + $0x1c0] sm:$0xff]
    %v4773 = vld [vmem:[%s3 + $0x1c8] sm:$0xff]
    %v4774 = vld [vmem:[%s3 + $0x1d0] sm:$0xff]
    %v4775 = vld [vmem:[%s3 + $0x1d8] sm:$0xff]
    %v4776 = vld [vmem:[%s3 + $0x1e0] sm:$0xff]
    %v4777 = vld [vmem:[%s3 + $0x1e8] sm:$0xff]
    %v4778 = vld [vmem:[%s3 + $0x1f0] sm:$0xff]
    %v4779 = vld [vmem:[%s3 + $0x1f8] sm:$0xff]
    %v4780 = vld [vmem:[%s3 + $0x200] sm:$0xff]
    %v4781 = vld [vmem:[%s3 + $0x208] sm:$0xff]
    %v4782 = vld [vmem:[%s3 + $0x210] sm:$0xff]
    %v4783 = vld [vmem:[%s3 + $0x218] sm:$0xff]
    %v4784 = vld [vmem:[%s3 + $0x220] sm:$0xff]
    %v4785 = vld [vmem:[%s3 + $0x228] sm:$0xff]
    %v4786 = vld [vmem:[%s3 + $0x230] sm:$0xff]
    %v4787 = vld [vmem:[%s3 + $0x238] sm:$0xff]
    %v4788 = vld [vmem:[%s3 + $0x240] sm:$0xff]
    %v4789 = vld [vmem:[%s3 + $0x248] sm:$0xff]
    %v4790 = vld [vmem:[%s3 + $0x250] sm:$0xff]
    %v4791 = vld [vmem:[%s3 + $0x258] sm:$0xff]
    %v4792 = vld [vmem:[%s3 + $0x260] sm:$0xff]
    %v4793 = vld [vmem:[%s3 + $0x268] sm:$0xff]
    %v4794 = vld [vmem:[%s3 + $0x270] sm:$0xff]
    %v4795 = vld [vmem:[%s3 + $0x278] sm:$0xff]
    %v4796 = vld [vmem:[%s3 + $0x280] sm:$0xff]
    %v4797 = vld [vmem:[%s3 + $0x288] sm:$0xff]
    %v4798 = vld [vmem:[%s3 + $0x290] sm:$0xff]
    %v4799 = vld [vmem:[%s3 + $0x298] sm:$0xff]
    %v4800 = vld [vmem:[%s3 + $0x2a0] sm:$0xff]
    %v4801 = vld [vmem:[%s3 + $0x2a8] sm:$0xff]
    %v4802 = vld [vmem:[%s3 + $0x2b0] sm:$0xff]
    %v4803 = vld [vmem:[%s3 + $0x2b8] sm:$0xff]
    %v4804 = vld [vmem:[%s3 + $0x2c0] sm:$0xff]
    %v4805 = vld [vmem:[%s3 + $0x2c8] sm:$0xff]
    %v4806 = vld [vmem:[%s3 + $0x2d0] sm:$0xff]
    %v4807 = vld [vmem:[%s3 + $0x2d8] sm:$0xff]
    %v4808 = vld [vmem:[%s3 + $0x2e0] sm:$0xff]
    %v4809 = vld [vmem:[%s3 + $0x2e8] sm:$0xff]
    %v4810 = vld [vmem:[%s3 + $0x2f0] sm:$0xff]
    %v4811 = vld [vmem:[%s3 + $0x2f8] sm:$0xff]
    %v4812 = vld [vmem:[%s3 + $0x300] sm:$0xff]
    %v4813 = vld [vmem:[%s3 + $0x308] sm:$0xff]
    %4912 = vrot.lane.b32.xlu0 %v4716, 32
    %v4913 = vpop.permute.xlu0 %4912
    %4914 = vrot.lane.b32.xlu0 %v4717, 32
    %v4915 = vpop.permute.xlu0 %4914
    %4916 = vrot.lane.b32.xlu0 %v4718, 32
    %v4917 = vpop.permute.xlu0 %4916
    %4918 = vrot.lane.b32.xlu0 %v4719, 32
    %v4919 = vpop.permute.xlu0 %4918
    %4920 = vrot.lane.b32.xlu0 %v4720, 32
    %v4921 = vpop.permute.xlu0 %4920
    %4922 = vrot.lane.b32.xlu0 %v4721, 32
    %v4923 = vpop.permute.xlu0 %4922
    %4924 = vrot.lane.b32.xlu0 %v4722, 32
    %v4925 = vpop.permute.xlu0 %4924
    %4926 = vrot.lane.b32.xlu0 %v4723, 32
    %v4927 = vpop.permute.xlu0 %4926
    %4928 = vrot.lane.b32.xlu0 %v4724, 32
    %v4929 = vpop.permute.xlu0 %4928
    %4930 = vrot.lane.b32.xlu0 %v4725, 32
    %v4931 = vpop.permute.xlu0 %4930
    %4932 = vrot.lane.b32.xlu0 %v4726, 32
    %v4933 = vpop.permute.xlu0 %4932
    %4934 = vrot.lane.b32.xlu0 %v4727, 32
    %v4935 = vpop.permute.xlu0 %4934
    %4936 = vrot.lane.b32.xlu0 %v4728, 32
    %v4937 = vpop.permute.xlu0 %4936
    %4938 = vrot.lane.b32.xlu0 %v4729, 32
    %v4939 = vpop.permute.xlu0 %4938
    %4940 = vrot.lane.b32.xlu0 %v4730, 32
    %v4941 = vpop.permute.xlu0 %4940
    %4942 = vrot.lane.b32.xlu0 %v4731, 32
    %v4943 = vpop.permute.xlu0 %4942
    %4944 = vrot.lane.b32.xlu0 %v4732, 32
    %v4945 = vpop.permute.xlu0 %4944
    %4946 = vrot.lane.b32.xlu0 %v4733, 32
    %v4947 = vpop.permute.xlu0 %4946
    %4948 = vrot.lane.b32.xlu0 %v4734, 32
    %v4949 = vpop.permute.xlu0 %4948
    %4950 = vrot.lane.b32.xlu0 %v4735, 32
    %v4951 = vpop.permute.xlu0 %4950
    %4952 = vrot.lane.b32.xlu0 %v4736, 32
    %v4953 = vpop.permute.xlu0 %4952
    %4954 = vrot.lane.b32.xlu0 %v4737, 32
    %v4955 = vpop.permute.xlu0 %4954
    %4956 = vrot.lane.b32.xlu0 %v4738, 32
    %v4957 = vpop.permute.xlu0 %4956
    %4958 = vrot.lane.b32.xlu0 %v4739, 32
    %v4959 = vpop.permute.xlu0 %4958
    %4960 = vrot.lane.b32.xlu0 %v4740, 32
    %v4961 = vpop.permute.xlu0 %4960
    %4962 = vrot.lane.b32.xlu0 %v4741, 32
    %v4963 = vpop.permute.xlu0 %4962
    %4964 = vrot.lane.b32.xlu0 %v4742, 32
    %v4965 = vpop.permute.xlu0 %4964
    %4966 = vrot.lane.b32.xlu0 %v4743, 32
    %v4967 = vpop.permute.xlu0 %4966
    %4968 = vrot.lane.b32.xlu0 %v4744, 32
    %v4969 = vpop.permute.xlu0 %4968
    %4970 = vrot.lane.b32.xlu0 %v4745, 32
    %v4971 = vpop.permute.xlu0 %4970
    %4972 = vrot.lane.b32.xlu0 %v4746, 32
    %v4973 = vpop.permute.xlu0 %4972
    %4974 = vrot.lane.b32.xlu0 %v4747, 32
    %v4975 = vpop.permute.xlu0 %4974
    %4976 = vrot.lane.b32.xlu0 %v4748, 32
    %v4977 = vpop.permute.xlu0 %4976
    %4978 = vrot.lane.b32.xlu0 %v4749, 32
    %v4979 = vpop.permute.xlu0 %4978
    %4980 = vrot.lane.b32.xlu0 %v4750, 32
    %v4981 = vpop.permute.xlu0 %4980
    %4982 = vrot.lane.b32.xlu0 %v4751, 32
    %v4983 = vpop.permute.xlu0 %4982
    %4984 = vrot.lane.b32.xlu0 %v4752, 32
    %v4985 = vpop.permute.xlu0 %4984
    %4986 = vrot.lane.b32.xlu0 %v4753, 32
    %v4987 = vpop.permute.xlu0 %4986
    %4988 = vrot.lane.b32.xlu0 %v4754, 32
    %v4989 = vpop.permute.xlu0 %4988
    %4990 = vrot.lane.b32.xlu0 %v4755, 32
    %v4991 = vpop.permute.xlu0 %4990
    %4992 = vrot.lane.b32.xlu0 %v4756, 32
    %v4993 = vpop.permute.xlu0 %4992
    %4994 = vrot.lane.b32.xlu0 %v4757, 32
    %v4995 = vpop.permute.xlu0 %4994
    %4996 = vrot.lane.b32.xlu0 %v4758, 32
    %v4997 = vpop.permute.xlu0 %4996
    %4998 = vrot.lane.b32.xlu0 %v4759, 32
    %v4999 = vpop.permute.xlu0 %4998
    %5000 = vrot.lane.b32.xlu0 %v4760, 32
    %v5001 = vpop.permute.xlu0 %5000
    %5002 = vrot.lane.b32.xlu0 %v4761, 32
    %v5003 = vpop.permute.xlu0 %5002
    %5004 = vrot.lane.b32.xlu0 %v4762, 32
    %v5005 = vpop.permute.xlu0 %5004
    %5006 = vrot.lane.b32.xlu0 %v4763, 32
    %v5007 = vpop.permute.xlu0 %5006
    %5008 = vrot.lane.b32.xlu0 %v4764, 32
    %v5009 = vpop.permute.xlu0 %5008
    %5010 = vrot.lane.b32.xlu0 %v4765, 32
    %v5011 = vpop.permute.xlu0 %5010
    %5012 = vrot.lane.b32.xlu0 %v4766, 32
    %v5013 = vpop.permute.xlu0 %5012
    %5014 = vrot.lane.b32.xlu0 %v4767, 32
    %v5015 = vpop.permute.xlu0 %5014
    %5016 = vrot.lane.b32.xlu0 %v4768, 32
    %v5017 = vpop.permute.xlu0 %5016
    %5018 = vrot.lane.b32.xlu0 %v4769, 32
    %v5019 = vpop.permute.xlu0 %5018
    %5020 = vrot.lane.b32.xlu0 %v4770, 32
    %v5021 = vpop.permute.xlu0 %5020
    %5022 = vrot.lane.b32.xlu0 %v4771, 32
    %v5023 = vpop.permute.xlu0 %5022
    %5024 = vrot.lane.b32.xlu0 %v4772, 32
    %v5025 = vpop.permute.xlu0 %5024
    %5026 = vrot.lane.b32.xlu0 %v4773, 32
    %v5027 = vpop.permute.xlu0 %5026
    %5028 = vrot.lane.b32.xlu0 %v4774, 32
    %v5029 = vpop.permute.xlu0 %5028
    %5030 = vrot.lane.b32.xlu0 %v4775, 32
    %v5031 = vpop.permute.xlu0 %5030
    %5032 = vrot.lane.b32.xlu0 %v4776, 32
    %v5033 = vpop.permute.xlu0 %5032
    %5034 = vrot.lane.b32.xlu0 %v4777, 32
    %v5035 = vpop.permute.xlu0 %5034
    %5036 = vrot.lane.b32.xlu0 %v4778, 32
    %v5037 = vpop.permute.xlu0 %5036
    %5038 = vrot.lane.b32.xlu0 %v4779, 32
    %v5039 = vpop.permute.xlu0 %5038
    %5040 = vrot.lane.b32.xlu0 %v4780, 32
    %v5041 = vpop.permute.xlu0 %5040
    %5042 = vrot.lane.b32.xlu0 %v4781, 32
    %v5043 = vpop.permute.xlu0 %5042
    %5044 = vrot.lane.b32.xlu0 %v4782, 32
    %v5045 = vpop.permute.xlu0 %5044
    %5046 = vrot.lane.b32.xlu0 %v4783, 32
    %v5047 = vpop.permute.xlu0 %5046
    %5048 = vrot.lane.b32.xlu0 %v4784, 32
    %v5049 = vpop.permute.xlu0 %5048
    %5050 = vrot.lane.b32.xlu0 %v4785, 32
    %v5051 = vpop.permute.xlu0 %5050
    %5052 = vrot.lane.b32.xlu0 %v4786, 32
    %v5053 = vpop.permute.xlu0 %5052
    %5054 = vrot.lane.b32.xlu0 %v4787, 32
    %v5055 = vpop.permute.xlu0 %5054
    %5056 = vrot.lane.b32.xlu0 %v4788, 32
    %v5057 = vpop.permute.xlu0 %5056
    %5058 = vrot.lane.b32.xlu0 %v4789, 32
    %v5059 = vpop.permute.xlu0 %5058
    %5060 = vrot.lane.b32.xlu0 %v4790, 32
    %v5061 = vpop.permute.xlu0 %5060
    %5062 = vrot.lane.b32.xlu0 %v4791, 32
    %v5063 = vpop.permute.xlu0 %5062
    %5064 = vrot.lane.b32.xlu0 %v4792, 32
    %v5065 = vpop.permute.xlu0 %5064
    %5066 = vrot.lane.b32.xlu0 %v4793, 32
    %v5067 = vpop.permute.xlu0 %5066
    %5068 = vrot.lane.b32.xlu0 %v4794, 32
    %v5069 = vpop.permute.xlu0 %5068
    %5070 = vrot.lane.b32.xlu0 %v4795, 32
    %v5071 = vpop.permute.xlu0 %5070
    %5072 = vrot.lane.b32.xlu0 %v4796, 32
    %v5073 = vpop.permute.xlu0 %5072
    %5074 = vrot.lane.b32.xlu0 %v4797, 32
    %v5075 = vpop.permute.xlu0 %5074
    %5076 = vrot.lane.b32.xlu0 %v4798, 32
    %v5077 = vpop.permute.xlu0 %5076
    %5078 = vrot.lane.b32.xlu0 %v4799, 32
    %v5079 = vpop.permute.xlu0 %5078
    %5080 = vrot.lane.b32.xlu0 %v4800, 32
    %v5081 = vpop.permute.xlu0 %5080
    %5082 = vrot.lane.b32.xlu0 %v4801, 32
    %v5083 = vpop.permute.xlu0 %5082
    %5084 = vrot.lane.b32.xlu0 %v4802, 32
    %v5085 = vpop.permute.xlu0 %5084
    %5086 = vrot.lane.b32.xlu0 %v4803, 32
    %v5087 = vpop.permute.xlu0 %5086
    %5088 = vrot.lane.b32.xlu0 %v4804, 32
    %v5089 = vpop.permute.xlu0 %5088
    %5090 = vrot.lane.b32.xlu0 %v4805, 32
    %v5091 = vpop.permute.xlu0 %5090
    %5092 = vrot.lane.b32.xlu0 %v4806, 32
    %v5093 = vpop.permute.xlu0 %5092
    %5094 = vrot.lane.b32.xlu0 %v4807, 32
    %v5095 = vpop.permute.xlu0 %5094
    %5096 = vrot.lane.b32.xlu0 %v4808, 32
    %v5097 = vpop.permute.xlu0 %5096
    %5098 = vrot.lane.b32.xlu0 %v4809, 32
    %v5099 = vpop.permute.xlu0 %5098
    %5100 = vrot.lane.b32.xlu0 %v4810, 32
    %v5101 = vpop.permute.xlu0 %5100
    %5102 = vrot.lane.b32.xlu0 %v4811, 32
    %v5103 = vpop.permute.xlu0 %5102
    %5104 = vrot.lane.b32.xlu0 %v4812, 32
    %v5105 = vpop.permute.xlu0 %5104
    %5106 = vrot.lane.b32.xlu0 %v4813, 32
    %v5107 = vpop.permute.xlu0 %5106
    %v5207 = vsel %vm2265, %v4715, 0
    %5209 = vmatprep.subr.mxu0 0.0
    %5210 = vmatpush1.msra.mxu0 %v4943
    %5211 = vmatprep.subr.mxu0 0.0
    %5212 = vmatpush1.msra.mxu0 %v4941
    %5213 = vmatprep.subr.mxu0 0.0
    %5214 = vmatpush1.msra.mxu0 %v4939
    %5215 = vmatprep.subr.mxu0 0.0
    %5216 = vmatpush1.msra.mxu0 %v4937
    %5217 = vmatprep.subr.mxu0 0.0
    %5218 = vmatpush1.msra.mxu0 %v4935
    %5219 = vmatprep.subr.mxu0 0.0
    %5220 = vmatpush1.msra.mxu0 %v4933
    %5221 = vmatprep.subr.mxu0 0.0
    %5222 = vmatpush1.msra.mxu0 %v4931
    %5223 = vmatprep.subr.mxu0 0.0
    %5224 = vmatpush1.msra.mxu0 %v4929
    %5225 = vmatprep.subr.mxu0 0.0
    %5226 = vmatpush1.msra.mxu0 %v4927
    %5227 = vmatprep.subr.mxu0 0.0
    %5228 = vmatpush1.msra.mxu0 %v4925
    %5229 = vmatprep.subr.mxu0 0.0
    %5230 = vmatpush1.msra.mxu0 %v4923
    %5231 = vmatprep.subr.mxu0 0.0
    %5232 = vmatpush1.msra.mxu0 %v4921
    %5233 = vmatprep.subr.mxu0 0.0
    %5234 = vmatpush1.msra.mxu0 %v4919
    %5235 = vmatprep.subr.mxu0 0.0
    %5236 = vmatpush1.msra.mxu0 %v4917
    %5237 = vmatprep.subr.mxu0 0.0
    %5238 = vmatpush1.msra.mxu0 %v4915
    %5239 = vmatprep.subr.mxu0 0.0
    %5240 = vmatpush1.msra.mxu0 %v4913
    %5241 = vmatprep.subr.mxu0 0.0
    %5242 = vmatpush2.msra.mxu0 %v4975
    %5243 = vmatprep.subr.mxu0 0.0
    %5244 = vmatpush2.msra.mxu0 %v4973
    %5245 = vmatprep.subr.mxu0 0.0
    %5246 = vmatpush2.msra.mxu0 %v4971
    %5247 = vmatprep.subr.mxu0 0.0
    %5248 = vmatpush2.msra.mxu0 %v4969
    %5249 = vmatprep.subr.mxu0 0.0
    %5250 = vmatpush2.msra.mxu0 %v4967
    %5251 = vmatprep.subr.mxu0 0.0
    %5252 = vmatpush2.msra.mxu0 %v4965
    %5253 = vmatprep.subr.mxu0 0.0
    %5254 = vmatpush2.msra.mxu0 %v4963
    %5255 = vmatprep.subr.mxu0 0.0
    %5256 = vmatpush2.msra.mxu0 %v4961
    %5257 = vmatprep.subr.mxu0 0.0
    %5258 = vmatpush2.msra.mxu0 %v4959
    %5259 = vmatprep.subr.mxu0 0.0
    %5260 = vmatpush2.msra.mxu0 %v4957
    %5261 = vmatprep.subr.mxu0 0.0
    %5262 = vmatpush2.msra.mxu0 %v4955
    %5263 = vmatprep.subr.mxu0 0.0
    %5264 = vmatpush2.msra.mxu0 %v4953
    %5265 = vmatprep.subr.mxu0 0.0
    %5266 = vmatpush2.msra.mxu0 %v4951
    %5267 = vmatprep.subr.mxu0 0.0
    %5268 = vmatpush2.msra.mxu0 %v4949
    %5269 = vmatprep.subr.mxu0 0.0
    %5270 = vmatpush2.msra.mxu0 %v4947
    %5271 = vmatprep.subr.mxu0 0.0
    %5272 = vmatpush2.msra.mxu0 %v4945
    %5273 = vmatprep.mubr.f32.mxu0 %v4710
    %5274 = vmatmul.mubr.f32.gmra.mxu0 %v4709
    %v5275 = vpop.f32.mrf.mxu0
    %v5276 = vadd.f32 0.0, %v5275
    %v5277 = vpop.f32.mrf.mxu0
    %5278 = vdwg.mxu0
    %5279 = vmatprep.subr.mxu0 0.0
    %5280 = vmatpush1.msra.mxu0 %v5007
    %5281 = vmatprep.subr.mxu0 0.0
    %5282 = vmatpush1.msra.mxu0 %v5005
    %5283 = vmatprep.subr.mxu0 0.0
    %5284 = vmatpush1.msra.mxu0 %v5003
    %5285 = vmatprep.subr.mxu0 0.0
    %5286 = vmatpush1.msra.mxu0 %v5001
    %5287 = vmatprep.subr.mxu0 0.0
    %5288 = vmatpush1.msra.mxu0 %v4999
    %5289 = vmatprep.subr.mxu0 0.0
    %5290 = vmatpush1.msra.mxu0 %v4997
    %5291 = vmatprep.subr.mxu0 0.0
    %5292 = vmatpush1.msra.mxu0 %v4995
    %5293 = vmatprep.subr.mxu0 0.0
    %5294 = vmatpush1.msra.mxu0 %v4993
    %5295 = vmatprep.subr.mxu0 0.0
    %5296 = vmatpush1.msra.mxu0 %v4991
    %5297 = vmatprep.subr.mxu0 0.0
    %5298 = vmatpush1.msra.mxu0 %v4989
    %5299 = vmatprep.subr.mxu0 0.0
    %5300 = vmatpush1.msra.mxu0 %v4987
    %5301 = vmatprep.subr.mxu0 0.0
    %5302 = vmatpush1.msra.mxu0 %v4985
    %5303 = vmatprep.subr.mxu0 0.0
    %5304 = vmatpush1.msra.mxu0 %v4983
    %5305 = vmatprep.subr.mxu0 0.0
    %5306 = vmatpush1.msra.mxu0 %v4981
    %5307 = vmatprep.subr.mxu0 0.0
    %5308 = vmatpush1.msra.mxu0 %v4979
    %5309 = vmatprep.subr.mxu0 0.0
    %5310 = vmatpush1.msra.mxu0 %v4977
    %5311 = vmatprep.subr.mxu0 0.0
    %5312 = vmatpush2.msra.mxu0 %v5039
    %5313 = vmatprep.subr.mxu0 0.0
    %5314 = vmatpush2.msra.mxu0 %v5037
    %5315 = vmatprep.subr.mxu0 0.0
    %5316 = vmatpush2.msra.mxu0 %v5035
    %5317 = vmatprep.subr.mxu0 0.0
    %5318 = vmatpush2.msra.mxu0 %v5033
    %5319 = vmatprep.subr.mxu0 0.0
    %5320 = vmatpush2.msra.mxu0 %v5031
    %5321 = vmatprep.subr.mxu0 0.0
    %5322 = vmatpush2.msra.mxu0 %v5029
    %5323 = vmatprep.subr.mxu0 0.0
    %5324 = vmatpush2.msra.mxu0 %v5027
    %5325 = vmatprep.subr.mxu0 0.0
    %5326 = vmatpush2.msra.mxu0 %v5025
    %5327 = vmatprep.subr.mxu0 0.0
    %5328 = vmatpush2.msra.mxu0 %v5023
    %5329 = vmatprep.subr.mxu0 0.0
    %5330 = vmatpush2.msra.mxu0 %v5021
    %5331 = vmatprep.subr.mxu0 0.0
    %5332 = vmatpush2.msra.mxu0 %v5019
    %5333 = vmatprep.subr.mxu0 0.0
    %5334 = vmatpush2.msra.mxu0 %v5017
    %5335 = vmatprep.subr.mxu0 0.0
    %5336 = vmatpush2.msra.mxu0 %v5015
    %5337 = vmatprep.subr.mxu0 0.0
    %5338 = vmatpush2.msra.mxu0 %v5013
    %5339 = vmatprep.subr.mxu0 0.0
    %5340 = vmatpush2.msra.mxu0 %v5011
    %5341 = vmatprep.subr.mxu0 0.0
    %5342 = vmatpush2.msra.mxu0 %v5009
    %5343 = vmatprep.mubr.f32.mxu0 %v4712
    %5344 = vmatmul.mubr.f32.gmra.mxu0 %v4711
    %v5345 = vpop.f32.mrf.mxu0
    %v5346 = vadd.f32 %v5276, %v5345
    %v5347 = vpop.f32.mrf.mxu0
    %5348 = vdwg.mxu0
    %5349 = vmatprep.subr.mxu0 0.0
    %5350 = vmatpush1.msra.mxu0 %v5071
    %5351 = vmatprep.subr.mxu0 0.0
    %5352 = vmatpush1.msra.mxu0 %v5069
    %5353 = vmatprep.subr.mxu0 0.0
    %5354 = vmatpush1.msra.mxu0 %v5067
    %5355 = vmatprep.subr.mxu0 0.0
    %5356 = vmatpush1.msra.mxu0 %v5065
    %5357 = vmatprep.subr.mxu0 0.0
    %5358 = vmatpush1.msra.mxu0 %v5063
    %5359 = vmatprep.subr.mxu0 0.0
    %5360 = vmatpush1.msra.mxu0 %v5061
    %5361 = vmatprep.subr.mxu0 0.0
    %5362 = vmatpush1.msra.mxu0 %v5059
    %5363 = vmatprep.subr.mxu0 0.0
    %5364 = vmatpush1.msra.mxu0 %v5057
    %5365 = vmatprep.subr.mxu0 0.0
    %5366 = vmatpush1.msra.mxu0 %v5055
    %5367 = vmatprep.subr.mxu0 0.0
    %5368 = vmatpush1.msra.mxu0 %v5053
    %5369 = vmatprep.subr.mxu0 0.0
    %5370 = vmatpush1.msra.mxu0 %v5051
    %5371 = vmatprep.subr.mxu0 0.0
    %5372 = vmatpush1.msra.mxu0 %v5049
    %5373 = vmatprep.subr.mxu0 0.0
    %5374 = vmatpush1.msra.mxu0 %v5047
    %5375 = vmatprep.subr.mxu0 0.0
    %5376 = vmatpush1.msra.mxu0 %v5045
    %5377 = vmatprep.subr.mxu0 0.0
    %5378 = vmatpush1.msra.mxu0 %v5043
    %5379 = vmatprep.subr.mxu0 0.0
    %5380 = vmatpush1.msra.mxu0 %v5041
    %5381 = vmatprep.subr.mxu0 0.0
    %5382 = vmatpush2.msra.mxu0 %v5103
    %5383 = vmatprep.subr.mxu0 0.0
    %5384 = vmatpush2.msra.mxu0 %v5101
    %5385 = vmatprep.subr.mxu0 0.0
    %5386 = vmatpush2.msra.mxu0 %v5099
    %5387 = vmatprep.subr.mxu0 0.0
    %5388 = vmatpush2.msra.mxu0 %v5097
    %5389 = vmatprep.subr.mxu0 0.0
    %5390 = vmatpush2.msra.mxu0 %v5095
    %5391 = vmatprep.subr.mxu0 0.0
    %5392 = vmatpush2.msra.mxu0 %v5093
    %5393 = vmatprep.subr.mxu0 0.0
    %5394 = vmatpush2.msra.mxu0 %v5091
    %5395 = vmatprep.subr.mxu0 0.0
    %5396 = vmatpush2.msra.mxu0 %v5089
    %5397 = vmatprep.subr.mxu0 0.0
    %5398 = vmatpush2.msra.mxu0 %v5087
    %5399 = vmatprep.subr.mxu0 0.0
    %5400 = vmatpush2.msra.mxu0 %v5085
    %5401 = vmatprep.subr.mxu0 0.0
    %5402 = vmatpush2.msra.mxu0 %v5083
    %5403 = vmatprep.subr.mxu0 0.0
    %5404 = vmatpush2.msra.mxu0 %v5081
    %5405 = vmatprep.subr.mxu0 0.0
    %5406 = vmatpush2.msra.mxu0 %v5079
    %5407 = vmatprep.subr.mxu0 0.0
    %5408 = vmatpush2.msra.mxu0 %v5077
    %5409 = vmatprep.subr.mxu0 0.0
    %5410 = vmatpush2.msra.mxu0 %v5075
    %5411 = vmatprep.subr.mxu0 0.0
    %5412 = vmatpush2.msra.mxu0 %v5073
    %5413 = vmatprep.mubr.f32.mxu0 %v4714
    %5414 = vmatmul.mubr.f32.gmra.mxu0 %v4713
    %v5415 = vpop.f32.mrf.mxu0
    %v5416 = vadd.f32 %v5346, %v5415
    %v5417 = vpop.f32.mrf.mxu0
    %5418 = vdwg.mxu0
    %5419 = vmatprep.subr.mxu0 0.0
    %5420 = vmatpush1.msra.mxu0 0.0
    %5421 = vmatprep.subr.mxu0 0.0
    %5422 = vmatpush1.msra.mxu0 0.0
    %5423 = vmatprep.subr.mxu0 0.0
    %5424 = vmatpush1.msra.mxu0 0.0
    %5425 = vmatprep.subr.mxu0 0.0
    %5426 = vmatpush1.msra.mxu0 0.0
    %5427 = vmatprep.subr.mxu0 0.0
    %5428 = vmatpush1.msra.mxu0 0.0
    %5429 = vmatprep.subr.mxu0 0.0
    %5430 = vmatpush1.msra.mxu0 0.0
    %5431 = vmatprep.subr.mxu0 0.0
    %5432 = vmatpush1.msra.mxu0 0.0
    %5433 = vmatprep.subr.mxu0 0.0
    %5434 = vmatpush1.msra.mxu0 0.0
    %5435 = vmatprep.subr.mxu0 0.0
    %5436 = vmatpush1.msra.mxu0 0.0
    %5437 = vmatprep.subr.mxu0 0.0
    %5438 = vmatpush1.msra.mxu0 0.0
    %5439 = vmatprep.subr.mxu0 0.0
    %5440 = vmatpush1.msra.mxu0 0.0
    %5441 = vmatprep.subr.mxu0 0.0
    %5442 = vmatpush1.msra.mxu0 0.0
    %5443 = vmatprep.subr.mxu0 0.0
    %5444 = vmatpush1.msra.mxu0 0.0
    %5445 = vmatprep.subr.mxu0 0.0
    %5446 = vmatpush1.msra.mxu0 0.0
    %5447 = vmatprep.subr.mxu0 0.0
    %5448 = vmatpush1.msra.mxu0 %v5107
    %5449 = vmatprep.subr.mxu0 0.0
    %5450 = vmatpush1.msra.mxu0 %v5105
    %5451 = vmatprep.subr.mxu0 0.0
    %5452 = vmatpush2.msra.mxu0 0.0
    %5453 = vmatprep.subr.mxu0 0.0
    %5454 = vmatpush2.msra.mxu0 0.0
    %5455 = vmatprep.subr.mxu0 0.0
    %5456 = vmatpush2.msra.mxu0 0.0
    %5457 = vmatprep.subr.mxu0 0.0
    %5458 = vmatpush2.msra.mxu0 0.0
    %5459 = vmatprep.subr.mxu0 0.0
    %5460 = vmatpush2.msra.mxu0 0.0
    %5461 = vmatprep.subr.mxu0 0.0
    %5462 = vmatpush2.msra.mxu0 0.0
    %5463 = vmatprep.subr.mxu0 0.0
    %5464 = vmatpush2.msra.mxu0 0.0
    %5465 = vmatprep.subr.mxu0 0.0
    %5466 = vmatpush2.msra.mxu0 0.0
    %5467 = vmatprep.subr.mxu0 0.0
    %5468 = vmatpush2.msra.mxu0 0.0
    %5469 = vmatprep.subr.mxu0 0.0
    %5470 = vmatpush2.msra.mxu0 0.0
    %5471 = vmatprep.subr.mxu0 0.0
    %5472 = vmatpush2.msra.mxu0 0.0
    %5473 = vmatprep.subr.mxu0 0.0
    %5474 = vmatpush2.msra.mxu0 0.0
    %5475 = vmatprep.subr.mxu0 0.0
    %5476 = vmatpush2.msra.mxu0 0.0
    %5477 = vmatprep.subr.mxu0 0.0
    %5478 = vmatpush2.msra.mxu0 0.0
    %5479 = vmatprep.subr.mxu0 0.0
    %5480 = vmatpush2.msra.mxu0 0.0
    %5481 = vmatprep.subr.mxu0 0.0
    %5482 = vmatpush2.msra.mxu0 0.0
    %5483 = vmatprep.mubr.f32.mxu0 0.0
    %5484 = vmatmul.mubr.f32.gmra.mxu0 %v5207
    %v5485 = vpop.f32.mrf.mxu0
    %v5486 = vadd.f32 %v5416, %v5485
    %v5487 = vpop.f32.mrf.mxu0
    %5488 = vdwg.mxu0
    %v5489 = vadd.f32 %v4509, %v5486
    %v5490 = vmax.f32 %v5489, 0.0
    %v5491 = vld [vmem:[%s5] sm:$0xff]
    %v5492 = vld [vmem:[%s5 + $0x8] sm:$0xff]
    %v5493 = vld [vmem:[%s5 + $0x10] sm:$0xff]
    %v5494 = vld [vmem:[%s5 + $0x18] sm:$0xff]
    %v5495 = vld [vmem:[%s6] sm:$0x1]
    %v5497 = vlaneseq
    %v5498 = vshrl.u32 %v5497, 7
    %v5499 = vsub.s32 0, %v5498
    %v5500 = vrot.slane %v5495, %v5499
    %vm5502 = vcmask 261120
    %v5504 = vsel %vm5502, %v5490, 0
    %5506 = vmatprep.subr.mxu0 0.0
    %5507 = vmatpush1.msra.mxu0 0.0
    %5508 = vmatprep.subr.mxu0 0.0
    %5509 = vmatpush1.msra.mxu0 0.0
    %5510 = vmatprep.subr.mxu0 0.0
    %5511 = vmatpush1.msra.mxu0 0.0
    %5512 = vmatprep.subr.mxu0 0.0
    %5513 = vmatpush1.msra.mxu0 0.0
    %5514 = vmatprep.subr.mxu0 0.0
    %5515 = vmatpush1.msra.mxu0 0.0
    %5516 = vmatprep.subr.mxu0 0.0
    %5517 = vmatpush1.msra.mxu0 0.0
    %5518 = vmatprep.subr.mxu0 0.0
    %5519 = vmatpush1.msra.mxu0 0.0
    %5520 = vmatprep.subr.mxu0 0.0
    %5521 = vmatpush1.msra.mxu0 0.0
    %5522 = vmatprep.subr.mxu0 0.0
    %5523 = vmatpush1.msra.mxu0 0.0
    %5524 = vmatprep.subr.mxu0 0.0
    %5525 = vmatpush1.msra.mxu0 0.0
    %5526 = vmatprep.subr.mxu0 0.0
    %5527 = vmatpush1.msra.mxu0 0.0
    %5528 = vmatprep.subr.mxu0 0.0
    %5529 = vmatpush1.msra.mxu0 0.0
    %5530 = vmatprep.subr.mxu0 0.0
    %5531 = vmatpush1.msra.mxu0 %v5494
    %5532 = vmatprep.subr.mxu0 0.0
    %5533 = vmatpush1.msra.mxu0 %v5493
    %5534 = vmatprep.subr.mxu0 0.0
    %5535 = vmatpush1.msra.mxu0 %v5492
    %5536 = vmatprep.subr.mxu0 0.0
    %5537 = vmatpush1.msra.mxu0 %v5491
    %5538 = vmatprep.subr.mxu0 0.0
    %5539 = vmatpush2.msra.mxu0 0.0
    %5540 = vmatprep.subr.mxu0 0.0
    %5541 = vmatpush2.msra.mxu0 0.0
    %5542 = vmatprep.subr.mxu0 0.0
    %5543 = vmatpush2.msra.mxu0 0.0
    %5544 = vmatprep.subr.mxu0 0.0
    %5545 = vmatpush2.msra.mxu0 0.0
    %5546 = vmatprep.subr.mxu0 0.0
    %5547 = vmatpush2.msra.mxu0 0.0
    %5548 = vmatprep.subr.mxu0 0.0
    %5549 = vmatpush2.msra.mxu0 0.0
    %5550 = vmatprep.subr.mxu0 0.0
    %5551 = vmatpush2.msra.mxu0 0.0
    %5552 = vmatprep.subr.mxu0 0.0
    %5553 = vmatpush2.msra.mxu0 0.0
    %5554 = vmatprep.subr.mxu0 0.0
    %5555 = vmatpush2.msra.mxu0 0.0
    %5556 = vmatprep.subr.mxu0 0.0
    %5557 = vmatpush2.msra.mxu0 0.0
    %5558 = vmatprep.subr.mxu0 0.0
    %5559 = vmatpush2.msra.mxu0 0.0
    %5560 = vmatprep.subr.mxu0 0.0
    %5561 = vmatpush2.msra.mxu0 0.0
    %5562 = vmatprep.subr.mxu0 0.0
    %5563 = vmatpush2.msra.mxu0 0.0
    %5564 = vmatprep.subr.mxu0 0.0
    %5565 = vmatpush2.msra.mxu0 0.0
    %5566 = vmatprep.subr.mxu0 0.0
    %5567 = vmatpush2.msra.mxu0 0.0
    %5568 = vmatprep.subr.mxu0 0.0
    %5569 = vmatpush2.msra.mxu0 0.0
    %5570 = vmatprep.mubr.f32.mxu0 0.0
    %5571 = vmatmul.mubr.f32.gmra.mxu0 %v5504
    %v5572 = vpop.f32.mrf.mxu0
    %v5573 = vadd.f32 %v5500, %v5572
    %v5574 = vpop.f32.mrf.mxu0
    %5575 = vdwg.mxu0
    %vm5576 = vcmask 74752
    %v5577 = vsel %vm5576, %v5573, -inf
    %5578 = vmax.xlane.f32.xlu0 %v5577
    %v5579 = vpop.xlane.xlu0 %5578
    %v5580 = vsub.f32 %v5573, %v5579
    %v5581 = vmul.f32 %v5580, 1.442695
    %v5582 = vpow.pop %v5581
    %v5583 = vsel %vm5576, %v5582, 0.0
    %5584 = vadd.xlane.f32.xlu0 %v5583
    %v5585 = vpop.xlane.xlu0 %5584
    %v5586 = vlog2.pop %v5585
    %v5587 = vmul.f32 %v5586, 0.6931472
    %v5588 = vadd.f32 %v5579, %v5587
    %v5589 = vsub.f32 %v5573, %v5588
    %5590 = vst.msk [vmem:[#allocation9] sm:$0x3] %vm5576, %v5589
    // Predicated region
    $region38: #{cnn_forward.1} parent=1 // pred_check
      _
    $region39: #{cnn_forward.1} parent=1 // pred_check_branch
      %5592 = sbr.rel (0) target = $region41
    $region40: #{cnn_forward.1} parent=1 // pred_region
      %s5594 = ssub.s32 32, 32
      %5595 = vsyncadd [#allocation5], %s5594
      %s5597 = sshll.u32 [#allocation9], 4
      %s5598 = int_to_ptr.vmem [resolvable:$true] %s5597
      %5600 = dma.vmem_to_hbm [thread:$0]  %s5598, 32, %s7, [#allocation5]
    $region41: #{cnn_forward.1} parent=1 // pred_fallthru
      _
    // Predicated region
    $region42: #{cnn_forward.1} parent=1 // pred_check
      _
    $region43: #{cnn_forward.1} parent=1 // pred_check_branch
      %5602 = sbr.rel (0) target = $region45
    $region44: #{cnn_forward.1} parent=1 // pred_region
      %5603 = dma.done [#allocation5], 32
    $region45: #{cnn_forward.1} parent=1 // pred_fallthru
      _
    %5604 = vsyncpa [#allocation5], 1
    %5605 = vsyncpa [#allocation6], 1
    %5606 = vsyncpa [#allocation8], 1

</llo_original>
